<compile_context>
chip_gen: v5e
topology: v5e:2x2
jax: 0.10.0
libtpu: 0.0.40
codegen_flags: <defaults>
</compile_context>

<pallas_src>
import functools
from itertools import product

import jax
import jax.numpy as jnp
from jax.experimental import pallas as pl
from jax.experimental.pallas import tpu as pltpu


def _round_up(n, m):
    return ((n + m - 1) // m) * m


# ----------------------------- Pallas kernel --------------------------------
def cbm_kernel(x_ref, wconv_ref, bconv_ref, wcomb_ref, bcomb_ref, mask_ref,
               out_ref, *, chunks, Wp, C_in, inv_hw):
    """One grid step == one batch element.

    x_ref      [C_in, L]      padded, width-flattened image (bf16/f32), lane-dense
    wconv_ref  [CF, 9*C_in]   conv weight, columns ordered (kh, kw, c_in)
    bconv_ref  [CF, 1]        conv bias (f32)
    wcomb_ref  [CF, NC]       folded cbl @ sparse_layer weight (f32)
    bcomb_ref  [1, NC]        folded bias (f32)
    mask_ref   [1, P_max]     1.0 for valid output columns, 0.0 for width-pad garbage
    out_ref    [1, 1, NC]     logits (f32), lane-dense store
    """
    CF = wconv_ref.shape[0]
    acc = jnp.zeros((CF, 1), jnp.float32)            # running ReLU-activation sum

    # In-kernel im2col: conv = 9 shifted matmuls over the VMEM-resident image.
    # All slice starts are static (chunks is a static tuple), so these are plain
    # static VMEM slices; no 9x patch array ever touches HBM.
    for (r0, tr) in chunks:                          # static python loop
        P = tr * Wp
        conv = jnp.zeros((CF, P), jnp.float32)
        for idx, (kh, kw) in enumerate(product(range(3), range(3))):
            wk = wconv_ref[:, idx * C_in:(idx + 1) * C_in]       # [CF, C_in]
            start = (r0 + kh) * Wp + kw                          # static int
            slab = x_ref[:, start:start + P]                     # [C_in, P]
            conv += jnp.dot(wk, slab, preferred_element_type=jnp.float32)
        # bias + ReLU in f32; mask the width-pad garbage columns so the pool is
        # exact (ReLU(garbage + bias) must not leak into the average).
        h = jnp.maximum(conv + bconv_ref[...], 0.0)              # [CF, P]
        acc = acc + jnp.sum(h * mask_ref[:, :P], axis=1, keepdims=True)

    feat = acc * inv_hw                                          # global average pool
    # folded cbl @ sparse_layer tail: broadcast-mul + sublane reduce (avoids a
    # badly shaped M=1 MXU call; it's once per image, VPU filler in the
    # HBM-bound regime on v6e/v7x).
    logits = jnp.sum(feat * wcomb_ref[...], axis=0, keepdims=True) + bcomb_ref[...]
    out_ref[...] = logits[None].astype(out_ref.dtype)


# ------------------------------- wrapper -------------------------------------
def cbm_forward(x, params, *, compute_dtype=jnp.bfloat16, chunk_lanes=512):
    """x: [B, C_in, H, W] float32 (NCHW, like PyTorch).

    compute_dtype: operand dtype for the conv matmuls (bf16 on all generations;
        accumulation / bias / ReLU / pool / tail stay f32).
    chunk_lanes: ~extended pixels per in-kernel row chunk (bounds the f32
        conv temporaries at CF * chunk_lanes * 4 bytes).
    """
    B, C_in, H, W = x.shape
    Hp, Wp = H + 2, W + 2
    hw = H * W

    wconv = params["wconv"]            # [C_in*9, C_feat], rows ordered (c_in, kh, kw)
    bconv = params["bconv"]            # [1, C_feat]
    wcbl, bcbl = params["wcbl"], params["bcbl"]
    wsp, bsp = params["wsp"], params["bsp"]
    C_feat = wconv.shape[1]
    n_cls = wsp.shape[1]

    # ---- fold the two bias-only linears (exact: no nonlinearity between them).
    # If concept activations must be exposed (CBM interpretability) keep both
    # matmuls and emit `concepts` as a second kernel output instead.
    wcomb = wcbl @ wsp                                    # [C_feat, N_cls]
    bcomb = bcbl @ wsp + bsp                              # [1, N_cls]

    # ---- lane-dense padding of feature / class dims (keep 128, not 256) ----
    CF = _round_up(C_feat, 128)
    NC = _round_up(n_cls, 128)

    # conv weight transposed to [CF, 9*C_in] so each shift is a plain
    # [CF, C_in] @ [C_in, P] matmul (no operand transposes in-kernel).
    w4 = wconv.reshape(C_in, 3, 3, C_feat)                # [c_in, kh, kw, c_out]
    w_t = jnp.transpose(w4, (3, 1, 2, 0)).reshape(C_feat, 9 * C_in)
    wconv_p = jnp.zeros((CF, 9 * C_in), jnp.float32).at[:C_feat, :].set(w_t)
    bconv_p = jnp.zeros((CF, 1), jnp.float32).at[:C_feat, 0].set(bconv[0])
    wcomb_p = jnp.zeros((CF, NC), jnp.float32).at[:C_feat, :n_cls].set(wcomb)
    bcomb_p = jnp.zeros((1, NC), jnp.float32).at[:, :n_cls].set(bcomb)

    # ---- spatially padded, width-flattened image (the only streamed operand) ---
    # L is rounded to a multiple of 128 (lane-dense DMA); +2 gives slack for the
    # kw-shift row wrap on the last padded row.
    L = _round_up(Hp * Wp + 2, 128)
    x_pad = jnp.pad(x, ((0, 0), (0, 0), (1, 1), (1, 1))).reshape(B, C_in, Hp * Wp)
    x_flat = jnp.pad(x_pad, ((0, 0), (0, 0), (0, L - Hp * Wp)))

    # bf16 operands (all generations): halves streamed HBM bytes; f32 accumulate.
    x_flat = x_flat.astype(compute_dtype)
    wconv_p = wconv_p.astype(compute_dtype)

    # ---- static in-kernel row chunks (last chunk may be smaller) ----
    tr_max = max(1, min(H, chunk_lanes // Wp))
    chunks, r0 = [], 0
    while r0 < H:
        tr = min(tr_max, H - r0)
        chunks.append((r0, tr))
        r0 += tr
    chunks = tuple(chunks)
    p_max = tr_max * Wp

    # valid-column mask (periodic per padded row): 1.0 for w < W, 0.0 for width pad
    mask = (jnp.arange(p_max) % Wp < W).astype(jnp.float32).reshape(1, p_max)

    # ---- right-size the scoped VMEM budget (v7x only has 64 MiB physical) ----
    in_dt = jnp.dtype(compute_dtype).itemsize
    vmem_need = (2 * _round_up(C_in, 8) * L * in_dt                 # x (double-buffered)
                 + 2 * CF * _round_up(9 * C_in, 128) * in_dt        # conv weight
                 + 2 * _round_up(CF, 8) * 128 * 4                   # conv bias
                 + 2 * CF * NC * 4 + 2 * 8 * NC * 4                 # folded weight/bias
                 + 2 * 8 * _round_up(p_max, 128) * 4                # mask
                 + 2 * 8 * NC * 4                                   # output
                 + 6 * CF * p_max * 4)                              # conv/h temporaries
    vmem_limit = int(min(max(32 * 1024 * 1024, 2 * vmem_need), 64 * 1024 * 1024))

    cost = pl.CostEstimate(
        flops=2 * B * hw * (9 * C_in) * CF + 2 * B * CF * NC,
        transcendentals=0,
        bytes_accessed=int(x_flat.size * in_dt + wconv_p.size * in_dt
                           + (bconv_p.size + wcomb_p.size + bcomb_p.size
                              + mask.size) * 4
                           + B * NC * 4),
    )

    kernel = functools.partial(cbm_kernel, chunks=chunks, Wp=Wp, C_in=C_in,
                               inv_hw=1.0 / hw)

    resident = lambda b: (0, 0)                       # weights stay in VMEM
    # TODO(synk): single-buffer the resident operands (pipeline_mode=pl.Buffered(1))
    # once verified on the target jax build, or move the folded tail matmul to XLA
    # on v7x if CF*NC resident VMEM gets large.
    out = pl.pallas_call(
        kernel,
        out_shape=jax.ShapeDtypeStruct((B, 1, NC), jnp.float32),
        grid_spec=pltpu.PrefetchScalarGridSpec(
            num_scalar_prefetch=0,
            grid=(B,),
            in_specs=[
                pl.BlockSpec((None, C_in, L), lambda b: (b, 0, 0)),  # streamed image
                pl.BlockSpec((CF, 9 * C_in), resident),              # conv weight
                pl.BlockSpec((CF, 1), resident),                     # conv bias
                pl.BlockSpec((CF, NC), resident),                    # folded weight
                pl.BlockSpec((1, NC), resident),                     # folded bias
                pl.BlockSpec((1, p_max), resident),                  # valid-col mask
            ],
            out_specs=pl.BlockSpec((1, 1, NC), lambda b: (b, 0, 0)),
        ),
        compiler_params=pltpu.CompilerParams(
            # batch axis "parallel": megacore-shards across v7x's 2 TCs when B >= 2.
            # TODO(synk): for B == 1 on v7x, split the row-chunk work across cores.
            dimension_semantics=("parallel",),
            vmem_limit_bytes=vmem_limit,
        ),
        cost_estimate=cost,
    )(x_flat, wconv_p, bconv_p, wcomb_p, bcomb_p, mask)

    return out[:, 0, :n_cls]                          # strip lane padding


# ----------------------------- pure-JAX reference ---------------------------
def cbm_reference(x, params):
    B, C_in, H, W = x.shape
    wconv = params["wconv"].T.reshape(-1, C_in, 3, 3)     # [C_feat, C_in, 3, 3]
    conv = jax.lax.conv_general_dilated(
        x, wconv, window_strides=(1, 1), padding=((1, 1), (1, 1)),
        dimension_numbers=("NCHW", "OIHW", "NCHW"))
    conv = conv + params["bconv"][0][None, :, None, None]
    conv = jnp.maximum(conv, 0.0)
    feat = conv.mean(axis=(2, 3))                          # [B, C_feat]
    concepts = feat @ params["wcbl"] + params["bcbl"]
    return concepts @ params["wsp"] + params["bsp"]


# ----------------------------------- main ------------------------------------
if __name__ == "__main__":
    B, C_in, H, W = 2, 4, 16, 16
    C_feat, N_cpt, N_cls = 32, 16, 8

    key = jax.random.PRNGKey(0)
    kx, k1, k2, k3, k4, k5, k6 = jax.random.split(key, 7)

    x = jax.random.normal(kx, (B, C_in, H, W), dtype=jnp.float32)

    params = {
        # conv weight stored as im2col matrix [C_in*9, C_feat], rows (c_in, kh, kw)
        "wconv": 0.1 * jax.random.normal(k1, (C_in * 9, C_feat), dtype=jnp.float32),
        "bconv": 0.1 * jax.random.normal(k2, (1, C_feat), dtype=jnp.float32),
        "wcbl":  0.1 * jax.random.normal(k3, (C_feat, N_cpt), dtype=jnp.float32),
        "bcbl":  0.1 * jax.random.normal(k4, (1, N_cpt), dtype=jnp.float32),
        "wsp":   0.1 * jax.random.normal(k5, (N_cpt, N_cls), dtype=jnp.float32),
        "bsp":   0.1 * jax.random.normal(k6, (1, N_cls), dtype=jnp.float32),
    }

    ref = jax.block_until_ready(cbm_reference(x, params))

    # default path: bf16 conv-matmul operands, f32 accumulation everywhere
    out_bf16 = jax.block_until_ready(cbm_forward(x, params))
    assert out_bf16.shape == (B, N_cls)
    assert jnp.allclose(out_bf16, ref, atol=2e-2, rtol=2e-2), \
        "mismatch vs JAX reference (bf16)"

    # f32 path: tight tolerance
    out_f32 = jax.block_until_ready(
        cbm_forward(x, params, compute_dtype=jnp.float32))
    assert jnp.allclose(out_f32, ref, atol=1e-4, rtol=1e-4), \
        "mismatch vs JAX reference (f32)"

    print("KERNEL_OK")
</pallas_src>

<mosaic_0001>
module attributes {stable_mosaic.version = 11 : i64} {
  func.func @cbm_kernel(%arg0: i32, %arg1: memref<1x4x384xbf16, #tpu.memory_space<vmem>>, %arg2: memref<128x36xbf16, #tpu.memory_space<vmem>>, %arg3: memref<128x1xf32, #tpu.memory_space<vmem>>, %arg4: memref<128x128xf32, #tpu.memory_space<vmem>>, %arg5: memref<1x128xf32, #tpu.memory_space<vmem>>, %arg6: memref<1x288xf32, #tpu.memory_space<vmem>>, %arg7: memref<1x1x128xf32, #tpu.memory_space<vmem>>) attributes {dimension_semantics = [#tpu.dimension_semantics<parallel>], iteration_bounds = array<i64: 2>, scalar_prefetch = 0 : i64, scratch_operands = 0 : i64, tpu.core_type = #tpu.core_type<tc>, window_params = [{transform_indices = @transform_0, window_bounds = array<i64: 1, 4, 384>}, {pipeline_mode = #tpu.pipeline_mode<synchronous>, transform_indices = @transform_1, window_bounds = array<i64: 128, 36>}, {pipeline_mode = #tpu.pipeline_mode<synchronous>, transform_indices = @transform_2, window_bounds = array<i64: 128, 1>}, {pipeline_mode = #tpu.pipeline_mode<synchronous>, transform_indices = @transform_3, window_bounds = array<i64: 128, 128>}, {pipeline_mode = #tpu.pipeline_mode<synchronous>, transform_indices = @transform_4, window_bounds = array<i64: 1, 128>}, {pipeline_mode = #tpu.pipeline_mode<synchronous>, transform_indices = @transform_5, window_bounds = array<i64: 1, 288>}, {transform_indices = @transform_6, window_bounds = array<i64: 1, 1, 128>}]} {
    %cst = arith.constant 0.000000e+00 : f32
    %0 = vector.broadcast %cst : f32 to vector<128x1xf32>
    %cst_0 = arith.constant 0.000000e+00 : f32
    %1 = vector.broadcast %cst_0 : f32 to vector<128x288xf32>
    %c0 = arith.constant 0 : index
    %c0_1 = arith.constant 0 : index
    %2 = vector.load %arg2[%c0, %c0_1] : memref<128x36xbf16, #tpu.memory_space<vmem>>, vector<128x4xbf16>
    %c0_2 = arith.constant 0 : index
    %c0_3 = arith.constant 0 : index
    %c0_4 = arith.constant 0 : index
    %3 = vector.load %arg1[%c0_2, %c0_3, %c0_4] : memref<1x4x384xbf16, #tpu.memory_space<vmem>>, vector<1x4x288xbf16>
    %4 = vector.shape_cast %3 : vector<1x4x288xbf16> to vector<4x288xbf16>
    %cst_5 = arith.constant dense<0.000000e+00> : vector<128x288xf32>
    %5 = tpu.matmul %2, %4, %cst_5 {dimension_numbers = #tpu.dot_dimension_numbers<[1], [0], [0], [1], [0, 0, 1, 1], [], []>} : vector<128x4xbf16>, vector<4x288xbf16>, vector<128x288xf32> -> vector<128x288xf32>
    %6 = arith.addf %1, %5 : vector<128x288xf32>
    %c0_6 = arith.constant 0 : index
    %c4 = arith.constant 4 : index
    %7 = vector.load %arg2[%c0_6, %c4] : memref<128x36xbf16, #tpu.memory_space<vmem>>, vector<128x4xbf16>
    %c0_7 = arith.constant 0 : index
    %c0_8 = arith.constant 0 : index
    %c1 = arith.constant 1 : index
    %8 = vector.load %arg1[%c0_7, %c0_8, %c1] : memref<1x4x384xbf16, #tpu.memory_space<vmem>>, vector<1x4x288xbf16>
    %9 = vector.shape_cast %8 : vector<1x4x288xbf16> to vector<4x288xbf16>
    %cst_9 = arith.constant dense<0.000000e+00> : vector<128x288xf32>
    %10 = tpu.matmul %7, %9, %cst_9 {dimension_numbers = #tpu.dot_dimension_numbers<[1], [0], [0], [1], [0, 0, 1, 1], [], []>} : vector<128x4xbf16>, vector<4x288xbf16>, vector<128x288xf32> -> vector<128x288xf32>
    %11 = arith.addf %6, %10 : vector<128x288xf32>
    %c0_10 = arith.constant 0 : index
    %c8 = arith.constant 8 : index
    %12 = vector.load %arg2[%c0_10, %c8] : memref<128x36xbf16, #tpu.memory_space<vmem>>, vector<128x4xbf16>
    %c0_11 = arith.constant 0 : index
    %c0_12 = arith.constant 0 : index
    %c2 = arith.constant 2 : index
    %13 = vector.load %arg1[%c0_11, %c0_12, %c2] : memref<1x4x384xbf16, #tpu.memory_space<vmem>>, vector<1x4x288xbf16>
    %14 = vector.shape_cast %13 : vector<1x4x288xbf16> to vector<4x288xbf16>
    %cst_13 = arith.constant dense<0.000000e+00> : vector<128x288xf32>
    %15 = tpu.matmul %12, %14, %cst_13 {dimension_numbers = #tpu.dot_dimension_numbers<[1], [0], [0], [1], [0, 0, 1, 1], [], []>} : vector<128x4xbf16>, vector<4x288xbf16>, vector<128x288xf32> -> vector<128x288xf32>
    %16 = arith.addf %11, %15 : vector<128x288xf32>
    %c0_14 = arith.constant 0 : index
    %c12 = arith.constant 12 : index
    %17 = vector.load %arg2[%c0_14, %c12] : memref<128x36xbf16, #tpu.memory_space<vmem>>, vector<128x4xbf16>
    %c0_15 = arith.constant 0 : index
    %c0_16 = arith.constant 0 : index
    %c18 = arith.constant 18 : index
    %18 = vector.load %arg1[%c0_15, %c0_16, %c18] : memref<1x4x384xbf16, #tpu.memory_space<vmem>>, vector<1x4x288xbf16>
    %19 = vector.shape_cast %18 : vector<1x4x288xbf16> to vector<4x288xbf16>
    %cst_17 = arith.constant dense<0.000000e+00> : vector<128x288xf32>
    %20 = tpu.matmul %17, %19, %cst_17 {dimension_numbers = #tpu.dot_dimension_numbers<[1], [0], [0], [1], [0, 0, 1, 1], [], []>} : vector<128x4xbf16>, vector<4x288xbf16>, vector<128x288xf32> -> vector<128x288xf32>
    %21 = arith.addf %16, %20 : vector<128x288xf32>
    %c0_18 = arith.constant 0 : index
    %c16 = arith.constant 16 : index
    %22 = vector.load %arg2[%c0_18, %c16] : memref<128x36xbf16, #tpu.memory_space<vmem>>, vector<128x4xbf16>
    %c0_19 = arith.constant 0 : index
    %c0_20 = arith.constant 0 : index
    %c19 = arith.constant 19 : index
    %23 = vector.load %arg1[%c0_19, %c0_20, %c19] : memref<1x4x384xbf16, #tpu.memory_space<vmem>>, vector<1x4x288xbf16>
    %24 = vector.shape_cast %23 : vector<1x4x288xbf16> to vector<4x288xbf16>
    %cst_21 = arith.constant dense<0.000000e+00> : vector<128x288xf32>
    %25 = tpu.matmul %22, %24, %cst_21 {dimension_numbers = #tpu.dot_dimension_numbers<[1], [0], [0], [1], [0, 0, 1, 1], [], []>} : vector<128x4xbf16>, vector<4x288xbf16>, vector<128x288xf32> -> vector<128x288xf32>
    %26 = arith.addf %21, %25 : vector<128x288xf32>
    %c0_22 = arith.constant 0 : index
    %c20 = arith.constant 20 : index
    %27 = vector.load %arg2[%c0_22, %c20] : memref<128x36xbf16, #tpu.memory_space<vmem>>, vector<128x4xbf16>
    %c0_23 = arith.constant 0 : index
    %c0_24 = arith.constant 0 : index
    %c20_25 = arith.constant 20 : index
    %28 = vector.load %arg1[%c0_23, %c0_24, %c20_25] : memref<1x4x384xbf16, #tpu.memory_space<vmem>>, vector<1x4x288xbf16>
    %29 = vector.shape_cast %28 : vector<1x4x288xbf16> to vector<4x288xbf16>
    %cst_26 = arith.constant dense<0.000000e+00> : vector<128x288xf32>
    %30 = tpu.matmul %27, %29, %cst_26 {dimension_numbers = #tpu.dot_dimension_numbers<[1], [0], [0], [1], [0, 0, 1, 1], [], []>} : vector<128x4xbf16>, vector<4x288xbf16>, vector<128x288xf32> -> vector<128x288xf32>
    %31 = arith.addf %26, %30 : vector<128x288xf32>
    %c0_27 = arith.constant 0 : index
    %c24 = arith.constant 24 : index
    %32 = vector.load %arg2[%c0_27, %c24] : memref<128x36xbf16, #tpu.memory_space<vmem>>, vector<128x4xbf16>
    %c0_28 = arith.constant 0 : index
    %c0_29 = arith.constant 0 : index
    %c36 = arith.constant 36 : index
    %33 = vector.load %arg1[%c0_28, %c0_29, %c36] : memref<1x4x384xbf16, #tpu.memory_space<vmem>>, vector<1x4x288xbf16>
    %34 = vector.shape_cast %33 : vector<1x4x288xbf16> to vector<4x288xbf16>
    %cst_30 = arith.constant dense<0.000000e+00> : vector<128x288xf32>
    %35 = tpu.matmul %32, %34, %cst_30 {dimension_numbers = #tpu.dot_dimension_numbers<[1], [0], [0], [1], [0, 0, 1, 1], [], []>} : vector<128x4xbf16>, vector<4x288xbf16>, vector<128x288xf32> -> vector<128x288xf32>
    %36 = arith.addf %31, %35 : vector<128x288xf32>
    %c0_31 = arith.constant 0 : index
    %c28 = arith.constant 28 : index
    %37 = vector.load %arg2[%c0_31, %c28] : memref<128x36xbf16, #tpu.memory_space<vmem>>, vector<128x4xbf16>
    %c0_32 = arith.constant 0 : index
    %c0_33 = arith.constant 0 : index
    %c37 = arith.constant 37 : index
    %38 = vector.load %arg1[%c0_32, %c0_33, %c37] : memref<1x4x384xbf16, #tpu.memory_space<vmem>>, vector<1x4x288xbf16>
    %39 = vector.shape_cast %38 : vector<1x4x288xbf16> to vector<4x288xbf16>
    %cst_34 = arith.constant dense<0.000000e+00> : vector<128x288xf32>
    %40 = tpu.matmul %37, %39, %cst_34 {dimension_numbers = #tpu.dot_dimension_numbers<[1], [0], [0], [1], [0, 0, 1, 1], [], []>} : vector<128x4xbf16>, vector<4x288xbf16>, vector<128x288xf32> -> vector<128x288xf32>
    %41 = arith.addf %36, %40 : vector<128x288xf32>
    %c0_35 = arith.constant 0 : index
    %c32 = arith.constant 32 : index
    %42 = vector.load %arg2[%c0_35, %c32] : memref<128x36xbf16, #tpu.memory_space<vmem>>, vector<128x4xbf16>
    %c0_36 = arith.constant 0 : index
    %c0_37 = arith.constant 0 : index
    %c38 = arith.constant 38 : index
    %43 = vector.load %arg1[%c0_36, %c0_37, %c38] : memref<1x4x384xbf16, #tpu.memory_space<vmem>>, vector<1x4x288xbf16>
    %44 = vector.shape_cast %43 : vector<1x4x288xbf16> to vector<4x288xbf16>
    %cst_38 = arith.constant dense<0.000000e+00> : vector<128x288xf32>
    %45 = tpu.matmul %42, %44, %cst_38 {dimension_numbers = #tpu.dot_dimension_numbers<[1], [0], [0], [1], [0, 0, 1, 1], [], []>} : vector<128x4xbf16>, vector<4x288xbf16>, vector<128x288xf32> -> vector<128x288xf32>
    %46 = arith.addf %41, %45 : vector<128x288xf32>
    %c0_39 = arith.constant 0 : index
    %c0_40 = arith.constant 0 : index
    %47 = vector.load %arg3[%c0_39, %c0_40] : memref<128x1xf32, #tpu.memory_space<vmem>>, vector<128x1xf32>
    %48 = vector.broadcast %47 : vector<128x1xf32> to vector<128x288xf32>
    %49 = arith.addf %46, %48 : vector<128x288xf32>
    %cst_41 = arith.constant 0.000000e+00 : f32
    %50 = vector.broadcast %cst_41 : f32 to vector<128x288xf32>
    %51 = arith.maximumf %49, %50 : vector<128x288xf32>
    %c0_42 = arith.constant 0 : index
    %c0_43 = arith.constant 0 : index
    %52 = vector.load %arg6[%c0_42, %c0_43] : memref<1x288xf32, #tpu.memory_space<vmem>>, vector<1x288xf32>
    %53 = vector.broadcast %52 : vector<1x288xf32> to vector<128x288xf32>
    %54 = arith.mulf %51, %53 : vector<128x288xf32>
    %cst_44 = arith.constant dense<0.000000e+00> : vector<128xf32>
    %55 = vector.multi_reduction <add>, %54, %cst_44 [1] : vector<128x288xf32> to vector<128xf32>
    %56 = vector.shape_cast %55 : vector<128xf32> to vector<128x1xf32>
    %57 = arith.addf %0, %56 : vector<128x1xf32>
    %cst_45 = arith.constant 3.906250e-03 : f32
    %58 = vector.broadcast %cst_45 : f32 to vector<128x1xf32>
    %59 = arith.mulf %57, %58 : vector<128x1xf32>
    %c0_46 = arith.constant 0 : index
    %c0_47 = arith.constant 0 : index
    %60 = vector.load %arg4[%c0_46, %c0_47] : memref<128x128xf32, #tpu.memory_space<vmem>>, vector<128x128xf32>
    %61 = vector.broadcast %59 : vector<128x1xf32> to vector<128x128xf32>
    %62 = arith.mulf %61, %60 : vector<128x128xf32>
    %cst_48 = arith.constant dense<0.000000e+00> : vector<128xf32>
    %63 = vector.multi_reduction <add>, %62, %cst_48 [0] : vector<128x128xf32> to vector<128xf32>
    %64 = vector.shape_cast %63 : vector<128xf32> to vector<1x128xf32>
    %c0_49 = arith.constant 0 : index
    %c0_50 = arith.constant 0 : index
    %65 = vector.load %arg5[%c0_49, %c0_50] : memref<1x128xf32, #tpu.memory_space<vmem>>, vector<1x128xf32>
    %66 = arith.addf %64, %65 : vector<1x128xf32>
    %67 = vector.shape_cast %66 : vector<1x128xf32> to vector<1x1x128xf32>
    %c0_51 = arith.constant 0 : index
    %c0_52 = arith.constant 0 : index
    %c0_53 = arith.constant 0 : index
    %68 = vector.load %arg7[%c0_51, %c0_52, %c0_53] : memref<1x1x128xf32, #tpu.memory_space<vmem>>, vector<1x1x128xf32>
    tpu.vector_store %arg7[%c0_51, %c0_52, %c0_53], %67 {strides = array<i32>} : memref<1x1x128xf32, #tpu.memory_space<vmem>>, vector<1x1x128xf32>,
    return
  }
  func.func @transform_0(%arg0: i32) -> (i32, i32, i32) {
    %c0_i32 = arith.constant 0 : i32
    %c0_i32_0 = arith.constant 0 : i32
    %c0_i32_1 = arith.constant 0 : i32
    return %arg0, %c0_i32, %c0_i32_0 : i32, i32, i32
  }
  func.func @transform_1(%arg0: i32) -> (i32, i32) {
    %c0_i32 = arith.constant 0 : i32
    %c0_i32_0 = arith.constant 0 : i32
    %c0_i32_1 = arith.constant 0 : i32
    return %c0_i32, %c0_i32_0 : i32, i32
  }
  func.func @transform_2(%arg0: i32) -> (i32, i32) {
    %c0_i32 = arith.constant 0 : i32
    %c0_i32_0 = arith.constant 0 : i32
    %c0_i32_1 = arith.constant 0 : i32
    return %c0_i32, %c0_i32_0 : i32, i32
  }
  func.func @transform_3(%arg0: i32) -> (i32, i32) {
    %c0_i32 = arith.constant 0 : i32
    %c0_i32_0 = arith.constant 0 : i32
    %c0_i32_1 = arith.constant 0 : i32
    return %c0_i32, %c0_i32_0 : i32, i32
  }
  func.func @transform_4(%arg0: i32) -> (i32, i32) {
    %c0_i32 = arith.constant 0 : i32
    %c0_i32_0 = arith.constant 0 : i32
    %c0_i32_1 = arith.constant 0 : i32
    return %c0_i32, %c0_i32_0 : i32, i32
  }
  func.func @transform_5(%arg0: i32) -> (i32, i32) {
    %c0_i32 = arith.constant 0 : i32
    %c0_i32_0 = arith.constant 0 : i32
    %c0_i32_1 = arith.constant 0 : i32
    return %c0_i32, %c0_i32_0 : i32, i32
  }
  func.func @transform_6(%arg0: i32) -> (i32, i32, i32) {
    %c0_i32 = arith.constant 0 : i32
    %c0_i32_0 = arith.constant 0 : i32
    %c0_i32_1 = arith.constant 0 : i32
    return %arg0, %c0_i32, %c0_i32_0 : i32, i32, i32
  }
}

</mosaic_0001>

<llo_original>
// kernel: tpu_custom_call.1
$region0: #{tpu_custom_call.1}
  #allocation0 [shape = 'u32[]', space=smem, size = 0x4, offset = 0x4, fixed_abs, tag = 'smem constant byte address 0x4 - core index']
  #allocation1 [shape = 'u32[72,128]{1,0:T(1,128)}', space=vmem, size = 0x9000, scoped, tag = 'internal scratch']
  %s0 = inlined_call_operand.vmem [shape: bf16[2,4,384], index: 0, kind: input, shape index: {}]
  %s1 = inlined_call_operand.vmem [shape: bf16[128,36], index: 1, kind: input, shape index: {}]
  %s2 = inlined_call_operand.vmem [shape: f32[128,1], index: 2, kind: input, shape index: {}]
  %s3 = inlined_call_operand.vmem [shape: f32[128,128], index: 3, kind: input, shape index: {}]
  %s4 = inlined_call_operand.vmem [shape: f32[1,128], index: 4, kind: input, shape index: {}]
  %s5 = inlined_call_operand.vmem [shape: f32[1,288], index: 5, kind: input, shape index: {}]
  %s6 = inlined_call_operand.hbm [shape: f32[2,1,128], index: 6, kind: output, shape index: {}]
  %s7 = sld [smem:[#allocation0]]
  $region57: #{tpu_custom_call.1} parent=0
    _
  %s9 = ssub.s32 1, %s7
  %s10 = scalar_select 0, %s9, %s7
  $region1: #{tpu_custom_call.1} parent=0
    #allocation2 [shape = 'u8[1024]{0}', space=vmem, size = 0x400, scoped, tag = 'output window, operand 0']
    #allocation3 [shape = 's32[2]{0}', space=sflag, size = 0x8, scoped, tag = 'scoped memory for tpu_custom_call.1']
    %11 = vsyncpa [#allocation3], 0
    %s12 = scalar_lea.sflag [#allocation3], 1
    %13 = vsyncpa %s12, 0
    loop: start=0, step=1, limit=4
    $region2: #{tpu_custom_call.1} parent=1 // loop_pre_header
      _
    $region3: #{tpu_custom_call.1} parent=1 // loop_header
      %s15 = sphi 0, %s19
      %p16 = scmp.ge.s32.totalorder %s15, 4
      %s25 = sphi 0, %s27
      %s28 = sphi 0, %s25
      %s29 = sphi 0, %s28
      %s45 = sphi 0, %s29
      %s49 = sphi 0, %s49
      %s51 = sphi 0, %s49
      %s52 = sphi 0, %s51
      %s66 = sphi 0, %s52
      %s70 = sphi 0, %s70
      %s72 = sphi 0, %s70
      %s73 = sphi 0, %s72
      %s87 = sphi 0, %s73
      %s91 = sphi 0, %s91
      %s93 = sphi 0, %s91
      %s94 = sphi 0, %s93
      %s108 = sphi 0, %s94
      %s112 = sphi 0, %s112
      %s114 = sphi 0, %s112
      %s115 = sphi 0, %s114
      %s129 = sphi 0, %s115
      %s133 = sphi 0, %s133
      %s135 = sphi 0, %s133
      %s136 = sphi 0, %s135
      %s150 = sphi 0, %s136
      %s156 = sphi 0, %s158
      %s159 = sphi 0, %s156
      %s160 = sphi 0, %s159
      %s176 = sphi 0, %s160
    $region4: #{tpu_custom_call.1} parent=1 // loop_header_branch
      %18 = sbr.rel (%p16) target = $region8
    $region5: #{tpu_custom_call.1} parent=1 // loop_body
      %s20 = ssub.s32 %s15, 1
      %s21 = ssub.s32 %s15, 2
      %s22 = sadd.s32 %s15, 1
      %s23 = ssub.s32 %s15, %s22
      %p24 = scmp.eq.s32.totalorder %s23, 0
      %s26 = sadd.s32 %s25, 1
      %s27 = scalar_select %p24, %s25, %s26
      %p30 = pneg %p24
      %p31 = scmp.eq.s32.totalorder %s15, 1
      %p32 = por %p30, %p31
      %p33 = scmp.ne.s32.totalorder %s25, %s28
      %p34 = scmp.eq.s32.totalorder %s15, 0
      %p35 = por %p33, %p34
      %p36 = scmp.ne.s32.totalorder %s25, %s28
      %p37 = scmp.eq.s32.totalorder %s20, 1
      %p38 = por %p36, %p37
      %p39 = scmp.ne.s32.totalorder %s28, %s29
      %p40 = scmp.eq.s32.totalorder %s20, 0
      %p41 = por %p39, %p40
      %p42 = scmp.ne.s32.totalorder %s28, %s29
      %p43 = scmp.eq.s32.totalorder %s21, 1
      %p44 = por %p42, %p43
      %p46 = scmp.ne.s32.totalorder %s29, %s45
      %p47 = scmp.eq.s32.totalorder %s21, 0
      %p48 = por %p46, %p47
      %s50 = sadd.s32 %s49, 1
      %p53 = scmp.eq.s32.totalorder %s15, 1
      %p54 = scmp.ne.s32.totalorder %s49, %s51
      %p55 = scmp.eq.s32.totalorder %s15, 0
      %p56 = por %p54, %p55
      %p57 = scmp.ne.s32.totalorder %s49, %s51
      %p58 = scmp.eq.s32.totalorder %s20, 1
      %p59 = por %p57, %p58
      %p60 = scmp.ne.s32.totalorder %s51, %s52
      %p61 = scmp.eq.s32.totalorder %s20, 0
      %p62 = por %p60, %p61
      %p63 = scmp.ne.s32.totalorder %s51, %s52
      %p64 = scmp.eq.s32.totalorder %s21, 1
      %p65 = por %p63, %p64
      %p67 = scmp.ne.s32.totalorder %s52, %s66
      %p68 = scmp.eq.s32.totalorder %s21, 0
      %p69 = por %p67, %p68
      %s71 = sadd.s32 %s70, 1
      %p74 = scmp.eq.s32.totalorder %s15, 1
      %p75 = scmp.ne.s32.totalorder %s70, %s72
      %p76 = scmp.eq.s32.totalorder %s15, 0
      %p77 = por %p75, %p76
      %p78 = scmp.ne.s32.totalorder %s70, %s72
      %p79 = scmp.eq.s32.totalorder %s20, 1
      %p80 = por %p78, %p79
      %p81 = scmp.ne.s32.totalorder %s72, %s73
      %p82 = scmp.eq.s32.totalorder %s20, 0
      %p83 = por %p81, %p82
      %p84 = scmp.ne.s32.totalorder %s72, %s73
      %p85 = scmp.eq.s32.totalorder %s21, 1
      %p86 = por %p84, %p85
      %p88 = scmp.ne.s32.totalorder %s73, %s87
      %p89 = scmp.eq.s32.totalorder %s21, 0
      %p90 = por %p88, %p89
      %s92 = sadd.s32 %s91, 1
      %p95 = scmp.eq.s32.totalorder %s15, 1
      %p96 = scmp.ne.s32.totalorder %s91, %s93
      %p97 = scmp.eq.s32.totalorder %s15, 0
      %p98 = por %p96, %p97
      %p99 = scmp.ne.s32.totalorder %s91, %s93
      %p100 = scmp.eq.s32.totalorder %s20, 1
      %p101 = por %p99, %p100
      %p102 = scmp.ne.s32.totalorder %s93, %s94
      %p103 = scmp.eq.s32.totalorder %s20, 0
      %p104 = por %p102, %p103
      %p105 = scmp.ne.s32.totalorder %s93, %s94
      %p106 = scmp.eq.s32.totalorder %s21, 1
      %p107 = por %p105, %p106
      %p109 = scmp.ne.s32.totalorder %s94, %s108
      %p110 = scmp.eq.s32.totalorder %s21, 0
      %p111 = por %p109, %p110
      %s113 = sadd.s32 %s112, 1
      %p116 = scmp.eq.s32.totalorder %s15, 1
      %p117 = scmp.ne.s32.totalorder %s112, %s114
      %p118 = scmp.eq.s32.totalorder %s15, 0
      %p119 = por %p117, %p118
      %p120 = scmp.ne.s32.totalorder %s112, %s114
      %p121 = scmp.eq.s32.totalorder %s20, 1
      %p122 = por %p120, %p121
      %p123 = scmp.ne.s32.totalorder %s114, %s115
      %p124 = scmp.eq.s32.totalorder %s20, 0
      %p125 = por %p123, %p124
      %p126 = scmp.ne.s32.totalorder %s114, %s115
      %p127 = scmp.eq.s32.totalorder %s21, 1
      %p128 = por %p126, %p127
      %p130 = scmp.ne.s32.totalorder %s115, %s129
      %p131 = scmp.eq.s32.totalorder %s21, 0
      %p132 = por %p130, %p131
      %s134 = sadd.s32 %s133, 1
      %p137 = scmp.eq.s32.totalorder %s15, 1
      %p138 = scmp.ne.s32.totalorder %s133, %s135
      %p139 = scmp.eq.s32.totalorder %s15, 0
      %p140 = por %p138, %p139
      %p141 = scmp.ne.s32.totalorder %s133, %s135
      %p142 = scmp.eq.s32.totalorder %s20, 1
      %p143 = por %p141, %p142
      %p144 = scmp.ne.s32.totalorder %s135, %s136
      %p145 = scmp.eq.s32.totalorder %s20, 0
      %p146 = por %p144, %p145
      %p147 = scmp.ne.s32.totalorder %s135, %s136
      %p148 = scmp.eq.s32.totalorder %s21, 1
      %p149 = por %p147, %p148
      %p151 = scmp.ne.s32.totalorder %s136, %s150
      %p152 = scmp.eq.s32.totalorder %s21, 0
      %p153 = por %p151, %p152
      %s154 = ssub.s32 %s15, %s22
      %p155 = scmp.eq.s32.totalorder %s154, 0
      %s157 = sadd.s32 %s156, 1
      %s158 = scalar_select %p155, %s156, %s157
      %p161 = pneg %p155
      %p162 = scmp.eq.s32.totalorder %s15, 1
      %p163 = por %p161, %p162
      %p164 = scmp.ne.s32.totalorder %s156, %s159
      %p165 = scmp.eq.s32.totalorder %s15, 0
      %p166 = por %p164, %p165
      %p167 = scmp.ne.s32.totalorder %s156, %s159
      %p168 = scmp.eq.s32.totalorder %s20, 1
      %p169 = por %p167, %p168
      %p170 = scmp.ne.s32.totalorder %s159, %s160
      %p171 = scmp.eq.s32.totalorder %s20, 0
      %p172 = por %p170, %p171
      %p173 = scmp.ne.s32.totalorder %s159, %s160
      %p174 = scmp.eq.s32.totalorder %s21, 1
      %p175 = por %p173, %p174
      %p177 = scmp.ne.s32.totalorder %s160, %s176
      %p178 = scmp.eq.s32.totalorder %s21, 0
      %p179 = por %p177, %p178
      %p180 = scmp.le.s32.totalorder 1, %s15
      %p181 = scmp.lt.s32.totalorder %s15, 3
      %p182 = pnand %p180, %p181
      %p183 = pneg %p182
      // Predicated region
      $region9: #{tpu_custom_call.1} parent=5 // pred_check
        _
      $region10: #{tpu_custom_call.1} parent=5 // pred_check_branch
        %185 = sbr.rel (%p182) target = $region12
      $region11: #{tpu_custom_call.1} parent=5 // pred_region
        %s186 = ssub.s32 %s15, 1
        // Predicated region
        $region13: #{tpu_custom_call.1} parent=11 // pred_check
          %p187 = pneg %p62
        $region14: #{tpu_custom_call.1} parent=11 // pred_check_branch
          %189 = sbr.rel (%p187) target = $region16
        $region15: #{tpu_custom_call.1} parent=11 // pred_region
          _
        $region16: #{tpu_custom_call.1} parent=11 // pred_fallthru
          _
        // Predicated region
        $region17: #{tpu_custom_call.1} parent=11 // pred_check
          %p190 = pneg %p83
        $region18: #{tpu_custom_call.1} parent=11 // pred_check_branch
          %192 = sbr.rel (%p190) target = $region20
        $region19: #{tpu_custom_call.1} parent=11 // pred_region
          _
        $region20: #{tpu_custom_call.1} parent=11 // pred_fallthru
          _
        // Predicated region
        $region21: #{tpu_custom_call.1} parent=11 // pred_check
          %p193 = pneg %p104
        $region22: #{tpu_custom_call.1} parent=11 // pred_check_branch
          %195 = sbr.rel (%p193) target = $region24
        $region23: #{tpu_custom_call.1} parent=11 // pred_region
          _
        $region24: #{tpu_custom_call.1} parent=11 // pred_fallthru
          _
        // Predicated region
        $region25: #{tpu_custom_call.1} parent=11 // pred_check
          %p196 = pneg %p125
        $region26: #{tpu_custom_call.1} parent=11 // pred_check_branch
          %198 = sbr.rel (%p196) target = $region28
        $region27: #{tpu_custom_call.1} parent=11 // pred_region
          _
        $region28: #{tpu_custom_call.1} parent=11 // pred_fallthru
          _
        // Predicated region
        $region29: #{tpu_custom_call.1} parent=11 // pred_check
          %p199 = pneg %p146
        $region30: #{tpu_custom_call.1} parent=11 // pred_check_branch
          %201 = sbr.rel (%p199) target = $region32
        $region31: #{tpu_custom_call.1} parent=11 // pred_region
          _
        $region32: #{tpu_custom_call.1} parent=11 // pred_fallthru
          _
      $region12: #{tpu_custom_call.1} parent=5 // pred_fallthru
        _
      %p202 = scmp.lt.s32.totalorder %s15, 2
      // Predicated region
      $region33: #{tpu_custom_call.1} parent=5 // pred_check
        %p203 = pneg %p202
      $region34: #{tpu_custom_call.1} parent=5 // pred_check_branch
        %205 = sbr.rel (%p203) target = $region36
      $region35: #{tpu_custom_call.1} parent=5 // pred_region
        // Predicated region
        $region37: #{tpu_custom_call.1} parent=35 // pred_check
          %p206 = pneg %p35
        $region38: #{tpu_custom_call.1} parent=35 // pred_check_branch
          %208 = sbr.rel (%p206) target = $region40
        $region39: #{tpu_custom_call.1} parent=35 // pred_region
          %p209 = scmp.lt.s32.totalorder %s15, 1
          %s210 = scalar_select %p209, %s15, 1
          %s211 = smul.addr %s210, 3
          %s212 = smul.addr %s211, 2
          %s213 = scalar_lea.vmem %s0, %s212
        $region40: #{tpu_custom_call.1} parent=35 // pred_fallthru
          _
      $region36: #{tpu_custom_call.1} parent=5 // pred_fallthru
        _
      %p214 = scmp.le.s32.totalorder 1, %s15
      %p215 = scmp.lt.s32.totalorder %s15, 3
      %p216 = pnand %p214, %p215
      %p217 = pneg %p216
      // Predicated region
      $region41: #{tpu_custom_call.1} parent=5 // pred_check
        _
      $region42: #{tpu_custom_call.1} parent=5 // pred_check_branch
        %219 = sbr.rel (%p216) target = $region44
      $region43: #{tpu_custom_call.1} parent=5 // pred_region
        %s220 = ssub.s32 %s15, 1
        %p221 = scmp.lt.s32.totalorder %s20, 1
        %s222 = scalar_select %p221, %s20, 1
        %s223 = smul.addr %s222, 3
        %s224 = smul.addr %s223, 2
        %s225 = scalar_lea.vmem %s0, %s224
        %p226 = pneg %p41
        %p227 = pneg %p38
        %p228 = pneg %p62
        %p229 = pneg %p59
        %p230 = pneg %p83
        %p231 = pneg %p80
        %p232 = pneg %p104
        %p233 = pneg %p101
        %p234 = pneg %p125
        %p235 = pneg %p122
        %p236 = pneg %p146
        %p237 = pneg %p143
        %p238 = pneg %p172
        %p239 = pneg %p169
        %s240 = sand.u32 %s159, 1
        %s241 = scalar_lea.sflag [#allocation3], %s240
        %s242 = sand.u32 %s159, 1
        %s243 = scalar_lea.vmem [#allocation2], %s242
        %p244 = scmp.lt.s32.totalorder %s20, 1
        %s245 = scalar_select %p244, %s20, 1
        %s246 = smul.addr %s245, 3
        %s247 = smul.addr %s246, 2
        %s248 = scalar_lea.vmem %s0, %s247
        %v250 = vld [vmem:[%s1] sm:$0xf]
        %v251 = vld [vmem:[%s1 + $0x4] sm:$0xf]
        %v252 = vld [vmem:[%s1 + $0x8] sm:$0xf]
        %v253 = vld [vmem:[%s1 + $0xc] sm:$0xf]
        %v254 = vld [vmem:[%s1 + $0x10] sm:$0xf]
        %v255 = vld [vmem:[%s1 + $0x14] sm:$0xf]
        %v256 = vld [vmem:[%s1 + $0x18] sm:$0xf]
        %v257 = vld [vmem:[%s1 + $0x1c] sm:$0xf]
        %v258 = vld [vmem:[%s1 + $0x20] sm:$0xf]
        %v259 = vld [vmem:[%s1 + $0x24] sm:$0xf]
        %v260 = vld [vmem:[%s1 + $0x28] sm:$0xf]
        %v261 = vld [vmem:[%s1 + $0x2c] sm:$0xf]
        %v262 = vld [vmem:[%s1 + $0x30] sm:$0xf]
        %v263 = vld [vmem:[%s1 + $0x34] sm:$0xf]
        %v264 = vld [vmem:[%s1 + $0x38] sm:$0xf]
        %v265 = vld [vmem:[%s1 + $0x3c] sm:$0xf]
        %v266 = vld [vmem:[%s248] sm:$0x3f]
        %v283 = vunpack.c.l.b16 %v250
        %v284 = vunpack.c.l.b16 %v251
        %v285 = vunpack.c.l.b16 %v252
        %v286 = vunpack.c.l.b16 %v253
        %v287 = vunpack.c.l.b16 %v254
        %v288 = vunpack.c.l.b16 %v255
        %v289 = vunpack.c.l.b16 %v256
        %v290 = vunpack.c.l.b16 %v257
        %v291 = vunpack.c.l.b16 %v258
        %v292 = vunpack.c.l.b16 %v259
        %v293 = vunpack.c.l.b16 %v260
        %v294 = vunpack.c.l.b16 %v261
        %v295 = vunpack.c.l.b16 %v262
        %v296 = vunpack.c.l.b16 %v263
        %v297 = vunpack.c.l.b16 %v264
        %v298 = vunpack.c.l.b16 %v265
        %v299 = vpack.c.b16 %v284, %v283
        %v300 = vpack.c.b16 %v286, %v285
        %v301 = vpack.c.b16 %v288, %v287
        %v302 = vpack.c.b16 %v290, %v289
        %v303 = vpack.c.b16 %v292, %v291
        %v304 = vpack.c.b16 %v294, %v293
        %v305 = vpack.c.b16 %v296, %v295
        %v306 = vpack.c.b16 %v298, %v297
        %307 = vrot.lane.b32.xlu0 %v299, 124
        %v308 = vpop.permute.xlu0 %307
        %309 = vrot.lane.b32.xlu0 %v300, 124
        %v310 = vpop.permute.xlu0 %309
        %311 = vrot.lane.b32.xlu0 %v301, 124
        %v312 = vpop.permute.xlu0 %311
        %313 = vrot.lane.b32.xlu0 %v302, 124
        %v314 = vpop.permute.xlu0 %313
        %315 = vrot.lane.b32.xlu0 %v303, 124
        %v316 = vpop.permute.xlu0 %315
        %317 = vrot.lane.b32.xlu0 %v304, 124
        %v318 = vpop.permute.xlu0 %317
        %319 = vrot.lane.b32.xlu0 %v305, 124
        %v320 = vpop.permute.xlu0 %319
        %321 = vrot.lane.b32.xlu0 %v306, 124
        %v322 = vpop.permute.xlu0 %321
        %324 = vst [vmem:[#allocation1] ss:$4 sm:$0xff] %v266
        %v325 = vld.sshfl [vmem:[#allocation1] sm:$0xff pattern:$0x73625140]
        %v327 = vld.sshfl [vmem:[#allocation1 + $0x8] sm:$0xff pattern:$0x73625140]
        %v329 = vld.sshfl [vmem:[#allocation1 + $0x10] sm:$0xff pattern:$0x73625140]
        %331 = vrot.lane.b32.xlu0 %v325, 127
        %v332 = vpop.permute.xlu0 %331
        %333 = vrot.lane.b32.xlu0 %v327, 127
        %v334 = vpop.permute.xlu0 %333
        %335 = vrot.lane.b32.xlu0 %v329, 127
        %v336 = vpop.permute.xlu0 %335
        %vm337 = vcmask 1039360
        %v338 = vsel %vm337, %v332, %v334
        %v339 = vsel %vm337, %v334, %v336
        %vm340 = vcmask 31744
        %v342 = vsel %vm340, %v308, 0
        %v345 = vsel %vm340, %v310, 0
        %v348 = vsel %vm340, %v312, 0
        %v351 = vsel %vm340, %v314, 0
        %v354 = vsel %vm340, %v316, 0
        %v357 = vsel %vm340, %v318, 0
        %v360 = vsel %vm340, %v320, 0
        %v363 = vsel %vm340, %v322, 0
        %vm365 = vcmask 1041408
        %v367 = vsel %vm365, %v338, 0
        %v370 = vsel %vm365, %v339, 0
        %v373 = vsel %vm365, %v336, 0
        %375 = vmatpush.bf16.msra.mxu0 0
        %376 = vmatpush.bf16.msra.mxu0 0
        %377 = vmatpush.bf16.msra.mxu0 0
        %378 = vmatpush.bf16.msra.mxu0 0
        %379 = vmatpush.bf16.msra.mxu0 0
        %380 = vmatpush.bf16.msra.mxu0 0
        %381 = vmatpush.bf16.msra.mxu0 0
        %382 = vmatpush.bf16.msra.mxu0 %v367
        %383 = vmatmul.bf16.gmra.mxu0 %v342
        %v384 = vpop.f32.mrf.mxu0
        %v385 = vadd.f32 0.0, %v384
        %v386 = vpop.f32.mrf.mxu0
        %v387 = vadd.f32 0.0, %v386
        %388 = vmatmul.bf16.gmra.mxu0 %v345
        %v389 = vpop.f32.mrf.mxu0
        %v390 = vadd.f32 0.0, %v389
        %v391 = vpop.f32.mrf.mxu0
        %v392 = vadd.f32 0.0, %v391
        %393 = vmatmul.bf16.gmra.mxu0 %v348
        %v394 = vpop.f32.mrf.mxu0
        %v395 = vadd.f32 0.0, %v394
        %v396 = vpop.f32.mrf.mxu0
        %v397 = vadd.f32 0.0, %v396
        %398 = vmatmul.bf16.gmra.mxu0 %v351
        %v399 = vpop.f32.mrf.mxu0
        %v400 = vadd.f32 0.0, %v399
        %v401 = vpop.f32.mrf.mxu0
        %v402 = vadd.f32 0.0, %v401
        %403 = vmatmul.bf16.gmra.mxu0 %v354
        %v404 = vpop.f32.mrf.mxu0
        %v405 = vadd.f32 0.0, %v404
        %v406 = vpop.f32.mrf.mxu0
        %v407 = vadd.f32 0.0, %v406
        %408 = vmatmul.bf16.gmra.mxu0 %v357
        %v409 = vpop.f32.mrf.mxu0
        %v410 = vadd.f32 0.0, %v409
        %v411 = vpop.f32.mrf.mxu0
        %v412 = vadd.f32 0.0, %v411
        %413 = vmatmul.bf16.gmra.mxu0 %v360
        %v414 = vpop.f32.mrf.mxu0
        %v415 = vadd.f32 0.0, %v414
        %v416 = vpop.f32.mrf.mxu0
        %v417 = vadd.f32 0.0, %v416
        %418 = vmatmul.bf16.gmra.mxu0 %v363
        %v419 = vpop.f32.mrf.mxu0
        %v420 = vadd.f32 0.0, %v419
        %v421 = vpop.f32.mrf.mxu0
        %v422 = vadd.f32 0.0, %v421
        %423 = vdwg.mxu0
        %424 = vmatpush.bf16.msra.mxu0 0
        %425 = vmatpush.bf16.msra.mxu0 0
        %426 = vmatpush.bf16.msra.mxu0 0
        %427 = vmatpush.bf16.msra.mxu0 0
        %428 = vmatpush.bf16.msra.mxu0 0
        %429 = vmatpush.bf16.msra.mxu0 0
        %430 = vmatpush.bf16.msra.mxu0 0
        %431 = vmatpush.bf16.msra.mxu0 %v370
        %432 = vmatmul.bf16.gmra.mxu0 %v342
        %v433 = vpop.f32.mrf.mxu0
        %v434 = vadd.f32 0.0, %v433
        %v435 = vpop.f32.mrf.mxu0
        %v436 = vadd.f32 0.0, %v435
        %437 = vmatmul.bf16.gmra.mxu0 %v345
        %v438 = vpop.f32.mrf.mxu0
        %v439 = vadd.f32 0.0, %v438
        %v440 = vpop.f32.mrf.mxu0
        %v441 = vadd.f32 0.0, %v440
        %442 = vmatmul.bf16.gmra.mxu0 %v348
        %v443 = vpop.f32.mrf.mxu0
        %v444 = vadd.f32 0.0, %v443
        %v445 = vpop.f32.mrf.mxu0
        %v446 = vadd.f32 0.0, %v445
        %447 = vmatmul.bf16.gmra.mxu0 %v351
        %v448 = vpop.f32.mrf.mxu0
        %v449 = vadd.f32 0.0, %v448
        %v450 = vpop.f32.mrf.mxu0
        %v451 = vadd.f32 0.0, %v450
        %452 = vmatmul.bf16.gmra.mxu0 %v354
        %v453 = vpop.f32.mrf.mxu0
        %v454 = vadd.f32 0.0, %v453
        %v455 = vpop.f32.mrf.mxu0
        %v456 = vadd.f32 0.0, %v455
        %457 = vmatmul.bf16.gmra.mxu0 %v357
        %v458 = vpop.f32.mrf.mxu0
        %v459 = vadd.f32 0.0, %v458
        %v460 = vpop.f32.mrf.mxu0
        %v461 = vadd.f32 0.0, %v460
        %462 = vmatmul.bf16.gmra.mxu0 %v360
        %v463 = vpop.f32.mrf.mxu0
        %v464 = vadd.f32 0.0, %v463
        %v465 = vpop.f32.mrf.mxu0
        %v466 = vadd.f32 0.0, %v465
        %467 = vmatmul.bf16.gmra.mxu0 %v363
        %v468 = vpop.f32.mrf.mxu0
        %v469 = vadd.f32 0.0, %v468
        %v470 = vpop.f32.mrf.mxu0
        %v471 = vadd.f32 0.0, %v470
        %472 = vdwg.mxu0
        %473 = vmatpush.bf16.msra.mxu0 0
        %474 = vmatpush.bf16.msra.mxu0 0
        %475 = vmatpush.bf16.msra.mxu0 0
        %476 = vmatpush.bf16.msra.mxu0 0
        %477 = vmatpush.bf16.msra.mxu0 0
        %478 = vmatpush.bf16.msra.mxu0 0
        %479 = vmatpush.bf16.msra.mxu0 0
        %480 = vmatpush.bf16.msra.mxu0 %v373
        %481 = vmatmul.bf16.gmra.mxu0 %v342
        %v482 = vpop.f32.mrf.mxu0
        %v483 = vadd.f32 0.0, %v482
        %v484 = vpop.f32.mrf.mxu0
        %v485 = vadd.f32 0.0, %v484
        %486 = vmatmul.bf16.gmra.mxu0 %v345
        %v487 = vpop.f32.mrf.mxu0
        %v488 = vadd.f32 0.0, %v487
        %v489 = vpop.f32.mrf.mxu0
        %v490 = vadd.f32 0.0, %v489
        %491 = vmatmul.bf16.gmra.mxu0 %v348
        %v492 = vpop.f32.mrf.mxu0
        %v493 = vadd.f32 0.0, %v492
        %v494 = vpop.f32.mrf.mxu0
        %v495 = vadd.f32 0.0, %v494
        %496 = vmatmul.bf16.gmra.mxu0 %v351
        %v497 = vpop.f32.mrf.mxu0
        %v498 = vadd.f32 0.0, %v497
        %v499 = vpop.f32.mrf.mxu0
        %v500 = vadd.f32 0.0, %v499
        %501 = vmatmul.bf16.gmra.mxu0 %v354
        %v502 = vpop.f32.mrf.mxu0
        %v503 = vadd.f32 0.0, %v502
        %v504 = vpop.f32.mrf.mxu0
        %v505 = vadd.f32 0.0, %v504
        %506 = vmatmul.bf16.gmra.mxu0 %v357
        %v507 = vpop.f32.mrf.mxu0
        %v508 = vadd.f32 0.0, %v507
        %v509 = vpop.f32.mrf.mxu0
        %v510 = vadd.f32 0.0, %v509
        %511 = vmatmul.bf16.gmra.mxu0 %v360
        %v512 = vpop.f32.mrf.mxu0
        %v513 = vadd.f32 0.0, %v512
        %v514 = vpop.f32.mrf.mxu0
        %v515 = vadd.f32 0.0, %v514
        %516 = vmatmul.bf16.gmra.mxu0 %v363
        %v517 = vpop.f32.mrf.mxu0
        %v518 = vadd.f32 0.0, %v517
        %v519 = vpop.f32.mrf.mxu0
        %v520 = vadd.f32 0.0, %v519
        %521 = vdwg.mxu0
        %522 = vst [vmem:[#allocation1] ss:$4 sm:$0xff] %v266
        %v523 = vld.sshfl [vmem:[#allocation1] sm:$0xff pattern:$0x73625140]
        %v524 = vld.sshfl [vmem:[#allocation1 + $0x8] sm:$0xff pattern:$0x73625140]
        %v525 = vld.sshfl [vmem:[#allocation1 + $0x10] sm:$0xff pattern:$0x73625140]
        %v527 = vsel %vm340, %v299, 0
        %v530 = vsel %vm340, %v300, 0
        %v533 = vsel %vm340, %v301, 0
        %v536 = vsel %vm340, %v302, 0
        %v539 = vsel %vm340, %v303, 0
        %v542 = vsel %vm340, %v304, 0
        %v545 = vsel %vm340, %v305, 0
        %v548 = vsel %vm340, %v306, 0
        %v550 = vsel %vm365, %v523, 0
        %v552 = vsel %vm365, %v524, 0
        %v554 = vsel %vm365, %v525, 0
        %556 = vmatpush.bf16.msra.mxu0 0
        %557 = vmatpush.bf16.msra.mxu0 0
        %558 = vmatpush.bf16.msra.mxu0 0
        %559 = vmatpush.bf16.msra.mxu0 0
        %560 = vmatpush.bf16.msra.mxu0 0
        %561 = vmatpush.bf16.msra.mxu0 0
        %562 = vmatpush.bf16.msra.mxu0 0
        %563 = vmatpush.bf16.msra.mxu0 %v550
        %564 = vmatmul.bf16.gmra.mxu0 %v527
        %v565 = vpop.f32.mrf.mxu0
        %v566 = vadd.f32 %v385, %v565
        %v567 = vpop.f32.mrf.mxu0
        %v568 = vadd.f32 %v387, %v567
        %569 = vmatmul.bf16.gmra.mxu0 %v530
        %v570 = vpop.f32.mrf.mxu0
        %v571 = vadd.f32 %v390, %v570
        %v572 = vpop.f32.mrf.mxu0
        %v573 = vadd.f32 %v392, %v572
        %574 = vmatmul.bf16.gmra.mxu0 %v533
        %v575 = vpop.f32.mrf.mxu0
        %v576 = vadd.f32 %v395, %v575
        %v577 = vpop.f32.mrf.mxu0
        %v578 = vadd.f32 %v397, %v577
        %579 = vmatmul.bf16.gmra.mxu0 %v536
        %v580 = vpop.f32.mrf.mxu0
        %v581 = vadd.f32 %v400, %v580
        %v582 = vpop.f32.mrf.mxu0
        %v583 = vadd.f32 %v402, %v582
        %584 = vmatmul.bf16.gmra.mxu0 %v539
        %v585 = vpop.f32.mrf.mxu0
        %v586 = vadd.f32 %v405, %v585
        %v587 = vpop.f32.mrf.mxu0
        %v588 = vadd.f32 %v407, %v587
        %589 = vmatmul.bf16.gmra.mxu0 %v542
        %v590 = vpop.f32.mrf.mxu0
        %v591 = vadd.f32 %v410, %v590
        %v592 = vpop.f32.mrf.mxu0
        %v593 = vadd.f32 %v412, %v592
        %594 = vmatmul.bf16.gmra.mxu0 %v545
        %v595 = vpop.f32.mrf.mxu0
        %v596 = vadd.f32 %v415, %v595
        %v597 = vpop.f32.mrf.mxu0
        %v598 = vadd.f32 %v417, %v597
        %599 = vmatmul.bf16.gmra.mxu0 %v548
        %v600 = vpop.f32.mrf.mxu0
        %v601 = vadd.f32 %v420, %v600
        %v602 = vpop.f32.mrf.mxu0
        %v603 = vadd.f32 %v422, %v602
        %604 = vdwg.mxu0
        %605 = vmatpush.bf16.msra.mxu0 0
        %606 = vmatpush.bf16.msra.mxu0 0
        %607 = vmatpush.bf16.msra.mxu0 0
        %608 = vmatpush.bf16.msra.mxu0 0
        %609 = vmatpush.bf16.msra.mxu0 0
        %610 = vmatpush.bf16.msra.mxu0 0
        %611 = vmatpush.bf16.msra.mxu0 0
        %612 = vmatpush.bf16.msra.mxu0 %v552
        %613 = vmatmul.bf16.gmra.mxu0 %v527
        %v614 = vpop.f32.mrf.mxu0
        %v615 = vadd.f32 %v434, %v614
        %v616 = vpop.f32.mrf.mxu0
        %v617 = vadd.f32 %v436, %v616
        %618 = vmatmul.bf16.gmra.mxu0 %v530
        %v619 = vpop.f32.mrf.mxu0
        %v620 = vadd.f32 %v439, %v619
        %v621 = vpop.f32.mrf.mxu0
        %v622 = vadd.f32 %v441, %v621
        %623 = vmatmul.bf16.gmra.mxu0 %v533
        %v624 = vpop.f32.mrf.mxu0
        %v625 = vadd.f32 %v444, %v624
        %v626 = vpop.f32.mrf.mxu0
        %v627 = vadd.f32 %v446, %v626
        %628 = vmatmul.bf16.gmra.mxu0 %v536
        %v629 = vpop.f32.mrf.mxu0
        %v630 = vadd.f32 %v449, %v629
        %v631 = vpop.f32.mrf.mxu0
        %v632 = vadd.f32 %v451, %v631
        %633 = vmatmul.bf16.gmra.mxu0 %v539
        %v634 = vpop.f32.mrf.mxu0
        %v635 = vadd.f32 %v454, %v634
        %v636 = vpop.f32.mrf.mxu0
        %v637 = vadd.f32 %v456, %v636
        %638 = vmatmul.bf16.gmra.mxu0 %v542
        %v639 = vpop.f32.mrf.mxu0
        %v640 = vadd.f32 %v459, %v639
        %v641 = vpop.f32.mrf.mxu0
        %v642 = vadd.f32 %v461, %v641
        %643 = vmatmul.bf16.gmra.mxu0 %v545
        %v644 = vpop.f32.mrf.mxu0
        %v645 = vadd.f32 %v464, %v644
        %v646 = vpop.f32.mrf.mxu0
        %v647 = vadd.f32 %v466, %v646
        %648 = vmatmul.bf16.gmra.mxu0 %v548
        %v649 = vpop.f32.mrf.mxu0
        %v650 = vadd.f32 %v469, %v649
        %v651 = vpop.f32.mrf.mxu0
        %v652 = vadd.f32 %v471, %v651
        %653 = vdwg.mxu0
        %654 = vmatpush.bf16.msra.mxu0 0
        %655 = vmatpush.bf16.msra.mxu0 0
        %656 = vmatpush.bf16.msra.mxu0 0
        %657 = vmatpush.bf16.msra.mxu0 0
        %658 = vmatpush.bf16.msra.mxu0 0
        %659 = vmatpush.bf16.msra.mxu0 0
        %660 = vmatpush.bf16.msra.mxu0 0
        %661 = vmatpush.bf16.msra.mxu0 %v554
        %662 = vmatmul.bf16.gmra.mxu0 %v527
        %v663 = vpop.f32.mrf.mxu0
        %v664 = vadd.f32 %v483, %v663
        %v665 = vpop.f32.mrf.mxu0
        %v666 = vadd.f32 %v485, %v665
        %667 = vmatmul.bf16.gmra.mxu0 %v530
        %v668 = vpop.f32.mrf.mxu0
        %v669 = vadd.f32 %v488, %v668
        %v670 = vpop.f32.mrf.mxu0
        %v671 = vadd.f32 %v490, %v670
        %672 = vmatmul.bf16.gmra.mxu0 %v533
        %v673 = vpop.f32.mrf.mxu0
        %v674 = vadd.f32 %v493, %v673
        %v675 = vpop.f32.mrf.mxu0
        %v676 = vadd.f32 %v495, %v675
        %677 = vmatmul.bf16.gmra.mxu0 %v536
        %v678 = vpop.f32.mrf.mxu0
        %v679 = vadd.f32 %v498, %v678
        %v680 = vpop.f32.mrf.mxu0
        %v681 = vadd.f32 %v500, %v680
        %682 = vmatmul.bf16.gmra.mxu0 %v539
        %v683 = vpop.f32.mrf.mxu0
        %v684 = vadd.f32 %v503, %v683
        %v685 = vpop.f32.mrf.mxu0
        %v686 = vadd.f32 %v505, %v685
        %687 = vmatmul.bf16.gmra.mxu0 %v542
        %v688 = vpop.f32.mrf.mxu0
        %v689 = vadd.f32 %v508, %v688
        %v690 = vpop.f32.mrf.mxu0
        %v691 = vadd.f32 %v510, %v690
        %692 = vmatmul.bf16.gmra.mxu0 %v545
        %v693 = vpop.f32.mrf.mxu0
        %v694 = vadd.f32 %v513, %v693
        %v695 = vpop.f32.mrf.mxu0
        %v696 = vadd.f32 %v515, %v695
        %697 = vmatmul.bf16.gmra.mxu0 %v548
        %v698 = vpop.f32.mrf.mxu0
        %v699 = vadd.f32 %v518, %v698
        %v700 = vpop.f32.mrf.mxu0
        %v701 = vadd.f32 %v520, %v700
        %702 = vdwg.mxu0
        %v703 = vld [vmem:[%s1] sm:$0xf]
        %v704 = vld [vmem:[%s1 + $0x4] sm:$0xf]
        %v705 = vld [vmem:[%s1 + $0x8] sm:$0xf]
        %v706 = vld [vmem:[%s1 + $0xc] sm:$0xf]
        %v707 = vld [vmem:[%s1 + $0x10] sm:$0xf]
        %v708 = vld [vmem:[%s1 + $0x14] sm:$0xf]
        %v709 = vld [vmem:[%s1 + $0x18] sm:$0xf]
        %v710 = vld [vmem:[%s1 + $0x1c] sm:$0xf]
        %v711 = vld [vmem:[%s1 + $0x20] sm:$0xf]
        %v712 = vld [vmem:[%s1 + $0x24] sm:$0xf]
        %v713 = vld [vmem:[%s1 + $0x28] sm:$0xf]
        %v714 = vld [vmem:[%s1 + $0x2c] sm:$0xf]
        %v715 = vld [vmem:[%s1 + $0x30] sm:$0xf]
        %v716 = vld [vmem:[%s1 + $0x34] sm:$0xf]
        %v717 = vld [vmem:[%s1 + $0x38] sm:$0xf]
        %v718 = vld [vmem:[%s1 + $0x3c] sm:$0xf]
        %v719 = vld [vmem:[%s248] sm:$0x3f]
        %v736 = vunpack.c.l.b16 %v703
        %v737 = vunpack.c.l.b16 %v704
        %v738 = vunpack.c.l.b16 %v705
        %v739 = vunpack.c.l.b16 %v706
        %v740 = vunpack.c.l.b16 %v707
        %v741 = vunpack.c.l.b16 %v708
        %v742 = vunpack.c.l.b16 %v709
        %v743 = vunpack.c.l.b16 %v710
        %v744 = vunpack.c.l.b16 %v711
        %v745 = vunpack.c.l.b16 %v712
        %v746 = vunpack.c.l.b16 %v713
        %v747 = vunpack.c.l.b16 %v714
        %v748 = vunpack.c.l.b16 %v715
        %v749 = vunpack.c.l.b16 %v716
        %v750 = vunpack.c.l.b16 %v717
        %v751 = vunpack.c.l.b16 %v718
        %v752 = vpack.c.b16 %v737, %v736
        %v753 = vpack.c.b16 %v739, %v738
        %v754 = vpack.c.b16 %v741, %v740
        %v755 = vpack.c.b16 %v743, %v742
        %v756 = vpack.c.b16 %v745, %v744
        %v757 = vpack.c.b16 %v747, %v746
        %v758 = vpack.c.b16 %v749, %v748
        %v759 = vpack.c.b16 %v751, %v750
        %760 = vrot.lane.b32.xlu0 %v752, 120
        %v761 = vpop.permute.xlu0 %760
        %762 = vrot.lane.b32.xlu0 %v753, 120
        %v763 = vpop.permute.xlu0 %762
        %764 = vrot.lane.b32.xlu0 %v754, 120
        %v765 = vpop.permute.xlu0 %764
        %766 = vrot.lane.b32.xlu0 %v755, 120
        %v767 = vpop.permute.xlu0 %766
        %768 = vrot.lane.b32.xlu0 %v756, 120
        %v769 = vpop.permute.xlu0 %768
        %770 = vrot.lane.b32.xlu0 %v757, 120
        %v771 = vpop.permute.xlu0 %770
        %772 = vrot.lane.b32.xlu0 %v758, 120
        %v773 = vpop.permute.xlu0 %772
        %774 = vrot.lane.b32.xlu0 %v759, 120
        %v775 = vpop.permute.xlu0 %774
        %777 = vst [vmem:[#allocation1] ss:$4 sm:$0xff] %v719
        %v778 = vld.sshfl [vmem:[#allocation1] sm:$0xff pattern:$0x73625140]
        %v780 = vld.sshfl [vmem:[#allocation1 + $0x8] sm:$0xff pattern:$0x73625140]
        %v782 = vld.sshfl [vmem:[#allocation1 + $0x10] sm:$0xff pattern:$0x73625140]
        %784 = vrot.lane.b32.xlu0 %v778, 126
        %v785 = vpop.permute.xlu0 %784
        %786 = vrot.lane.b32.xlu0 %v780, 126
        %v787 = vpop.permute.xlu0 %786
        %788 = vrot.lane.b32.xlu0 %v782, 126
        %v789 = vpop.permute.xlu0 %788
        %vm790 = vcmask 1031168
        %v791 = vsel %vm790, %v785, %v787
        %v792 = vsel %vm790, %v787, %v789
        %v794 = vsel %vm340, %v761, 0
        %v797 = vsel %vm340, %v763, 0
        %v800 = vsel %vm340, %v765, 0
        %v803 = vsel %vm340, %v767, 0
        %v806 = vsel %vm340, %v769, 0
        %v809 = vsel %vm340, %v771, 0
        %v812 = vsel %vm340, %v773, 0
        %v815 = vsel %vm340, %v775, 0
        %v818 = vsel %vm365, %v791, 0
        %v821 = vsel %vm365, %v792, 0
        %v824 = vsel %vm365, %v789, 0
        %826 = vmatpush.bf16.msra.mxu0 0
        %827 = vmatpush.bf16.msra.mxu0 0
        %828 = vmatpush.bf16.msra.mxu0 0
        %829 = vmatpush.bf16.msra.mxu0 0
        %830 = vmatpush.bf16.msra.mxu0 0
        %831 = vmatpush.bf16.msra.mxu0 0
        %832 = vmatpush.bf16.msra.mxu0 0
        %833 = vmatpush.bf16.msra.mxu0 %v818
        %834 = vmatmul.bf16.gmra.mxu0 %v794
        %v835 = vpop.f32.mrf.mxu0
        %v836 = vadd.f32 0.0, %v835
        %v837 = vpop.f32.mrf.mxu0
        %v838 = vadd.f32 0.0, %v837
        %839 = vmatmul.bf16.gmra.mxu0 %v797
        %v840 = vpop.f32.mrf.mxu0
        %v841 = vadd.f32 0.0, %v840
        %v842 = vpop.f32.mrf.mxu0
        %v843 = vadd.f32 0.0, %v842
        %844 = vmatmul.bf16.gmra.mxu0 %v800
        %v845 = vpop.f32.mrf.mxu0
        %v846 = vadd.f32 0.0, %v845
        %v847 = vpop.f32.mrf.mxu0
        %v848 = vadd.f32 0.0, %v847
        %849 = vmatmul.bf16.gmra.mxu0 %v803
        %v850 = vpop.f32.mrf.mxu0
        %v851 = vadd.f32 0.0, %v850
        %v852 = vpop.f32.mrf.mxu0
        %v853 = vadd.f32 0.0, %v852
        %854 = vmatmul.bf16.gmra.mxu0 %v806
        %v855 = vpop.f32.mrf.mxu0
        %v856 = vadd.f32 0.0, %v855
        %v857 = vpop.f32.mrf.mxu0
        %v858 = vadd.f32 0.0, %v857
        %859 = vmatmul.bf16.gmra.mxu0 %v809
        %v860 = vpop.f32.mrf.mxu0
        %v861 = vadd.f32 0.0, %v860
        %v862 = vpop.f32.mrf.mxu0
        %v863 = vadd.f32 0.0, %v862
        %864 = vmatmul.bf16.gmra.mxu0 %v812
        %v865 = vpop.f32.mrf.mxu0
        %v866 = vadd.f32 0.0, %v865
        %v867 = vpop.f32.mrf.mxu0
        %v868 = vadd.f32 0.0, %v867
        %869 = vmatmul.bf16.gmra.mxu0 %v815
        %v870 = vpop.f32.mrf.mxu0
        %v871 = vadd.f32 0.0, %v870
        %v872 = vpop.f32.mrf.mxu0
        %v873 = vadd.f32 0.0, %v872
        %874 = vdwg.mxu0
        %875 = vmatpush.bf16.msra.mxu0 0
        %876 = vmatpush.bf16.msra.mxu0 0
        %877 = vmatpush.bf16.msra.mxu0 0
        %878 = vmatpush.bf16.msra.mxu0 0
        %879 = vmatpush.bf16.msra.mxu0 0
        %880 = vmatpush.bf16.msra.mxu0 0
        %881 = vmatpush.bf16.msra.mxu0 0
        %882 = vmatpush.bf16.msra.mxu0 %v821
        %883 = vmatmul.bf16.gmra.mxu0 %v794
        %v884 = vpop.f32.mrf.mxu0
        %v885 = vadd.f32 0.0, %v884
        %v886 = vpop.f32.mrf.mxu0
        %v887 = vadd.f32 0.0, %v886
        %888 = vmatmul.bf16.gmra.mxu0 %v797
        %v889 = vpop.f32.mrf.mxu0
        %v890 = vadd.f32 0.0, %v889
        %v891 = vpop.f32.mrf.mxu0
        %v892 = vadd.f32 0.0, %v891
        %893 = vmatmul.bf16.gmra.mxu0 %v800
        %v894 = vpop.f32.mrf.mxu0
        %v895 = vadd.f32 0.0, %v894
        %v896 = vpop.f32.mrf.mxu0
        %v897 = vadd.f32 0.0, %v896
        %898 = vmatmul.bf16.gmra.mxu0 %v803
        %v899 = vpop.f32.mrf.mxu0
        %v900 = vadd.f32 0.0, %v899
        %v901 = vpop.f32.mrf.mxu0
        %v902 = vadd.f32 0.0, %v901
        %903 = vmatmul.bf16.gmra.mxu0 %v806
        %v904 = vpop.f32.mrf.mxu0
        %v905 = vadd.f32 0.0, %v904
        %v906 = vpop.f32.mrf.mxu0
        %v907 = vadd.f32 0.0, %v906
        %908 = vmatmul.bf16.gmra.mxu0 %v809
        %v909 = vpop.f32.mrf.mxu0
        %v910 = vadd.f32 0.0, %v909
        %v911 = vpop.f32.mrf.mxu0
        %v912 = vadd.f32 0.0, %v911
        %913 = vmatmul.bf16.gmra.mxu0 %v812
        %v914 = vpop.f32.mrf.mxu0
        %v915 = vadd.f32 0.0, %v914
        %v916 = vpop.f32.mrf.mxu0
        %v917 = vadd.f32 0.0, %v916
        %918 = vmatmul.bf16.gmra.mxu0 %v815
        %v919 = vpop.f32.mrf.mxu0
        %v920 = vadd.f32 0.0, %v919
        %v921 = vpop.f32.mrf.mxu0
        %v922 = vadd.f32 0.0, %v921
        %923 = vdwg.mxu0
        %924 = vmatpush.bf16.msra.mxu0 0
        %925 = vmatpush.bf16.msra.mxu0 0
        %926 = vmatpush.bf16.msra.mxu0 0
        %927 = vmatpush.bf16.msra.mxu0 0
        %928 = vmatpush.bf16.msra.mxu0 0
        %929 = vmatpush.bf16.msra.mxu0 0
        %930 = vmatpush.bf16.msra.mxu0 0
        %931 = vmatpush.bf16.msra.mxu0 %v824
        %932 = vmatmul.bf16.gmra.mxu0 %v794
        %v933 = vpop.f32.mrf.mxu0
        %v934 = vadd.f32 0.0, %v933
        %v935 = vpop.f32.mrf.mxu0
        %v936 = vadd.f32 0.0, %v935
        %937 = vmatmul.bf16.gmra.mxu0 %v797
        %v938 = vpop.f32.mrf.mxu0
        %v939 = vadd.f32 0.0, %v938
        %v940 = vpop.f32.mrf.mxu0
        %v941 = vadd.f32 0.0, %v940
        %942 = vmatmul.bf16.gmra.mxu0 %v800
        %v943 = vpop.f32.mrf.mxu0
        %v944 = vadd.f32 0.0, %v943
        %v945 = vpop.f32.mrf.mxu0
        %v946 = vadd.f32 0.0, %v945
        %947 = vmatmul.bf16.gmra.mxu0 %v803
        %v948 = vpop.f32.mrf.mxu0
        %v949 = vadd.f32 0.0, %v948
        %v950 = vpop.f32.mrf.mxu0
        %v951 = vadd.f32 0.0, %v950
        %952 = vmatmul.bf16.gmra.mxu0 %v806
        %v953 = vpop.f32.mrf.mxu0
        %v954 = vadd.f32 0.0, %v953
        %v955 = vpop.f32.mrf.mxu0
        %v956 = vadd.f32 0.0, %v955
        %957 = vmatmul.bf16.gmra.mxu0 %v809
        %v958 = vpop.f32.mrf.mxu0
        %v959 = vadd.f32 0.0, %v958
        %v960 = vpop.f32.mrf.mxu0
        %v961 = vadd.f32 0.0, %v960
        %962 = vmatmul.bf16.gmra.mxu0 %v812
        %v963 = vpop.f32.mrf.mxu0
        %v964 = vadd.f32 0.0, %v963
        %v965 = vpop.f32.mrf.mxu0
        %v966 = vadd.f32 0.0, %v965
        %967 = vmatmul.bf16.gmra.mxu0 %v815
        %v968 = vpop.f32.mrf.mxu0
        %v969 = vadd.f32 0.0, %v968
        %v970 = vpop.f32.mrf.mxu0
        %v971 = vadd.f32 0.0, %v970
        %972 = vdwg.mxu0
        %v973 = vadd.f32 %v566, %v836
        %v974 = vadd.f32 %v615, %v885
        %v975 = vadd.f32 %v664, %v934
        %v976 = vadd.f32 %v568, %v838
        %v977 = vadd.f32 %v617, %v887
        %v978 = vadd.f32 %v666, %v936
        %v979 = vadd.f32 %v571, %v841
        %v980 = vadd.f32 %v620, %v890
        %v981 = vadd.f32 %v669, %v939
        %v982 = vadd.f32 %v573, %v843
        %v983 = vadd.f32 %v622, %v892
        %v984 = vadd.f32 %v671, %v941
        %v985 = vadd.f32 %v576, %v846
        %v986 = vadd.f32 %v625, %v895
        %v987 = vadd.f32 %v674, %v944
        %v988 = vadd.f32 %v578, %v848
        %v989 = vadd.f32 %v627, %v897
        %v990 = vadd.f32 %v676, %v946
        %v991 = vadd.f32 %v581, %v851
        %v992 = vadd.f32 %v630, %v900
        %v993 = vadd.f32 %v679, %v949
        %v994 = vadd.f32 %v583, %v853
        %v995 = vadd.f32 %v632, %v902
        %v996 = vadd.f32 %v681, %v951
        %v997 = vadd.f32 %v586, %v856
        %v998 = vadd.f32 %v635, %v905
        %v999 = vadd.f32 %v684, %v954
        %v1000 = vadd.f32 %v588, %v858
        %v1001 = vadd.f32 %v637, %v907
        %v1002 = vadd.f32 %v686, %v956
        %v1003 = vadd.f32 %v591, %v861
        %v1004 = vadd.f32 %v640, %v910
        %v1005 = vadd.f32 %v689, %v959
        %v1006 = vadd.f32 %v593, %v863
        %v1007 = vadd.f32 %v642, %v912
        %v1008 = vadd.f32 %v691, %v961
        %v1009 = vadd.f32 %v596, %v866
        %v1010 = vadd.f32 %v645, %v915
        %v1011 = vadd.f32 %v694, %v964
        %v1012 = vadd.f32 %v598, %v868
        %v1013 = vadd.f32 %v647, %v917
        %v1014 = vadd.f32 %v696, %v966
        %v1015 = vadd.f32 %v601, %v871
        %v1016 = vadd.f32 %v650, %v920
        %v1017 = vadd.f32 %v699, %v969
        %v1018 = vadd.f32 %v603, %v873
        %v1019 = vadd.f32 %v652, %v922
        %v1020 = vadd.f32 %v701, %v971
        %v1021 = vld [vmem:[%s1] sm:$0xf]
        %v1022 = vld [vmem:[%s1 + $0x4] sm:$0xf]
        %v1023 = vld [vmem:[%s1 + $0x8] sm:$0xf]
        %v1024 = vld [vmem:[%s1 + $0xc] sm:$0xf]
        %v1025 = vld [vmem:[%s1 + $0x10] sm:$0xf]
        %v1026 = vld [vmem:[%s1 + $0x14] sm:$0xf]
        %v1027 = vld [vmem:[%s1 + $0x18] sm:$0xf]
        %v1028 = vld [vmem:[%s1 + $0x1c] sm:$0xf]
        %v1029 = vld [vmem:[%s1 + $0x20] sm:$0xf]
        %v1030 = vld [vmem:[%s1 + $0x24] sm:$0xf]
        %v1031 = vld [vmem:[%s1 + $0x28] sm:$0xf]
        %v1032 = vld [vmem:[%s1 + $0x2c] sm:$0xf]
        %v1033 = vld [vmem:[%s1 + $0x30] sm:$0xf]
        %v1034 = vld [vmem:[%s1 + $0x34] sm:$0xf]
        %v1035 = vld [vmem:[%s1 + $0x38] sm:$0xf]
        %v1036 = vld [vmem:[%s1 + $0x3c] sm:$0xf]
        %v1037 = vld [vmem:[%s248] sm:$0x3f]
        %v1054 = vunpack.c.l.b16 %v1021
        %v1055 = vunpack.c.l.b16 %v1022
        %v1056 = vunpack.c.l.b16 %v1023
        %v1057 = vunpack.c.l.b16 %v1024
        %v1058 = vunpack.c.l.b16 %v1025
        %v1059 = vunpack.c.l.b16 %v1026
        %v1060 = vunpack.c.l.b16 %v1027
        %v1061 = vunpack.c.l.b16 %v1028
        %v1062 = vunpack.c.l.b16 %v1029
        %v1063 = vunpack.c.l.b16 %v1030
        %v1064 = vunpack.c.l.b16 %v1031
        %v1065 = vunpack.c.l.b16 %v1032
        %v1066 = vunpack.c.l.b16 %v1033
        %v1067 = vunpack.c.l.b16 %v1034
        %v1068 = vunpack.c.l.b16 %v1035
        %v1069 = vunpack.c.l.b16 %v1036
        %v1070 = vpack.c.b16 %v1055, %v1054
        %v1071 = vpack.c.b16 %v1057, %v1056
        %v1072 = vpack.c.b16 %v1059, %v1058
        %v1073 = vpack.c.b16 %v1061, %v1060
        %v1074 = vpack.c.b16 %v1063, %v1062
        %v1075 = vpack.c.b16 %v1065, %v1064
        %v1076 = vpack.c.b16 %v1067, %v1066
        %v1077 = vpack.c.b16 %v1069, %v1068
        %1078 = vrot.lane.b32.xlu0 %v1070, 116
        %v1079 = vpop.permute.xlu0 %1078
        %1080 = vrot.lane.b32.xlu0 %v1071, 116
        %v1081 = vpop.permute.xlu0 %1080
        %1082 = vrot.lane.b32.xlu0 %v1072, 116
        %v1083 = vpop.permute.xlu0 %1082
        %1084 = vrot.lane.b32.xlu0 %v1073, 116
        %v1085 = vpop.permute.xlu0 %1084
        %1086 = vrot.lane.b32.xlu0 %v1074, 116
        %v1087 = vpop.permute.xlu0 %1086
        %1088 = vrot.lane.b32.xlu0 %v1075, 116
        %v1089 = vpop.permute.xlu0 %1088
        %1090 = vrot.lane.b32.xlu0 %v1076, 116
        %v1091 = vpop.permute.xlu0 %1090
        %1092 = vrot.lane.b32.xlu0 %v1077, 116
        %v1093 = vpop.permute.xlu0 %1092
        %1095 = vst [vmem:[#allocation1] ss:$4 sm:$0xff] %v1037
        %v1096 = vld.sshfl [vmem:[#allocation1] sm:$0xff pattern:$0x73625140]
        %v1098 = vld.sshfl [vmem:[#allocation1 + $0x8] sm:$0xff pattern:$0x73625140]
        %v1100 = vld.sshfl [vmem:[#allocation1 + $0x10] sm:$0xff pattern:$0x73625140]
        %1102 = vrot.lane.b32.xlu0 %v1096, 110
        %v1103 = vpop.permute.xlu0 %1102
        %1104 = vrot.lane.b32.xlu0 %v1098, 110
        %v1105 = vpop.permute.xlu0 %1104
        %1106 = vrot.lane.b32.xlu0 %v1100, 110
        %v1107 = vpop.permute.xlu0 %1106
        %vm1108 = vcmask 900096
        %v1109 = vsel %vm1108, %v1103, %v1105
        %v1110 = vsel %vm1108, %v1105, %v1107
        %v1112 = vsel %vm340, %v1079, 0
        %v1115 = vsel %vm340, %v1081, 0
        %v1118 = vsel %vm340, %v1083, 0
        %v1121 = vsel %vm340, %v1085, 0
        %v1124 = vsel %vm340, %v1087, 0
        %v1127 = vsel %vm340, %v1089, 0
        %v1130 = vsel %vm340, %v1091, 0
        %v1133 = vsel %vm340, %v1093, 0
        %v1136 = vsel %vm365, %v1109, 0
        %v1139 = vsel %vm365, %v1110, 0
        %v1142 = vsel %vm365, %v1107, 0
        %1144 = vmatpush.bf16.msra.mxu0 0
        %1145 = vmatpush.bf16.msra.mxu0 0
        %1146 = vmatpush.bf16.msra.mxu0 0
        %1147 = vmatpush.bf16.msra.mxu0 0
        %1148 = vmatpush.bf16.msra.mxu0 0
        %1149 = vmatpush.bf16.msra.mxu0 0
        %1150 = vmatpush.bf16.msra.mxu0 0
        %1151 = vmatpush.bf16.msra.mxu0 %v1136
        %1152 = vmatmul.bf16.gmra.mxu0 %v1112
        %v1153 = vpop.f32.mrf.mxu0
        %v1154 = vadd.f32 0.0, %v1153
        %v1155 = vpop.f32.mrf.mxu0
        %v1156 = vadd.f32 0.0, %v1155
        %1157 = vmatmul.bf16.gmra.mxu0 %v1115
        %v1158 = vpop.f32.mrf.mxu0
        %v1159 = vadd.f32 0.0, %v1158
        %v1160 = vpop.f32.mrf.mxu0
        %v1161 = vadd.f32 0.0, %v1160
        %1162 = vmatmul.bf16.gmra.mxu0 %v1118
        %v1163 = vpop.f32.mrf.mxu0
        %v1164 = vadd.f32 0.0, %v1163
        %v1165 = vpop.f32.mrf.mxu0
        %v1166 = vadd.f32 0.0, %v1165
        %1167 = vmatmul.bf16.gmra.mxu0 %v1121
        %v1168 = vpop.f32.mrf.mxu0
        %v1169 = vadd.f32 0.0, %v1168
        %v1170 = vpop.f32.mrf.mxu0
        %v1171 = vadd.f32 0.0, %v1170
        %1172 = vmatmul.bf16.gmra.mxu0 %v1124
        %v1173 = vpop.f32.mrf.mxu0
        %v1174 = vadd.f32 0.0, %v1173
        %v1175 = vpop.f32.mrf.mxu0
        %v1176 = vadd.f32 0.0, %v1175
        %1177 = vmatmul.bf16.gmra.mxu0 %v1127
        %v1178 = vpop.f32.mrf.mxu0
        %v1179 = vadd.f32 0.0, %v1178
        %v1180 = vpop.f32.mrf.mxu0
        %v1181 = vadd.f32 0.0, %v1180
        %1182 = vmatmul.bf16.gmra.mxu0 %v1130
        %v1183 = vpop.f32.mrf.mxu0
        %v1184 = vadd.f32 0.0, %v1183
        %v1185 = vpop.f32.mrf.mxu0
        %v1186 = vadd.f32 0.0, %v1185
        %1187 = vmatmul.bf16.gmra.mxu0 %v1133
        %v1188 = vpop.f32.mrf.mxu0
        %v1189 = vadd.f32 0.0, %v1188
        %v1190 = vpop.f32.mrf.mxu0
        %v1191 = vadd.f32 0.0, %v1190
        %1192 = vdwg.mxu0
        %1193 = vmatpush.bf16.msra.mxu0 0
        %1194 = vmatpush.bf16.msra.mxu0 0
        %1195 = vmatpush.bf16.msra.mxu0 0
        %1196 = vmatpush.bf16.msra.mxu0 0
        %1197 = vmatpush.bf16.msra.mxu0 0
        %1198 = vmatpush.bf16.msra.mxu0 0
        %1199 = vmatpush.bf16.msra.mxu0 0
        %1200 = vmatpush.bf16.msra.mxu0 %v1139
        %1201 = vmatmul.bf16.gmra.mxu0 %v1112
        %v1202 = vpop.f32.mrf.mxu0
        %v1203 = vadd.f32 0.0, %v1202
        %v1204 = vpop.f32.mrf.mxu0
        %v1205 = vadd.f32 0.0, %v1204
        %1206 = vmatmul.bf16.gmra.mxu0 %v1115
        %v1207 = vpop.f32.mrf.mxu0
        %v1208 = vadd.f32 0.0, %v1207
        %v1209 = vpop.f32.mrf.mxu0
        %v1210 = vadd.f32 0.0, %v1209
        %1211 = vmatmul.bf16.gmra.mxu0 %v1118
        %v1212 = vpop.f32.mrf.mxu0
        %v1213 = vadd.f32 0.0, %v1212
        %v1214 = vpop.f32.mrf.mxu0
        %v1215 = vadd.f32 0.0, %v1214
        %1216 = vmatmul.bf16.gmra.mxu0 %v1121
        %v1217 = vpop.f32.mrf.mxu0
        %v1218 = vadd.f32 0.0, %v1217
        %v1219 = vpop.f32.mrf.mxu0
        %v1220 = vadd.f32 0.0, %v1219
        %1221 = vmatmul.bf16.gmra.mxu0 %v1124
        %v1222 = vpop.f32.mrf.mxu0
        %v1223 = vadd.f32 0.0, %v1222
        %v1224 = vpop.f32.mrf.mxu0
        %v1225 = vadd.f32 0.0, %v1224
        %1226 = vmatmul.bf16.gmra.mxu0 %v1127
        %v1227 = vpop.f32.mrf.mxu0
        %v1228 = vadd.f32 0.0, %v1227
        %v1229 = vpop.f32.mrf.mxu0
        %v1230 = vadd.f32 0.0, %v1229
        %1231 = vmatmul.bf16.gmra.mxu0 %v1130
        %v1232 = vpop.f32.mrf.mxu0
        %v1233 = vadd.f32 0.0, %v1232
        %v1234 = vpop.f32.mrf.mxu0
        %v1235 = vadd.f32 0.0, %v1234
        %1236 = vmatmul.bf16.gmra.mxu0 %v1133
        %v1237 = vpop.f32.mrf.mxu0
        %v1238 = vadd.f32 0.0, %v1237
        %v1239 = vpop.f32.mrf.mxu0
        %v1240 = vadd.f32 0.0, %v1239
        %1241 = vdwg.mxu0
        %1242 = vmatpush.bf16.msra.mxu0 0
        %1243 = vmatpush.bf16.msra.mxu0 0
        %1244 = vmatpush.bf16.msra.mxu0 0
        %1245 = vmatpush.bf16.msra.mxu0 0
        %1246 = vmatpush.bf16.msra.mxu0 0
        %1247 = vmatpush.bf16.msra.mxu0 0
        %1248 = vmatpush.bf16.msra.mxu0 0
        %1249 = vmatpush.bf16.msra.mxu0 %v1142
        %1250 = vmatmul.bf16.gmra.mxu0 %v1112
        %v1251 = vpop.f32.mrf.mxu0
        %v1252 = vadd.f32 0.0, %v1251
        %v1253 = vpop.f32.mrf.mxu0
        %v1254 = vadd.f32 0.0, %v1253
        %1255 = vmatmul.bf16.gmra.mxu0 %v1115
        %v1256 = vpop.f32.mrf.mxu0
        %v1257 = vadd.f32 0.0, %v1256
        %v1258 = vpop.f32.mrf.mxu0
        %v1259 = vadd.f32 0.0, %v1258
        %1260 = vmatmul.bf16.gmra.mxu0 %v1118
        %v1261 = vpop.f32.mrf.mxu0
        %v1262 = vadd.f32 0.0, %v1261
        %v1263 = vpop.f32.mrf.mxu0
        %v1264 = vadd.f32 0.0, %v1263
        %1265 = vmatmul.bf16.gmra.mxu0 %v1121
        %v1266 = vpop.f32.mrf.mxu0
        %v1267 = vadd.f32 0.0, %v1266
        %v1268 = vpop.f32.mrf.mxu0
        %v1269 = vadd.f32 0.0, %v1268
        %1270 = vmatmul.bf16.gmra.mxu0 %v1124
        %v1271 = vpop.f32.mrf.mxu0
        %v1272 = vadd.f32 0.0, %v1271
        %v1273 = vpop.f32.mrf.mxu0
        %v1274 = vadd.f32 0.0, %v1273
        %1275 = vmatmul.bf16.gmra.mxu0 %v1127
        %v1276 = vpop.f32.mrf.mxu0
        %v1277 = vadd.f32 0.0, %v1276
        %v1278 = vpop.f32.mrf.mxu0
        %v1279 = vadd.f32 0.0, %v1278
        %1280 = vmatmul.bf16.gmra.mxu0 %v1130
        %v1281 = vpop.f32.mrf.mxu0
        %v1282 = vadd.f32 0.0, %v1281
        %v1283 = vpop.f32.mrf.mxu0
        %v1284 = vadd.f32 0.0, %v1283
        %1285 = vmatmul.bf16.gmra.mxu0 %v1133
        %v1286 = vpop.f32.mrf.mxu0
        %v1287 = vadd.f32 0.0, %v1286
        %v1288 = vpop.f32.mrf.mxu0
        %v1289 = vadd.f32 0.0, %v1288
        %1290 = vdwg.mxu0
        %v1291 = vadd.f32 %v973, %v1154
        %v1292 = vadd.f32 %v974, %v1203
        %v1293 = vadd.f32 %v975, %v1252
        %v1294 = vadd.f32 %v976, %v1156
        %v1295 = vadd.f32 %v977, %v1205
        %v1296 = vadd.f32 %v978, %v1254
        %v1297 = vadd.f32 %v979, %v1159
        %v1298 = vadd.f32 %v980, %v1208
        %v1299 = vadd.f32 %v981, %v1257
        %v1300 = vadd.f32 %v982, %v1161
        %v1301 = vadd.f32 %v983, %v1210
        %v1302 = vadd.f32 %v984, %v1259
        %v1303 = vadd.f32 %v985, %v1164
        %v1304 = vadd.f32 %v986, %v1213
        %v1305 = vadd.f32 %v987, %v1262
        %v1306 = vadd.f32 %v988, %v1166
        %v1307 = vadd.f32 %v989, %v1215
        %v1308 = vadd.f32 %v990, %v1264
        %v1309 = vadd.f32 %v991, %v1169
        %v1310 = vadd.f32 %v992, %v1218
        %v1311 = vadd.f32 %v993, %v1267
        %v1312 = vadd.f32 %v994, %v1171
        %v1313 = vadd.f32 %v995, %v1220
        %v1314 = vadd.f32 %v996, %v1269
        %v1315 = vadd.f32 %v997, %v1174
        %v1316 = vadd.f32 %v998, %v1223
        %v1317 = vadd.f32 %v999, %v1272
        %v1318 = vadd.f32 %v1000, %v1176
        %v1319 = vadd.f32 %v1001, %v1225
        %v1320 = vadd.f32 %v1002, %v1274
        %v1321 = vadd.f32 %v1003, %v1179
        %v1322 = vadd.f32 %v1004, %v1228
        %v1323 = vadd.f32 %v1005, %v1277
        %v1324 = vadd.f32 %v1006, %v1181
        %v1325 = vadd.f32 %v1007, %v1230
        %v1326 = vadd.f32 %v1008, %v1279
        %v1327 = vadd.f32 %v1009, %v1184
        %v1328 = vadd.f32 %v1010, %v1233
        %v1329 = vadd.f32 %v1011, %v1282
        %v1330 = vadd.f32 %v1012, %v1186
        %v1331 = vadd.f32 %v1013, %v1235
        %v1332 = vadd.f32 %v1014, %v1284
        %v1333 = vadd.f32 %v1015, %v1189
        %v1334 = vadd.f32 %v1016, %v1238
        %v1335 = vadd.f32 %v1017, %v1287
        %v1336 = vadd.f32 %v1018, %v1191
        %v1337 = vadd.f32 %v1019, %v1240
        %v1338 = vadd.f32 %v1020, %v1289
        %v1339 = vld [vmem:[%s1] sm:$0xf]
        %v1340 = vld [vmem:[%s1 + $0x4] sm:$0xf]
        %v1341 = vld [vmem:[%s1 + $0x8] sm:$0xf]
        %v1342 = vld [vmem:[%s1 + $0xc] sm:$0xf]
        %v1343 = vld [vmem:[%s1 + $0x10] sm:$0xf]
        %v1344 = vld [vmem:[%s1 + $0x14] sm:$0xf]
        %v1345 = vld [vmem:[%s1 + $0x18] sm:$0xf]
        %v1346 = vld [vmem:[%s1 + $0x1c] sm:$0xf]
        %v1347 = vld [vmem:[%s1 + $0x20] sm:$0xf]
        %v1348 = vld [vmem:[%s1 + $0x24] sm:$0xf]
        %v1349 = vld [vmem:[%s1 + $0x28] sm:$0xf]
        %v1350 = vld [vmem:[%s1 + $0x2c] sm:$0xf]
        %v1351 = vld [vmem:[%s1 + $0x30] sm:$0xf]
        %v1352 = vld [vmem:[%s1 + $0x34] sm:$0xf]
        %v1353 = vld [vmem:[%s1 + $0x38] sm:$0xf]
        %v1354 = vld [vmem:[%s1 + $0x3c] sm:$0xf]
        %v1355 = vld [vmem:[%s248] sm:$0x3f]
        %v1372 = vunpack.c.l.b16 %v1339
        %v1373 = vunpack.c.l.b16 %v1340
        %v1374 = vunpack.c.l.b16 %v1341
        %v1375 = vunpack.c.l.b16 %v1342
        %v1376 = vunpack.c.l.b16 %v1343
        %v1377 = vunpack.c.l.b16 %v1344
        %v1378 = vunpack.c.l.b16 %v1345
        %v1379 = vunpack.c.l.b16 %v1346
        %v1380 = vunpack.c.l.b16 %v1347
        %v1381 = vunpack.c.l.b16 %v1348
        %v1382 = vunpack.c.l.b16 %v1349
        %v1383 = vunpack.c.l.b16 %v1350
        %v1384 = vunpack.c.l.b16 %v1351
        %v1385 = vunpack.c.l.b16 %v1352
        %v1386 = vunpack.c.l.b16 %v1353
        %v1387 = vunpack.c.l.b16 %v1354
        %v1388 = vpack.c.b16 %v1373, %v1372
        %v1389 = vpack.c.b16 %v1375, %v1374
        %v1390 = vpack.c.b16 %v1377, %v1376
        %v1391 = vpack.c.b16 %v1379, %v1378
        %v1392 = vpack.c.b16 %v1381, %v1380
        %v1393 = vpack.c.b16 %v1383, %v1382
        %v1394 = vpack.c.b16 %v1385, %v1384
        %v1395 = vpack.c.b16 %v1387, %v1386
        %1396 = vrot.lane.b32.xlu0 %v1388, 112
        %v1397 = vpop.permute.xlu0 %1396
        %1398 = vrot.lane.b32.xlu0 %v1389, 112
        %v1399 = vpop.permute.xlu0 %1398
        %1400 = vrot.lane.b32.xlu0 %v1390, 112
        %v1401 = vpop.permute.xlu0 %1400
        %1402 = vrot.lane.b32.xlu0 %v1391, 112
        %v1403 = vpop.permute.xlu0 %1402
        %1404 = vrot.lane.b32.xlu0 %v1392, 112
        %v1405 = vpop.permute.xlu0 %1404
        %1406 = vrot.lane.b32.xlu0 %v1393, 112
        %v1407 = vpop.permute.xlu0 %1406
        %1408 = vrot.lane.b32.xlu0 %v1394, 112
        %v1409 = vpop.permute.xlu0 %1408
        %1410 = vrot.lane.b32.xlu0 %v1395, 112
        %v1411 = vpop.permute.xlu0 %1410
        %1413 = vst [vmem:[#allocation1] ss:$4 sm:$0xff] %v1355
        %v1414 = vld.sshfl [vmem:[#allocation1] sm:$0xff pattern:$0x73625140]
        %v1416 = vld.sshfl [vmem:[#allocation1 + $0x8] sm:$0xff pattern:$0x73625140]
        %v1418 = vld.sshfl [vmem:[#allocation1 + $0x10] sm:$0xff pattern:$0x73625140]
        %1420 = vrot.lane.b32.xlu0 %v1414, 109
        %v1421 = vpop.permute.xlu0 %1420
        %1422 = vrot.lane.b32.xlu0 %v1416, 109
        %v1423 = vpop.permute.xlu0 %1422
        %1424 = vrot.lane.b32.xlu0 %v1418, 109
        %v1425 = vpop.permute.xlu0 %1424
        %vm1426 = vcmask 891904
        %v1427 = vsel %vm1426, %v1421, %v1423
        %v1428 = vsel %vm1426, %v1423, %v1425
        %v1430 = vsel %vm340, %v1397, 0
        %v1433 = vsel %vm340, %v1399, 0
        %v1436 = vsel %vm340, %v1401, 0
        %v1439 = vsel %vm340, %v1403, 0
        %v1442 = vsel %vm340, %v1405, 0
        %v1445 = vsel %vm340, %v1407, 0
        %v1448 = vsel %vm340, %v1409, 0
        %v1451 = vsel %vm340, %v1411, 0
        %v1454 = vsel %vm365, %v1427, 0
        %v1457 = vsel %vm365, %v1428, 0
        %v1460 = vsel %vm365, %v1425, 0
        %1462 = vmatpush.bf16.msra.mxu0 0
        %1463 = vmatpush.bf16.msra.mxu0 0
        %1464 = vmatpush.bf16.msra.mxu0 0
        %1465 = vmatpush.bf16.msra.mxu0 0
        %1466 = vmatpush.bf16.msra.mxu0 0
        %1467 = vmatpush.bf16.msra.mxu0 0
        %1468 = vmatpush.bf16.msra.mxu0 0
        %1469 = vmatpush.bf16.msra.mxu0 %v1454
        %1470 = vmatmul.bf16.gmra.mxu0 %v1430
        %v1471 = vpop.f32.mrf.mxu0
        %v1472 = vadd.f32 0.0, %v1471
        %v1473 = vpop.f32.mrf.mxu0
        %v1474 = vadd.f32 0.0, %v1473
        %1475 = vmatmul.bf16.gmra.mxu0 %v1433
        %v1476 = vpop.f32.mrf.mxu0
        %v1477 = vadd.f32 0.0, %v1476
        %v1478 = vpop.f32.mrf.mxu0
        %v1479 = vadd.f32 0.0, %v1478
        %1480 = vmatmul.bf16.gmra.mxu0 %v1436
        %v1481 = vpop.f32.mrf.mxu0
        %v1482 = vadd.f32 0.0, %v1481
        %v1483 = vpop.f32.mrf.mxu0
        %v1484 = vadd.f32 0.0, %v1483
        %1485 = vmatmul.bf16.gmra.mxu0 %v1439
        %v1486 = vpop.f32.mrf.mxu0
        %v1487 = vadd.f32 0.0, %v1486
        %v1488 = vpop.f32.mrf.mxu0
        %v1489 = vadd.f32 0.0, %v1488
        %1490 = vmatmul.bf16.gmra.mxu0 %v1442
        %v1491 = vpop.f32.mrf.mxu0
        %v1492 = vadd.f32 0.0, %v1491
        %v1493 = vpop.f32.mrf.mxu0
        %v1494 = vadd.f32 0.0, %v1493
        %1495 = vmatmul.bf16.gmra.mxu0 %v1445
        %v1496 = vpop.f32.mrf.mxu0
        %v1497 = vadd.f32 0.0, %v1496
        %v1498 = vpop.f32.mrf.mxu0
        %v1499 = vadd.f32 0.0, %v1498
        %1500 = vmatmul.bf16.gmra.mxu0 %v1448
        %v1501 = vpop.f32.mrf.mxu0
        %v1502 = vadd.f32 0.0, %v1501
        %v1503 = vpop.f32.mrf.mxu0
        %v1504 = vadd.f32 0.0, %v1503
        %1505 = vmatmul.bf16.gmra.mxu0 %v1451
        %v1506 = vpop.f32.mrf.mxu0
        %v1507 = vadd.f32 0.0, %v1506
        %v1508 = vpop.f32.mrf.mxu0
        %v1509 = vadd.f32 0.0, %v1508
        %1510 = vdwg.mxu0
        %1511 = vmatpush.bf16.msra.mxu0 0
        %1512 = vmatpush.bf16.msra.mxu0 0
        %1513 = vmatpush.bf16.msra.mxu0 0
        %1514 = vmatpush.bf16.msra.mxu0 0
        %1515 = vmatpush.bf16.msra.mxu0 0
        %1516 = vmatpush.bf16.msra.mxu0 0
        %1517 = vmatpush.bf16.msra.mxu0 0
        %1518 = vmatpush.bf16.msra.mxu0 %v1457
        %1519 = vmatmul.bf16.gmra.mxu0 %v1430
        %v1520 = vpop.f32.mrf.mxu0
        %v1521 = vadd.f32 0.0, %v1520
        %v1522 = vpop.f32.mrf.mxu0
        %v1523 = vadd.f32 0.0, %v1522
        %1524 = vmatmul.bf16.gmra.mxu0 %v1433
        %v1525 = vpop.f32.mrf.mxu0
        %v1526 = vadd.f32 0.0, %v1525
        %v1527 = vpop.f32.mrf.mxu0
        %v1528 = vadd.f32 0.0, %v1527
        %1529 = vmatmul.bf16.gmra.mxu0 %v1436
        %v1530 = vpop.f32.mrf.mxu0
        %v1531 = vadd.f32 0.0, %v1530
        %v1532 = vpop.f32.mrf.mxu0
        %v1533 = vadd.f32 0.0, %v1532
        %1534 = vmatmul.bf16.gmra.mxu0 %v1439
        %v1535 = vpop.f32.mrf.mxu0
        %v1536 = vadd.f32 0.0, %v1535
        %v1537 = vpop.f32.mrf.mxu0
        %v1538 = vadd.f32 0.0, %v1537
        %1539 = vmatmul.bf16.gmra.mxu0 %v1442
        %v1540 = vpop.f32.mrf.mxu0
        %v1541 = vadd.f32 0.0, %v1540
        %v1542 = vpop.f32.mrf.mxu0
        %v1543 = vadd.f32 0.0, %v1542
        %1544 = vmatmul.bf16.gmra.mxu0 %v1445
        %v1545 = vpop.f32.mrf.mxu0
        %v1546 = vadd.f32 0.0, %v1545
        %v1547 = vpop.f32.mrf.mxu0
        %v1548 = vadd.f32 0.0, %v1547
        %1549 = vmatmul.bf16.gmra.mxu0 %v1448
        %v1550 = vpop.f32.mrf.mxu0
        %v1551 = vadd.f32 0.0, %v1550
        %v1552 = vpop.f32.mrf.mxu0
        %v1553 = vadd.f32 0.0, %v1552
        %1554 = vmatmul.bf16.gmra.mxu0 %v1451
        %v1555 = vpop.f32.mrf.mxu0
        %v1556 = vadd.f32 0.0, %v1555
        %v1557 = vpop.f32.mrf.mxu0
        %v1558 = vadd.f32 0.0, %v1557
        %1559 = vdwg.mxu0
        %1560 = vmatpush.bf16.msra.mxu0 0
        %1561 = vmatpush.bf16.msra.mxu0 0
        %1562 = vmatpush.bf16.msra.mxu0 0
        %1563 = vmatpush.bf16.msra.mxu0 0
        %1564 = vmatpush.bf16.msra.mxu0 0
        %1565 = vmatpush.bf16.msra.mxu0 0
        %1566 = vmatpush.bf16.msra.mxu0 0
        %1567 = vmatpush.bf16.msra.mxu0 %v1460
        %1568 = vmatmul.bf16.gmra.mxu0 %v1430
        %v1569 = vpop.f32.mrf.mxu0
        %v1570 = vadd.f32 0.0, %v1569
        %v1571 = vpop.f32.mrf.mxu0
        %v1572 = vadd.f32 0.0, %v1571
        %1573 = vmatmul.bf16.gmra.mxu0 %v1433
        %v1574 = vpop.f32.mrf.mxu0
        %v1575 = vadd.f32 0.0, %v1574
        %v1576 = vpop.f32.mrf.mxu0
        %v1577 = vadd.f32 0.0, %v1576
        %1578 = vmatmul.bf16.gmra.mxu0 %v1436
        %v1579 = vpop.f32.mrf.mxu0
        %v1580 = vadd.f32 0.0, %v1579
        %v1581 = vpop.f32.mrf.mxu0
        %v1582 = vadd.f32 0.0, %v1581
        %1583 = vmatmul.bf16.gmra.mxu0 %v1439
        %v1584 = vpop.f32.mrf.mxu0
        %v1585 = vadd.f32 0.0, %v1584
        %v1586 = vpop.f32.mrf.mxu0
        %v1587 = vadd.f32 0.0, %v1586
        %1588 = vmatmul.bf16.gmra.mxu0 %v1442
        %v1589 = vpop.f32.mrf.mxu0
        %v1590 = vadd.f32 0.0, %v1589
        %v1591 = vpop.f32.mrf.mxu0
        %v1592 = vadd.f32 0.0, %v1591
        %1593 = vmatmul.bf16.gmra.mxu0 %v1445
        %v1594 = vpop.f32.mrf.mxu0
        %v1595 = vadd.f32 0.0, %v1594
        %v1596 = vpop.f32.mrf.mxu0
        %v1597 = vadd.f32 0.0, %v1596
        %1598 = vmatmul.bf16.gmra.mxu0 %v1448
        %v1599 = vpop.f32.mrf.mxu0
        %v1600 = vadd.f32 0.0, %v1599
        %v1601 = vpop.f32.mrf.mxu0
        %v1602 = vadd.f32 0.0, %v1601
        %1603 = vmatmul.bf16.gmra.mxu0 %v1451
        %v1604 = vpop.f32.mrf.mxu0
        %v1605 = vadd.f32 0.0, %v1604
        %v1606 = vpop.f32.mrf.mxu0
        %v1607 = vadd.f32 0.0, %v1606
        %1608 = vdwg.mxu0
        %v1609 = vadd.f32 %v1291, %v1472
        %v1610 = vadd.f32 %v1292, %v1521
        %v1611 = vadd.f32 %v1293, %v1570
        %v1612 = vadd.f32 %v1294, %v1474
        %v1613 = vadd.f32 %v1295, %v1523
        %v1614 = vadd.f32 %v1296, %v1572
        %v1615 = vadd.f32 %v1297, %v1477
        %v1616 = vadd.f32 %v1298, %v1526
        %v1617 = vadd.f32 %v1299, %v1575
        %v1618 = vadd.f32 %v1300, %v1479
        %v1619 = vadd.f32 %v1301, %v1528
        %v1620 = vadd.f32 %v1302, %v1577
        %v1621 = vadd.f32 %v1303, %v1482
        %v1622 = vadd.f32 %v1304, %v1531
        %v1623 = vadd.f32 %v1305, %v1580
        %v1624 = vadd.f32 %v1306, %v1484
        %v1625 = vadd.f32 %v1307, %v1533
        %v1626 = vadd.f32 %v1308, %v1582
        %v1627 = vadd.f32 %v1309, %v1487
        %v1628 = vadd.f32 %v1310, %v1536
        %v1629 = vadd.f32 %v1311, %v1585
        %v1630 = vadd.f32 %v1312, %v1489
        %v1631 = vadd.f32 %v1313, %v1538
        %v1632 = vadd.f32 %v1314, %v1587
        %v1633 = vadd.f32 %v1315, %v1492
        %v1634 = vadd.f32 %v1316, %v1541
        %v1635 = vadd.f32 %v1317, %v1590
        %v1636 = vadd.f32 %v1318, %v1494
        %v1637 = vadd.f32 %v1319, %v1543
        %v1638 = vadd.f32 %v1320, %v1592
        %v1639 = vadd.f32 %v1321, %v1497
        %v1640 = vadd.f32 %v1322, %v1546
        %v1641 = vadd.f32 %v1323, %v1595
        %v1642 = vadd.f32 %v1324, %v1499
        %v1643 = vadd.f32 %v1325, %v1548
        %v1644 = vadd.f32 %v1326, %v1597
        %v1645 = vadd.f32 %v1327, %v1502
        %v1646 = vadd.f32 %v1328, %v1551
        %v1647 = vadd.f32 %v1329, %v1600
        %v1648 = vadd.f32 %v1330, %v1504
        %v1649 = vadd.f32 %v1331, %v1553
        %v1650 = vadd.f32 %v1332, %v1602
        %v1651 = vadd.f32 %v1333, %v1507
        %v1652 = vadd.f32 %v1334, %v1556
        %v1653 = vadd.f32 %v1335, %v1605
        %v1654 = vadd.f32 %v1336, %v1509
        %v1655 = vadd.f32 %v1337, %v1558
        %v1656 = vadd.f32 %v1338, %v1607
        %v1657 = vld [vmem:[%s1] sm:$0xf]
        %v1658 = vld [vmem:[%s1 + $0x4] sm:$0xf]
        %v1659 = vld [vmem:[%s1 + $0x8] sm:$0xf]
        %v1660 = vld [vmem:[%s1 + $0xc] sm:$0xf]
        %v1661 = vld [vmem:[%s1 + $0x10] sm:$0xf]
        %v1662 = vld [vmem:[%s1 + $0x14] sm:$0xf]
        %v1663 = vld [vmem:[%s1 + $0x18] sm:$0xf]
        %v1664 = vld [vmem:[%s1 + $0x1c] sm:$0xf]
        %v1665 = vld [vmem:[%s1 + $0x20] sm:$0xf]
        %v1666 = vld [vmem:[%s1 + $0x24] sm:$0xf]
        %v1667 = vld [vmem:[%s1 + $0x28] sm:$0xf]
        %v1668 = vld [vmem:[%s1 + $0x2c] sm:$0xf]
        %v1669 = vld [vmem:[%s1 + $0x30] sm:$0xf]
        %v1670 = vld [vmem:[%s1 + $0x34] sm:$0xf]
        %v1671 = vld [vmem:[%s1 + $0x38] sm:$0xf]
        %v1672 = vld [vmem:[%s1 + $0x3c] sm:$0xf]
        %v1673 = vld [vmem:[%s248] sm:$0x3f]
        %v1690 = vunpack.c.l.b16 %v1657
        %v1691 = vunpack.c.l.b16 %v1658
        %v1692 = vunpack.c.l.b16 %v1659
        %v1693 = vunpack.c.l.b16 %v1660
        %v1694 = vunpack.c.l.b16 %v1661
        %v1695 = vunpack.c.l.b16 %v1662
        %v1696 = vunpack.c.l.b16 %v1663
        %v1697 = vunpack.c.l.b16 %v1664
        %v1698 = vunpack.c.l.b16 %v1665
        %v1699 = vunpack.c.l.b16 %v1666
        %v1700 = vunpack.c.l.b16 %v1667
        %v1701 = vunpack.c.l.b16 %v1668
        %v1702 = vunpack.c.l.b16 %v1669
        %v1703 = vunpack.c.l.b16 %v1670
        %v1704 = vunpack.c.l.b16 %v1671
        %v1705 = vunpack.c.l.b16 %v1672
        %v1706 = vpack.c.b16 %v1691, %v1690
        %v1707 = vpack.c.b16 %v1693, %v1692
        %v1708 = vpack.c.b16 %v1695, %v1694
        %v1709 = vpack.c.b16 %v1697, %v1696
        %v1710 = vpack.c.b16 %v1699, %v1698
        %v1711 = vpack.c.b16 %v1701, %v1700
        %v1712 = vpack.c.b16 %v1703, %v1702
        %v1713 = vpack.c.b16 %v1705, %v1704
        %1714 = vrot.lane.b32.xlu0 %v1706, 108
        %v1715 = vpop.permute.xlu0 %1714
        %1716 = vrot.lane.b32.xlu0 %v1707, 108
        %v1717 = vpop.permute.xlu0 %1716
        %1718 = vrot.lane.b32.xlu0 %v1708, 108
        %v1719 = vpop.permute.xlu0 %1718
        %1720 = vrot.lane.b32.xlu0 %v1709, 108
        %v1721 = vpop.permute.xlu0 %1720
        %1722 = vrot.lane.b32.xlu0 %v1710, 108
        %v1723 = vpop.permute.xlu0 %1722
        %1724 = vrot.lane.b32.xlu0 %v1711, 108
        %v1725 = vpop.permute.xlu0 %1724
        %1726 = vrot.lane.b32.xlu0 %v1712, 108
        %v1727 = vpop.permute.xlu0 %1726
        %1728 = vrot.lane.b32.xlu0 %v1713, 108
        %v1729 = vpop.permute.xlu0 %1728
        %1731 = vst [vmem:[#allocation1] ss:$4 sm:$0xff] %v1673
        %v1732 = vld.sshfl [vmem:[#allocation1] sm:$0xff pattern:$0x73625140]
        %v1734 = vld.sshfl [vmem:[#allocation1 + $0x8] sm:$0xff pattern:$0x73625140]
        %v1736 = vld.sshfl [vmem:[#allocation1 + $0x10] sm:$0xff pattern:$0x73625140]
        %1738 = vrot.lane.b32.xlu0 %v1732, 108
        %v1739 = vpop.permute.xlu0 %1738
        %1740 = vrot.lane.b32.xlu0 %v1734, 108
        %v1741 = vpop.permute.xlu0 %1740
        %1742 = vrot.lane.b32.xlu0 %v1736, 108
        %v1743 = vpop.permute.xlu0 %1742
        %vm1744 = vcmask 883712
        %v1745 = vsel %vm1744, %v1739, %v1741
        %v1746 = vsel %vm1744, %v1741, %v1743
        %v1748 = vsel %vm340, %v1715, 0
        %v1751 = vsel %vm340, %v1717, 0
        %v1754 = vsel %vm340, %v1719, 0
        %v1757 = vsel %vm340, %v1721, 0
        %v1760 = vsel %vm340, %v1723, 0
        %v1763 = vsel %vm340, %v1725, 0
        %v1766 = vsel %vm340, %v1727, 0
        %v1769 = vsel %vm340, %v1729, 0
        %v1772 = vsel %vm365, %v1745, 0
        %v1775 = vsel %vm365, %v1746, 0
        %v1778 = vsel %vm365, %v1743, 0
        %1780 = vmatpush.bf16.msra.mxu0 0
        %1781 = vmatpush.bf16.msra.mxu0 0
        %1782 = vmatpush.bf16.msra.mxu0 0
        %1783 = vmatpush.bf16.msra.mxu0 0
        %1784 = vmatpush.bf16.msra.mxu0 0
        %1785 = vmatpush.bf16.msra.mxu0 0
        %1786 = vmatpush.bf16.msra.mxu0 0
        %1787 = vmatpush.bf16.msra.mxu0 %v1772
        %1788 = vmatmul.bf16.gmra.mxu0 %v1748
        %v1789 = vpop.f32.mrf.mxu0
        %v1790 = vadd.f32 0.0, %v1789
        %v1791 = vpop.f32.mrf.mxu0
        %v1792 = vadd.f32 0.0, %v1791
        %1793 = vmatmul.bf16.gmra.mxu0 %v1751
        %v1794 = vpop.f32.mrf.mxu0
        %v1795 = vadd.f32 0.0, %v1794
        %v1796 = vpop.f32.mrf.mxu0
        %v1797 = vadd.f32 0.0, %v1796
        %1798 = vmatmul.bf16.gmra.mxu0 %v1754
        %v1799 = vpop.f32.mrf.mxu0
        %v1800 = vadd.f32 0.0, %v1799
        %v1801 = vpop.f32.mrf.mxu0
        %v1802 = vadd.f32 0.0, %v1801
        %1803 = vmatmul.bf16.gmra.mxu0 %v1757
        %v1804 = vpop.f32.mrf.mxu0
        %v1805 = vadd.f32 0.0, %v1804
        %v1806 = vpop.f32.mrf.mxu0
        %v1807 = vadd.f32 0.0, %v1806
        %1808 = vmatmul.bf16.gmra.mxu0 %v1760
        %v1809 = vpop.f32.mrf.mxu0
        %v1810 = vadd.f32 0.0, %v1809
        %v1811 = vpop.f32.mrf.mxu0
        %v1812 = vadd.f32 0.0, %v1811
        %1813 = vmatmul.bf16.gmra.mxu0 %v1763
        %v1814 = vpop.f32.mrf.mxu0
        %v1815 = vadd.f32 0.0, %v1814
        %v1816 = vpop.f32.mrf.mxu0
        %v1817 = vadd.f32 0.0, %v1816
        %1818 = vmatmul.bf16.gmra.mxu0 %v1766
        %v1819 = vpop.f32.mrf.mxu0
        %v1820 = vadd.f32 0.0, %v1819
        %v1821 = vpop.f32.mrf.mxu0
        %v1822 = vadd.f32 0.0, %v1821
        %1823 = vmatmul.bf16.gmra.mxu0 %v1769
        %v1824 = vpop.f32.mrf.mxu0
        %v1825 = vadd.f32 0.0, %v1824
        %v1826 = vpop.f32.mrf.mxu0
        %v1827 = vadd.f32 0.0, %v1826
        %1828 = vdwg.mxu0
        %1829 = vmatpush.bf16.msra.mxu0 0
        %1830 = vmatpush.bf16.msra.mxu0 0
        %1831 = vmatpush.bf16.msra.mxu0 0
        %1832 = vmatpush.bf16.msra.mxu0 0
        %1833 = vmatpush.bf16.msra.mxu0 0
        %1834 = vmatpush.bf16.msra.mxu0 0
        %1835 = vmatpush.bf16.msra.mxu0 0
        %1836 = vmatpush.bf16.msra.mxu0 %v1775
        %1837 = vmatmul.bf16.gmra.mxu0 %v1748
        %v1838 = vpop.f32.mrf.mxu0
        %v1839 = vadd.f32 0.0, %v1838
        %v1840 = vpop.f32.mrf.mxu0
        %v1841 = vadd.f32 0.0, %v1840
        %1842 = vmatmul.bf16.gmra.mxu0 %v1751
        %v1843 = vpop.f32.mrf.mxu0
        %v1844 = vadd.f32 0.0, %v1843
        %v1845 = vpop.f32.mrf.mxu0
        %v1846 = vadd.f32 0.0, %v1845
        %1847 = vmatmul.bf16.gmra.mxu0 %v1754
        %v1848 = vpop.f32.mrf.mxu0
        %v1849 = vadd.f32 0.0, %v1848
        %v1850 = vpop.f32.mrf.mxu0
        %v1851 = vadd.f32 0.0, %v1850
        %1852 = vmatmul.bf16.gmra.mxu0 %v1757
        %v1853 = vpop.f32.mrf.mxu0
        %v1854 = vadd.f32 0.0, %v1853
        %v1855 = vpop.f32.mrf.mxu0
        %v1856 = vadd.f32 0.0, %v1855
        %1857 = vmatmul.bf16.gmra.mxu0 %v1760
        %v1858 = vpop.f32.mrf.mxu0
        %v1859 = vadd.f32 0.0, %v1858
        %v1860 = vpop.f32.mrf.mxu0
        %v1861 = vadd.f32 0.0, %v1860
        %1862 = vmatmul.bf16.gmra.mxu0 %v1763
        %v1863 = vpop.f32.mrf.mxu0
        %v1864 = vadd.f32 0.0, %v1863
        %v1865 = vpop.f32.mrf.mxu0
        %v1866 = vadd.f32 0.0, %v1865
        %1867 = vmatmul.bf16.gmra.mxu0 %v1766
        %v1868 = vpop.f32.mrf.mxu0
        %v1869 = vadd.f32 0.0, %v1868
        %v1870 = vpop.f32.mrf.mxu0
        %v1871 = vadd.f32 0.0, %v1870
        %1872 = vmatmul.bf16.gmra.mxu0 %v1769
        %v1873 = vpop.f32.mrf.mxu0
        %v1874 = vadd.f32 0.0, %v1873
        %v1875 = vpop.f32.mrf.mxu0
        %v1876 = vadd.f32 0.0, %v1875
        %1877 = vdwg.mxu0
        %1878 = vmatpush.bf16.msra.mxu0 0
        %1879 = vmatpush.bf16.msra.mxu0 0
        %1880 = vmatpush.bf16.msra.mxu0 0
        %1881 = vmatpush.bf16.msra.mxu0 0
        %1882 = vmatpush.bf16.msra.mxu0 0
        %1883 = vmatpush.bf16.msra.mxu0 0
        %1884 = vmatpush.bf16.msra.mxu0 0
        %1885 = vmatpush.bf16.msra.mxu0 %v1778
        %1886 = vmatmul.bf16.gmra.mxu0 %v1748
        %v1887 = vpop.f32.mrf.mxu0
        %v1888 = vadd.f32 0.0, %v1887
        %v1889 = vpop.f32.mrf.mxu0
        %v1890 = vadd.f32 0.0, %v1889
        %1891 = vmatmul.bf16.gmra.mxu0 %v1751
        %v1892 = vpop.f32.mrf.mxu0
        %v1893 = vadd.f32 0.0, %v1892
        %v1894 = vpop.f32.mrf.mxu0
        %v1895 = vadd.f32 0.0, %v1894
        %1896 = vmatmul.bf16.gmra.mxu0 %v1754
        %v1897 = vpop.f32.mrf.mxu0
        %v1898 = vadd.f32 0.0, %v1897
        %v1899 = vpop.f32.mrf.mxu0
        %v1900 = vadd.f32 0.0, %v1899
        %1901 = vmatmul.bf16.gmra.mxu0 %v1757
        %v1902 = vpop.f32.mrf.mxu0
        %v1903 = vadd.f32 0.0, %v1902
        %v1904 = vpop.f32.mrf.mxu0
        %v1905 = vadd.f32 0.0, %v1904
        %1906 = vmatmul.bf16.gmra.mxu0 %v1760
        %v1907 = vpop.f32.mrf.mxu0
        %v1908 = vadd.f32 0.0, %v1907
        %v1909 = vpop.f32.mrf.mxu0
        %v1910 = vadd.f32 0.0, %v1909
        %1911 = vmatmul.bf16.gmra.mxu0 %v1763
        %v1912 = vpop.f32.mrf.mxu0
        %v1913 = vadd.f32 0.0, %v1912
        %v1914 = vpop.f32.mrf.mxu0
        %v1915 = vadd.f32 0.0, %v1914
        %1916 = vmatmul.bf16.gmra.mxu0 %v1766
        %v1917 = vpop.f32.mrf.mxu0
        %v1918 = vadd.f32 0.0, %v1917
        %v1919 = vpop.f32.mrf.mxu0
        %v1920 = vadd.f32 0.0, %v1919
        %1921 = vmatmul.bf16.gmra.mxu0 %v1769
        %v1922 = vpop.f32.mrf.mxu0
        %v1923 = vadd.f32 0.0, %v1922
        %v1924 = vpop.f32.mrf.mxu0
        %v1925 = vadd.f32 0.0, %v1924
        %1926 = vdwg.mxu0
        %v1927 = vadd.f32 %v1609, %v1790
        %v1928 = vadd.f32 %v1610, %v1839
        %v1929 = vadd.f32 %v1611, %v1888
        %v1930 = vadd.f32 %v1612, %v1792
        %v1931 = vadd.f32 %v1613, %v1841
        %v1932 = vadd.f32 %v1614, %v1890
        %v1933 = vadd.f32 %v1615, %v1795
        %v1934 = vadd.f32 %v1616, %v1844
        %v1935 = vadd.f32 %v1617, %v1893
        %v1936 = vadd.f32 %v1618, %v1797
        %v1937 = vadd.f32 %v1619, %v1846
        %v1938 = vadd.f32 %v1620, %v1895
        %v1939 = vadd.f32 %v1621, %v1800
        %v1940 = vadd.f32 %v1622, %v1849
        %v1941 = vadd.f32 %v1623, %v1898
        %v1942 = vadd.f32 %v1624, %v1802
        %v1943 = vadd.f32 %v1625, %v1851
        %v1944 = vadd.f32 %v1626, %v1900
        %v1945 = vadd.f32 %v1627, %v1805
        %v1946 = vadd.f32 %v1628, %v1854
        %v1947 = vadd.f32 %v1629, %v1903
        %v1948 = vadd.f32 %v1630, %v1807
        %v1949 = vadd.f32 %v1631, %v1856
        %v1950 = vadd.f32 %v1632, %v1905
        %v1951 = vadd.f32 %v1633, %v1810
        %v1952 = vadd.f32 %v1634, %v1859
        %v1953 = vadd.f32 %v1635, %v1908
        %v1954 = vadd.f32 %v1636, %v1812
        %v1955 = vadd.f32 %v1637, %v1861
        %v1956 = vadd.f32 %v1638, %v1910
        %v1957 = vadd.f32 %v1639, %v1815
        %v1958 = vadd.f32 %v1640, %v1864
        %v1959 = vadd.f32 %v1641, %v1913
        %v1960 = vadd.f32 %v1642, %v1817
        %v1961 = vadd.f32 %v1643, %v1866
        %v1962 = vadd.f32 %v1644, %v1915
        %v1963 = vadd.f32 %v1645, %v1820
        %v1964 = vadd.f32 %v1646, %v1869
        %v1965 = vadd.f32 %v1647, %v1918
        %v1966 = vadd.f32 %v1648, %v1822
        %v1967 = vadd.f32 %v1649, %v1871
        %v1968 = vadd.f32 %v1650, %v1920
        %v1969 = vadd.f32 %v1651, %v1825
        %v1970 = vadd.f32 %v1652, %v1874
        %v1971 = vadd.f32 %v1653, %v1923
        %v1972 = vadd.f32 %v1654, %v1827
        %v1973 = vadd.f32 %v1655, %v1876
        %v1974 = vadd.f32 %v1656, %v1925
        %v1975 = vld [vmem:[%s1] sm:$0xf]
        %v1976 = vld [vmem:[%s1 + $0x4] sm:$0xf]
        %v1977 = vld [vmem:[%s1 + $0x8] sm:$0xf]
        %v1978 = vld [vmem:[%s1 + $0xc] sm:$0xf]
        %v1979 = vld [vmem:[%s1 + $0x10] sm:$0xf]
        %v1980 = vld [vmem:[%s1 + $0x14] sm:$0xf]
        %v1981 = vld [vmem:[%s1 + $0x18] sm:$0xf]
        %v1982 = vld [vmem:[%s1 + $0x1c] sm:$0xf]
        %v1983 = vld [vmem:[%s1 + $0x20] sm:$0xf]
        %v1984 = vld [vmem:[%s1 + $0x24] sm:$0xf]
        %v1985 = vld [vmem:[%s1 + $0x28] sm:$0xf]
        %v1986 = vld [vmem:[%s1 + $0x2c] sm:$0xf]
        %v1987 = vld [vmem:[%s1 + $0x30] sm:$0xf]
        %v1988 = vld [vmem:[%s1 + $0x34] sm:$0xf]
        %v1989 = vld [vmem:[%s1 + $0x38] sm:$0xf]
        %v1990 = vld [vmem:[%s1 + $0x3c] sm:$0xf]
        %v1991 = vld [vmem:[%s248] sm:$0x3f]
        %v2008 = vunpack.c.l.b16 %v1975
        %v2009 = vunpack.c.l.b16 %v1976
        %v2010 = vunpack.c.l.b16 %v1977
        %v2011 = vunpack.c.l.b16 %v1978
        %v2012 = vunpack.c.l.b16 %v1979
        %v2013 = vunpack.c.l.b16 %v1980
        %v2014 = vunpack.c.l.b16 %v1981
        %v2015 = vunpack.c.l.b16 %v1982
        %v2016 = vunpack.c.l.b16 %v1983
        %v2017 = vunpack.c.l.b16 %v1984
        %v2018 = vunpack.c.l.b16 %v1985
        %v2019 = vunpack.c.l.b16 %v1986
        %v2020 = vunpack.c.l.b16 %v1987
        %v2021 = vunpack.c.l.b16 %v1988
        %v2022 = vunpack.c.l.b16 %v1989
        %v2023 = vunpack.c.l.b16 %v1990
        %v2024 = vpack.c.b16 %v2009, %v2008
        %v2025 = vpack.c.b16 %v2011, %v2010
        %v2026 = vpack.c.b16 %v2013, %v2012
        %v2027 = vpack.c.b16 %v2015, %v2014
        %v2028 = vpack.c.b16 %v2017, %v2016
        %v2029 = vpack.c.b16 %v2019, %v2018
        %v2030 = vpack.c.b16 %v2021, %v2020
        %v2031 = vpack.c.b16 %v2023, %v2022
        %2032 = vrot.lane.b32.xlu0 %v2024, 104
        %v2033 = vpop.permute.xlu0 %2032
        %2034 = vrot.lane.b32.xlu0 %v2025, 104
        %v2035 = vpop.permute.xlu0 %2034
        %2036 = vrot.lane.b32.xlu0 %v2026, 104
        %v2037 = vpop.permute.xlu0 %2036
        %2038 = vrot.lane.b32.xlu0 %v2027, 104
        %v2039 = vpop.permute.xlu0 %2038
        %2040 = vrot.lane.b32.xlu0 %v2028, 104
        %v2041 = vpop.permute.xlu0 %2040
        %2042 = vrot.lane.b32.xlu0 %v2029, 104
        %v2043 = vpop.permute.xlu0 %2042
        %2044 = vrot.lane.b32.xlu0 %v2030, 104
        %v2045 = vpop.permute.xlu0 %2044
        %2046 = vrot.lane.b32.xlu0 %v2031, 104
        %v2047 = vpop.permute.xlu0 %2046
        %2049 = vst [vmem:[#allocation1] ss:$4 sm:$0xff] %v1991
        %v2050 = vld.sshfl [vmem:[#allocation1] sm:$0xff pattern:$0x73625140]
        %v2052 = vld.sshfl [vmem:[#allocation1 + $0x8] sm:$0xff pattern:$0x73625140]
        %v2054 = vld.sshfl [vmem:[#allocation1 + $0x10] sm:$0xff pattern:$0x73625140]
        %2056 = vrot.lane.b32.xlu0 %v2050, 92
        %v2057 = vpop.permute.xlu0 %2056
        %2058 = vrot.lane.b32.xlu0 %v2052, 92
        %v2059 = vpop.permute.xlu0 %2058
        %2060 = vrot.lane.b32.xlu0 %v2054, 92
        %v2061 = vpop.permute.xlu0 %2060
        %vm2062 = vcmask 752640
        %v2063 = vsel %vm2062, %v2057, %v2059
        %v2064 = vsel %vm2062, %v2059, %v2061
        %v2066 = vsel %vm340, %v2033, 0
        %v2069 = vsel %vm340, %v2035, 0
        %v2072 = vsel %vm340, %v2037, 0
        %v2075 = vsel %vm340, %v2039, 0
        %v2078 = vsel %vm340, %v2041, 0
        %v2081 = vsel %vm340, %v2043, 0
        %v2084 = vsel %vm340, %v2045, 0
        %v2087 = vsel %vm340, %v2047, 0
        %v2090 = vsel %vm365, %v2063, 0
        %v2093 = vsel %vm365, %v2064, 0
        %v2096 = vsel %vm365, %v2061, 0
        %2098 = vmatpush.bf16.msra.mxu0 0
        %2099 = vmatpush.bf16.msra.mxu0 0
        %2100 = vmatpush.bf16.msra.mxu0 0
        %2101 = vmatpush.bf16.msra.mxu0 0
        %2102 = vmatpush.bf16.msra.mxu0 0
        %2103 = vmatpush.bf16.msra.mxu0 0
        %2104 = vmatpush.bf16.msra.mxu0 0
        %2105 = vmatpush.bf16.msra.mxu0 %v2090
        %2106 = vmatmul.bf16.gmra.mxu0 %v2066
        %v2107 = vpop.f32.mrf.mxu0
        %v2108 = vadd.f32 0.0, %v2107
        %v2109 = vpop.f32.mrf.mxu0
        %v2110 = vadd.f32 0.0, %v2109
        %2111 = vmatmul.bf16.gmra.mxu0 %v2069
        %v2112 = vpop.f32.mrf.mxu0
        %v2113 = vadd.f32 0.0, %v2112
        %v2114 = vpop.f32.mrf.mxu0
        %v2115 = vadd.f32 0.0, %v2114
        %2116 = vmatmul.bf16.gmra.mxu0 %v2072
        %v2117 = vpop.f32.mrf.mxu0
        %v2118 = vadd.f32 0.0, %v2117
        %v2119 = vpop.f32.mrf.mxu0
        %v2120 = vadd.f32 0.0, %v2119
        %2121 = vmatmul.bf16.gmra.mxu0 %v2075
        %v2122 = vpop.f32.mrf.mxu0
        %v2123 = vadd.f32 0.0, %v2122
        %v2124 = vpop.f32.mrf.mxu0
        %v2125 = vadd.f32 0.0, %v2124
        %2126 = vmatmul.bf16.gmra.mxu0 %v2078
        %v2127 = vpop.f32.mrf.mxu0
        %v2128 = vadd.f32 0.0, %v2127
        %v2129 = vpop.f32.mrf.mxu0
        %v2130 = vadd.f32 0.0, %v2129
        %2131 = vmatmul.bf16.gmra.mxu0 %v2081
        %v2132 = vpop.f32.mrf.mxu0
        %v2133 = vadd.f32 0.0, %v2132
        %v2134 = vpop.f32.mrf.mxu0
        %v2135 = vadd.f32 0.0, %v2134
        %2136 = vmatmul.bf16.gmra.mxu0 %v2084
        %v2137 = vpop.f32.mrf.mxu0
        %v2138 = vadd.f32 0.0, %v2137
        %v2139 = vpop.f32.mrf.mxu0
        %v2140 = vadd.f32 0.0, %v2139
        %2141 = vmatmul.bf16.gmra.mxu0 %v2087
        %v2142 = vpop.f32.mrf.mxu0
        %v2143 = vadd.f32 0.0, %v2142
        %v2144 = vpop.f32.mrf.mxu0
        %v2145 = vadd.f32 0.0, %v2144
        %2146 = vdwg.mxu0
        %2147 = vmatpush.bf16.msra.mxu0 0
        %2148 = vmatpush.bf16.msra.mxu0 0
        %2149 = vmatpush.bf16.msra.mxu0 0
        %2150 = vmatpush.bf16.msra.mxu0 0
        %2151 = vmatpush.bf16.msra.mxu0 0
        %2152 = vmatpush.bf16.msra.mxu0 0
        %2153 = vmatpush.bf16.msra.mxu0 0
        %2154 = vmatpush.bf16.msra.mxu0 %v2093
        %2155 = vmatmul.bf16.gmra.mxu0 %v2066
        %v2156 = vpop.f32.mrf.mxu0
        %v2157 = vadd.f32 0.0, %v2156
        %v2158 = vpop.f32.mrf.mxu0
        %v2159 = vadd.f32 0.0, %v2158
        %2160 = vmatmul.bf16.gmra.mxu0 %v2069
        %v2161 = vpop.f32.mrf.mxu0
        %v2162 = vadd.f32 0.0, %v2161
        %v2163 = vpop.f32.mrf.mxu0
        %v2164 = vadd.f32 0.0, %v2163
        %2165 = vmatmul.bf16.gmra.mxu0 %v2072
        %v2166 = vpop.f32.mrf.mxu0
        %v2167 = vadd.f32 0.0, %v2166
        %v2168 = vpop.f32.mrf.mxu0
        %v2169 = vadd.f32 0.0, %v2168
        %2170 = vmatmul.bf16.gmra.mxu0 %v2075
        %v2171 = vpop.f32.mrf.mxu0
        %v2172 = vadd.f32 0.0, %v2171
        %v2173 = vpop.f32.mrf.mxu0
        %v2174 = vadd.f32 0.0, %v2173
        %2175 = vmatmul.bf16.gmra.mxu0 %v2078
        %v2176 = vpop.f32.mrf.mxu0
        %v2177 = vadd.f32 0.0, %v2176
        %v2178 = vpop.f32.mrf.mxu0
        %v2179 = vadd.f32 0.0, %v2178
        %2180 = vmatmul.bf16.gmra.mxu0 %v2081
        %v2181 = vpop.f32.mrf.mxu0
        %v2182 = vadd.f32 0.0, %v2181
        %v2183 = vpop.f32.mrf.mxu0
        %v2184 = vadd.f32 0.0, %v2183
        %2185 = vmatmul.bf16.gmra.mxu0 %v2084
        %v2186 = vpop.f32.mrf.mxu0
        %v2187 = vadd.f32 0.0, %v2186
        %v2188 = vpop.f32.mrf.mxu0
        %v2189 = vadd.f32 0.0, %v2188
        %2190 = vmatmul.bf16.gmra.mxu0 %v2087
        %v2191 = vpop.f32.mrf.mxu0
        %v2192 = vadd.f32 0.0, %v2191
        %v2193 = vpop.f32.mrf.mxu0
        %v2194 = vadd.f32 0.0, %v2193
        %2195 = vdwg.mxu0
        %2196 = vmatpush.bf16.msra.mxu0 0
        %2197 = vmatpush.bf16.msra.mxu0 0
        %2198 = vmatpush.bf16.msra.mxu0 0
        %2199 = vmatpush.bf16.msra.mxu0 0
        %2200 = vmatpush.bf16.msra.mxu0 0
        %2201 = vmatpush.bf16.msra.mxu0 0
        %2202 = vmatpush.bf16.msra.mxu0 0
        %2203 = vmatpush.bf16.msra.mxu0 %v2096
        %2204 = vmatmul.bf16.gmra.mxu0 %v2066
        %v2205 = vpop.f32.mrf.mxu0
        %v2206 = vadd.f32 0.0, %v2205
        %v2207 = vpop.f32.mrf.mxu0
        %v2208 = vadd.f32 0.0, %v2207
        %2209 = vmatmul.bf16.gmra.mxu0 %v2069
        %v2210 = vpop.f32.mrf.mxu0
        %v2211 = vadd.f32 0.0, %v2210
        %v2212 = vpop.f32.mrf.mxu0
        %v2213 = vadd.f32 0.0, %v2212
        %2214 = vmatmul.bf16.gmra.mxu0 %v2072
        %v2215 = vpop.f32.mrf.mxu0
        %v2216 = vadd.f32 0.0, %v2215
        %v2217 = vpop.f32.mrf.mxu0
        %v2218 = vadd.f32 0.0, %v2217
        %2219 = vmatmul.bf16.gmra.mxu0 %v2075
        %v2220 = vpop.f32.mrf.mxu0
        %v2221 = vadd.f32 0.0, %v2220
        %v2222 = vpop.f32.mrf.mxu0
        %v2223 = vadd.f32 0.0, %v2222
        %2224 = vmatmul.bf16.gmra.mxu0 %v2078
        %v2225 = vpop.f32.mrf.mxu0
        %v2226 = vadd.f32 0.0, %v2225
        %v2227 = vpop.f32.mrf.mxu0
        %v2228 = vadd.f32 0.0, %v2227
        %2229 = vmatmul.bf16.gmra.mxu0 %v2081
        %v2230 = vpop.f32.mrf.mxu0
        %v2231 = vadd.f32 0.0, %v2230
        %v2232 = vpop.f32.mrf.mxu0
        %v2233 = vadd.f32 0.0, %v2232
        %2234 = vmatmul.bf16.gmra.mxu0 %v2084
        %v2235 = vpop.f32.mrf.mxu0
        %v2236 = vadd.f32 0.0, %v2235
        %v2237 = vpop.f32.mrf.mxu0
        %v2238 = vadd.f32 0.0, %v2237
        %2239 = vmatmul.bf16.gmra.mxu0 %v2087
        %v2240 = vpop.f32.mrf.mxu0
        %v2241 = vadd.f32 0.0, %v2240
        %v2242 = vpop.f32.mrf.mxu0
        %v2243 = vadd.f32 0.0, %v2242
        %2244 = vdwg.mxu0
        %v2245 = vadd.f32 %v1927, %v2108
        %v2246 = vadd.f32 %v1928, %v2157
        %v2247 = vadd.f32 %v1929, %v2206
        %v2248 = vadd.f32 %v1930, %v2110
        %v2249 = vadd.f32 %v1931, %v2159
        %v2250 = vadd.f32 %v1932, %v2208
        %v2251 = vadd.f32 %v1933, %v2113
        %v2252 = vadd.f32 %v1934, %v2162
        %v2253 = vadd.f32 %v1935, %v2211
        %v2254 = vadd.f32 %v1936, %v2115
        %v2255 = vadd.f32 %v1937, %v2164
        %v2256 = vadd.f32 %v1938, %v2213
        %v2257 = vadd.f32 %v1939, %v2118
        %v2258 = vadd.f32 %v1940, %v2167
        %v2259 = vadd.f32 %v1941, %v2216
        %v2260 = vadd.f32 %v1942, %v2120
        %v2261 = vadd.f32 %v1943, %v2169
        %v2262 = vadd.f32 %v1944, %v2218
        %v2263 = vadd.f32 %v1945, %v2123
        %v2264 = vadd.f32 %v1946, %v2172
        %v2265 = vadd.f32 %v1947, %v2221
        %v2266 = vadd.f32 %v1948, %v2125
        %v2267 = vadd.f32 %v1949, %v2174
        %v2268 = vadd.f32 %v1950, %v2223
        %v2269 = vadd.f32 %v1951, %v2128
        %v2270 = vadd.f32 %v1952, %v2177
        %v2271 = vadd.f32 %v1953, %v2226
        %v2272 = vadd.f32 %v1954, %v2130
        %v2273 = vadd.f32 %v1955, %v2179
        %v2274 = vadd.f32 %v1956, %v2228
        %v2275 = vadd.f32 %v1957, %v2133
        %v2276 = vadd.f32 %v1958, %v2182
        %v2277 = vadd.f32 %v1959, %v2231
        %v2278 = vadd.f32 %v1960, %v2135
        %v2279 = vadd.f32 %v1961, %v2184
        %v2280 = vadd.f32 %v1962, %v2233
        %v2281 = vadd.f32 %v1963, %v2138
        %v2282 = vadd.f32 %v1964, %v2187
        %v2283 = vadd.f32 %v1965, %v2236
        %v2284 = vadd.f32 %v1966, %v2140
        %v2285 = vadd.f32 %v1967, %v2189
        %v2286 = vadd.f32 %v1968, %v2238
        %v2287 = vadd.f32 %v1969, %v2143
        %v2288 = vadd.f32 %v1970, %v2192
        %v2289 = vadd.f32 %v1971, %v2241
        %v2290 = vadd.f32 %v1972, %v2145
        %v2291 = vadd.f32 %v1973, %v2194
        %v2292 = vadd.f32 %v1974, %v2243
        %v2293 = vld [vmem:[%s1] sm:$0xf]
        %v2294 = vld [vmem:[%s1 + $0x4] sm:$0xf]
        %v2295 = vld [vmem:[%s1 + $0x8] sm:$0xf]
        %v2296 = vld [vmem:[%s1 + $0xc] sm:$0xf]
        %v2297 = vld [vmem:[%s1 + $0x10] sm:$0xf]
        %v2298 = vld [vmem:[%s1 + $0x14] sm:$0xf]
        %v2299 = vld [vmem:[%s1 + $0x18] sm:$0xf]
        %v2300 = vld [vmem:[%s1 + $0x1c] sm:$0xf]
        %v2301 = vld [vmem:[%s1 + $0x20] sm:$0xf]
        %v2302 = vld [vmem:[%s1 + $0x24] sm:$0xf]
        %v2303 = vld [vmem:[%s1 + $0x28] sm:$0xf]
        %v2304 = vld [vmem:[%s1 + $0x2c] sm:$0xf]
        %v2305 = vld [vmem:[%s1 + $0x30] sm:$0xf]
        %v2306 = vld [vmem:[%s1 + $0x34] sm:$0xf]
        %v2307 = vld [vmem:[%s1 + $0x38] sm:$0xf]
        %v2308 = vld [vmem:[%s1 + $0x3c] sm:$0xf]
        %v2309 = vld [vmem:[%s248] sm:$0x3f]
        %v2326 = vunpack.c.l.b16 %v2293
        %v2327 = vunpack.c.l.b16 %v2294
        %v2328 = vunpack.c.l.b16 %v2295
        %v2329 = vunpack.c.l.b16 %v2296
        %v2330 = vunpack.c.l.b16 %v2297
        %v2331 = vunpack.c.l.b16 %v2298
        %v2332 = vunpack.c.l.b16 %v2299
        %v2333 = vunpack.c.l.b16 %v2300
        %v2334 = vunpack.c.l.b16 %v2301
        %v2335 = vunpack.c.l.b16 %v2302
        %v2336 = vunpack.c.l.b16 %v2303
        %v2337 = vunpack.c.l.b16 %v2304
        %v2338 = vunpack.c.l.b16 %v2305
        %v2339 = vunpack.c.l.b16 %v2306
        %v2340 = vunpack.c.l.b16 %v2307
        %v2341 = vunpack.c.l.b16 %v2308
        %v2342 = vpack.c.b16 %v2327, %v2326
        %v2343 = vpack.c.b16 %v2329, %v2328
        %v2344 = vpack.c.b16 %v2331, %v2330
        %v2345 = vpack.c.b16 %v2333, %v2332
        %v2346 = vpack.c.b16 %v2335, %v2334
        %v2347 = vpack.c.b16 %v2337, %v2336
        %v2348 = vpack.c.b16 %v2339, %v2338
        %v2349 = vpack.c.b16 %v2341, %v2340
        %2350 = vrot.lane.b32.xlu0 %v2342, 100
        %v2351 = vpop.permute.xlu0 %2350
        %2352 = vrot.lane.b32.xlu0 %v2343, 100
        %v2353 = vpop.permute.xlu0 %2352
        %2354 = vrot.lane.b32.xlu0 %v2344, 100
        %v2355 = vpop.permute.xlu0 %2354
        %2356 = vrot.lane.b32.xlu0 %v2345, 100
        %v2357 = vpop.permute.xlu0 %2356
        %2358 = vrot.lane.b32.xlu0 %v2346, 100
        %v2359 = vpop.permute.xlu0 %2358
        %2360 = vrot.lane.b32.xlu0 %v2347, 100
        %v2361 = vpop.permute.xlu0 %2360
        %2362 = vrot.lane.b32.xlu0 %v2348, 100
        %v2363 = vpop.permute.xlu0 %2362
        %2364 = vrot.lane.b32.xlu0 %v2349, 100
        %v2365 = vpop.permute.xlu0 %2364
        %2367 = vst [vmem:[#allocation1] ss:$4 sm:$0xff] %v2309
        %v2368 = vld.sshfl [vmem:[#allocation1] sm:$0xff pattern:$0x73625140]
        %v2370 = vld.sshfl [vmem:[#allocation1 + $0x8] sm:$0xff pattern:$0x73625140]
        %v2372 = vld.sshfl [vmem:[#allocation1 + $0x10] sm:$0xff pattern:$0x73625140]
        %2374 = vrot.lane.b32.xlu0 %v2368, 91
        %v2375 = vpop.permute.xlu0 %2374
        %2376 = vrot.lane.b32.xlu0 %v2370, 91
        %v2377 = vpop.permute.xlu0 %2376
        %2378 = vrot.lane.b32.xlu0 %v2372, 91
        %v2379 = vpop.permute.xlu0 %2378
        %vm2380 = vcmask 744448
        %v2381 = vsel %vm2380, %v2375, %v2377
        %v2382 = vsel %vm2380, %v2377, %v2379
        %v2384 = vsel %vm340, %v2351, 0
        %v2387 = vsel %vm340, %v2353, 0
        %v2390 = vsel %vm340, %v2355, 0
        %v2393 = vsel %vm340, %v2357, 0
        %v2396 = vsel %vm340, %v2359, 0
        %v2399 = vsel %vm340, %v2361, 0
        %v2402 = vsel %vm340, %v2363, 0
        %v2405 = vsel %vm340, %v2365, 0
        %v2408 = vsel %vm365, %v2381, 0
        %v2411 = vsel %vm365, %v2382, 0
        %v2414 = vsel %vm365, %v2379, 0
        %2416 = vmatpush.bf16.msra.mxu0 0
        %2417 = vmatpush.bf16.msra.mxu0 0
        %2418 = vmatpush.bf16.msra.mxu0 0
        %2419 = vmatpush.bf16.msra.mxu0 0
        %2420 = vmatpush.bf16.msra.mxu0 0
        %2421 = vmatpush.bf16.msra.mxu0 0
        %2422 = vmatpush.bf16.msra.mxu0 0
        %2423 = vmatpush.bf16.msra.mxu0 %v2408
        %2424 = vmatmul.bf16.gmra.mxu0 %v2384
        %v2425 = vpop.f32.mrf.mxu0
        %v2426 = vadd.f32 0.0, %v2425
        %v2427 = vpop.f32.mrf.mxu0
        %v2428 = vadd.f32 0.0, %v2427
        %2429 = vmatmul.bf16.gmra.mxu0 %v2387
        %v2430 = vpop.f32.mrf.mxu0
        %v2431 = vadd.f32 0.0, %v2430
        %v2432 = vpop.f32.mrf.mxu0
        %v2433 = vadd.f32 0.0, %v2432
        %2434 = vmatmul.bf16.gmra.mxu0 %v2390
        %v2435 = vpop.f32.mrf.mxu0
        %v2436 = vadd.f32 0.0, %v2435
        %v2437 = vpop.f32.mrf.mxu0
        %v2438 = vadd.f32 0.0, %v2437
        %2439 = vmatmul.bf16.gmra.mxu0 %v2393
        %v2440 = vpop.f32.mrf.mxu0
        %v2441 = vadd.f32 0.0, %v2440
        %v2442 = vpop.f32.mrf.mxu0
        %v2443 = vadd.f32 0.0, %v2442
        %2444 = vmatmul.bf16.gmra.mxu0 %v2396
        %v2445 = vpop.f32.mrf.mxu0
        %v2446 = vadd.f32 0.0, %v2445
        %v2447 = vpop.f32.mrf.mxu0
        %v2448 = vadd.f32 0.0, %v2447
        %2449 = vmatmul.bf16.gmra.mxu0 %v2399
        %v2450 = vpop.f32.mrf.mxu0
        %v2451 = vadd.f32 0.0, %v2450
        %v2452 = vpop.f32.mrf.mxu0
        %v2453 = vadd.f32 0.0, %v2452
        %2454 = vmatmul.bf16.gmra.mxu0 %v2402
        %v2455 = vpop.f32.mrf.mxu0
        %v2456 = vadd.f32 0.0, %v2455
        %v2457 = vpop.f32.mrf.mxu0
        %v2458 = vadd.f32 0.0, %v2457
        %2459 = vmatmul.bf16.gmra.mxu0 %v2405
        %v2460 = vpop.f32.mrf.mxu0
        %v2461 = vadd.f32 0.0, %v2460
        %v2462 = vpop.f32.mrf.mxu0
        %v2463 = vadd.f32 0.0, %v2462
        %2464 = vdwg.mxu0
        %2465 = vmatpush.bf16.msra.mxu0 0
        %2466 = vmatpush.bf16.msra.mxu0 0
        %2467 = vmatpush.bf16.msra.mxu0 0
        %2468 = vmatpush.bf16.msra.mxu0 0
        %2469 = vmatpush.bf16.msra.mxu0 0
        %2470 = vmatpush.bf16.msra.mxu0 0
        %2471 = vmatpush.bf16.msra.mxu0 0
        %2472 = vmatpush.bf16.msra.mxu0 %v2411
        %2473 = vmatmul.bf16.gmra.mxu0 %v2384
        %v2474 = vpop.f32.mrf.mxu0
        %v2475 = vadd.f32 0.0, %v2474
        %v2476 = vpop.f32.mrf.mxu0
        %v2477 = vadd.f32 0.0, %v2476
        %2478 = vmatmul.bf16.gmra.mxu0 %v2387
        %v2479 = vpop.f32.mrf.mxu0
        %v2480 = vadd.f32 0.0, %v2479
        %v2481 = vpop.f32.mrf.mxu0
        %v2482 = vadd.f32 0.0, %v2481
        %2483 = vmatmul.bf16.gmra.mxu0 %v2390
        %v2484 = vpop.f32.mrf.mxu0
        %v2485 = vadd.f32 0.0, %v2484
        %v2486 = vpop.f32.mrf.mxu0
        %v2487 = vadd.f32 0.0, %v2486
        %2488 = vmatmul.bf16.gmra.mxu0 %v2393
        %v2489 = vpop.f32.mrf.mxu0
        %v2490 = vadd.f32 0.0, %v2489
        %v2491 = vpop.f32.mrf.mxu0
        %v2492 = vadd.f32 0.0, %v2491
        %2493 = vmatmul.bf16.gmra.mxu0 %v2396
        %v2494 = vpop.f32.mrf.mxu0
        %v2495 = vadd.f32 0.0, %v2494
        %v2496 = vpop.f32.mrf.mxu0
        %v2497 = vadd.f32 0.0, %v2496
        %2498 = vmatmul.bf16.gmra.mxu0 %v2399
        %v2499 = vpop.f32.mrf.mxu0
        %v2500 = vadd.f32 0.0, %v2499
        %v2501 = vpop.f32.mrf.mxu0
        %v2502 = vadd.f32 0.0, %v2501
        %2503 = vmatmul.bf16.gmra.mxu0 %v2402
        %v2504 = vpop.f32.mrf.mxu0
        %v2505 = vadd.f32 0.0, %v2504
        %v2506 = vpop.f32.mrf.mxu0
        %v2507 = vadd.f32 0.0, %v2506
        %2508 = vmatmul.bf16.gmra.mxu0 %v2405
        %v2509 = vpop.f32.mrf.mxu0
        %v2510 = vadd.f32 0.0, %v2509
        %v2511 = vpop.f32.mrf.mxu0
        %v2512 = vadd.f32 0.0, %v2511
        %2513 = vdwg.mxu0
        %2514 = vmatpush.bf16.msra.mxu0 0
        %2515 = vmatpush.bf16.msra.mxu0 0
        %2516 = vmatpush.bf16.msra.mxu0 0
        %2517 = vmatpush.bf16.msra.mxu0 0
        %2518 = vmatpush.bf16.msra.mxu0 0
        %2519 = vmatpush.bf16.msra.mxu0 0
        %2520 = vmatpush.bf16.msra.mxu0 0
        %2521 = vmatpush.bf16.msra.mxu0 %v2414
        %2522 = vmatmul.bf16.gmra.mxu0 %v2384
        %v2523 = vpop.f32.mrf.mxu0
        %v2524 = vadd.f32 0.0, %v2523
        %v2525 = vpop.f32.mrf.mxu0
        %v2526 = vadd.f32 0.0, %v2525
        %2527 = vmatmul.bf16.gmra.mxu0 %v2387
        %v2528 = vpop.f32.mrf.mxu0
        %v2529 = vadd.f32 0.0, %v2528
        %v2530 = vpop.f32.mrf.mxu0
        %v2531 = vadd.f32 0.0, %v2530
        %2532 = vmatmul.bf16.gmra.mxu0 %v2390
        %v2533 = vpop.f32.mrf.mxu0
        %v2534 = vadd.f32 0.0, %v2533
        %v2535 = vpop.f32.mrf.mxu0
        %v2536 = vadd.f32 0.0, %v2535
        %2537 = vmatmul.bf16.gmra.mxu0 %v2393
        %v2538 = vpop.f32.mrf.mxu0
        %v2539 = vadd.f32 0.0, %v2538
        %v2540 = vpop.f32.mrf.mxu0
        %v2541 = vadd.f32 0.0, %v2540
        %2542 = vmatmul.bf16.gmra.mxu0 %v2396
        %v2543 = vpop.f32.mrf.mxu0
        %v2544 = vadd.f32 0.0, %v2543
        %v2545 = vpop.f32.mrf.mxu0
        %v2546 = vadd.f32 0.0, %v2545
        %2547 = vmatmul.bf16.gmra.mxu0 %v2399
        %v2548 = vpop.f32.mrf.mxu0
        %v2549 = vadd.f32 0.0, %v2548
        %v2550 = vpop.f32.mrf.mxu0
        %v2551 = vadd.f32 0.0, %v2550
        %2552 = vmatmul.bf16.gmra.mxu0 %v2402
        %v2553 = vpop.f32.mrf.mxu0
        %v2554 = vadd.f32 0.0, %v2553
        %v2555 = vpop.f32.mrf.mxu0
        %v2556 = vadd.f32 0.0, %v2555
        %2557 = vmatmul.bf16.gmra.mxu0 %v2405
        %v2558 = vpop.f32.mrf.mxu0
        %v2559 = vadd.f32 0.0, %v2558
        %v2560 = vpop.f32.mrf.mxu0
        %v2561 = vadd.f32 0.0, %v2560
        %2562 = vdwg.mxu0
        %v2563 = vadd.f32 %v2245, %v2426
        %v2564 = vadd.f32 %v2246, %v2475
        %v2565 = vadd.f32 %v2247, %v2524
        %v2566 = vadd.f32 %v2248, %v2428
        %v2567 = vadd.f32 %v2249, %v2477
        %v2568 = vadd.f32 %v2250, %v2526
        %v2569 = vadd.f32 %v2251, %v2431
        %v2570 = vadd.f32 %v2252, %v2480
        %v2571 = vadd.f32 %v2253, %v2529
        %v2572 = vadd.f32 %v2254, %v2433
        %v2573 = vadd.f32 %v2255, %v2482
        %v2574 = vadd.f32 %v2256, %v2531
        %v2575 = vadd.f32 %v2257, %v2436
        %v2576 = vadd.f32 %v2258, %v2485
        %v2577 = vadd.f32 %v2259, %v2534
        %v2578 = vadd.f32 %v2260, %v2438
        %v2579 = vadd.f32 %v2261, %v2487
        %v2580 = vadd.f32 %v2262, %v2536
        %v2581 = vadd.f32 %v2263, %v2441
        %v2582 = vadd.f32 %v2264, %v2490
        %v2583 = vadd.f32 %v2265, %v2539
        %v2584 = vadd.f32 %v2266, %v2443
        %v2585 = vadd.f32 %v2267, %v2492
        %v2586 = vadd.f32 %v2268, %v2541
        %v2587 = vadd.f32 %v2269, %v2446
        %v2588 = vadd.f32 %v2270, %v2495
        %v2589 = vadd.f32 %v2271, %v2544
        %v2590 = vadd.f32 %v2272, %v2448
        %v2591 = vadd.f32 %v2273, %v2497
        %v2592 = vadd.f32 %v2274, %v2546
        %v2593 = vadd.f32 %v2275, %v2451
        %v2594 = vadd.f32 %v2276, %v2500
        %v2595 = vadd.f32 %v2277, %v2549
        %v2596 = vadd.f32 %v2278, %v2453
        %v2597 = vadd.f32 %v2279, %v2502
        %v2598 = vadd.f32 %v2280, %v2551
        %v2599 = vadd.f32 %v2281, %v2456
        %v2600 = vadd.f32 %v2282, %v2505
        %v2601 = vadd.f32 %v2283, %v2554
        %v2602 = vadd.f32 %v2284, %v2458
        %v2603 = vadd.f32 %v2285, %v2507
        %v2604 = vadd.f32 %v2286, %v2556
        %v2605 = vadd.f32 %v2287, %v2461
        %v2606 = vadd.f32 %v2288, %v2510
        %v2607 = vadd.f32 %v2289, %v2559
        %v2608 = vadd.f32 %v2290, %v2463
        %v2609 = vadd.f32 %v2291, %v2512
        %v2610 = vadd.f32 %v2292, %v2561
        %v2611 = vld [vmem:[%s1] sm:$0xf]
        %v2612 = vld [vmem:[%s1 + $0x4] sm:$0xf]
        %v2613 = vld [vmem:[%s1 + $0x8] sm:$0xf]
        %v2614 = vld [vmem:[%s1 + $0xc] sm:$0xf]
        %v2615 = vld [vmem:[%s1 + $0x10] sm:$0xf]
        %v2616 = vld [vmem:[%s1 + $0x14] sm:$0xf]
        %v2617 = vld [vmem:[%s1 + $0x18] sm:$0xf]
        %v2618 = vld [vmem:[%s1 + $0x1c] sm:$0xf]
        %v2619 = vld [vmem:[%s1 + $0x20] sm:$0xf]
        %v2620 = vld [vmem:[%s1 + $0x24] sm:$0xf]
        %v2621 = vld [vmem:[%s1 + $0x28] sm:$0xf]
        %v2622 = vld [vmem:[%s1 + $0x2c] sm:$0xf]
        %v2623 = vld [vmem:[%s1 + $0x30] sm:$0xf]
        %v2624 = vld [vmem:[%s1 + $0x34] sm:$0xf]
        %v2625 = vld [vmem:[%s1 + $0x38] sm:$0xf]
        %v2626 = vld [vmem:[%s1 + $0x3c] sm:$0xf]
        %v2627 = vld [vmem:[%s248] sm:$0x3f]
        %v2644 = vunpack.c.l.b16 %v2611
        %v2645 = vunpack.c.l.b16 %v2612
        %v2646 = vunpack.c.l.b16 %v2613
        %v2647 = vunpack.c.l.b16 %v2614
        %v2648 = vunpack.c.l.b16 %v2615
        %v2649 = vunpack.c.l.b16 %v2616
        %v2650 = vunpack.c.l.b16 %v2617
        %v2651 = vunpack.c.l.b16 %v2618
        %v2652 = vunpack.c.l.b16 %v2619
        %v2653 = vunpack.c.l.b16 %v2620
        %v2654 = vunpack.c.l.b16 %v2621
        %v2655 = vunpack.c.l.b16 %v2622
        %v2656 = vunpack.c.l.b16 %v2623
        %v2657 = vunpack.c.l.b16 %v2624
        %v2658 = vunpack.c.l.b16 %v2625
        %v2659 = vunpack.c.l.b16 %v2626
        %v2660 = vpack.c.b16 %v2645, %v2644
        %v2661 = vpack.c.b16 %v2647, %v2646
        %v2662 = vpack.c.b16 %v2649, %v2648
        %v2663 = vpack.c.b16 %v2651, %v2650
        %v2664 = vpack.c.b16 %v2653, %v2652
        %v2665 = vpack.c.b16 %v2655, %v2654
        %v2666 = vpack.c.b16 %v2657, %v2656
        %v2667 = vpack.c.b16 %v2659, %v2658
        %2668 = vrot.lane.b32.xlu0 %v2660, 96
        %v2669 = vpop.permute.xlu0 %2668
        %2670 = vrot.lane.b32.xlu0 %v2661, 96
        %v2671 = vpop.permute.xlu0 %2670
        %2672 = vrot.lane.b32.xlu0 %v2662, 96
        %v2673 = vpop.permute.xlu0 %2672
        %2674 = vrot.lane.b32.xlu0 %v2663, 96
        %v2675 = vpop.permute.xlu0 %2674
        %2676 = vrot.lane.b32.xlu0 %v2664, 96
        %v2677 = vpop.permute.xlu0 %2676
        %2678 = vrot.lane.b32.xlu0 %v2665, 96
        %v2679 = vpop.permute.xlu0 %2678
        %2680 = vrot.lane.b32.xlu0 %v2666, 96
        %v2681 = vpop.permute.xlu0 %2680
        %2682 = vrot.lane.b32.xlu0 %v2667, 96
        %v2683 = vpop.permute.xlu0 %2682
        %2685 = vst [vmem:[#allocation1] ss:$4 sm:$0xff] %v2627
        %v2686 = vld.sshfl [vmem:[#allocation1] sm:$0xff pattern:$0x73625140]
        %v2688 = vld.sshfl [vmem:[#allocation1 + $0x8] sm:$0xff pattern:$0x73625140]
        %v2690 = vld.sshfl [vmem:[#allocation1 + $0x10] sm:$0xff pattern:$0x73625140]
        %2692 = vrot.lane.b32.xlu0 %v2686, 90
        %v2693 = vpop.permute.xlu0 %2692
        %2694 = vrot.lane.b32.xlu0 %v2688, 90
        %v2695 = vpop.permute.xlu0 %2694
        %2696 = vrot.lane.b32.xlu0 %v2690, 90
        %v2697 = vpop.permute.xlu0 %2696
        %vm2698 = vcmask 736256
        %v2699 = vsel %vm2698, %v2693, %v2695
        %v2700 = vsel %vm2698, %v2695, %v2697
        %v2702 = vsel %vm340, %v2669, 0
        %v2705 = vsel %vm340, %v2671, 0
        %v2708 = vsel %vm340, %v2673, 0
        %v2711 = vsel %vm340, %v2675, 0
        %v2714 = vsel %vm340, %v2677, 0
        %v2717 = vsel %vm340, %v2679, 0
        %v2720 = vsel %vm340, %v2681, 0
        %v2723 = vsel %vm340, %v2683, 0
        %v2726 = vsel %vm365, %v2699, 0
        %v2729 = vsel %vm365, %v2700, 0
        %v2732 = vsel %vm365, %v2697, 0
        %2734 = vmatpush.bf16.msra.mxu0 0
        %2735 = vmatpush.bf16.msra.mxu0 0
        %2736 = vmatpush.bf16.msra.mxu0 0
        %2737 = vmatpush.bf16.msra.mxu0 0
        %2738 = vmatpush.bf16.msra.mxu0 0
        %2739 = vmatpush.bf16.msra.mxu0 0
        %2740 = vmatpush.bf16.msra.mxu0 0
        %2741 = vmatpush.bf16.msra.mxu0 %v2726
        %2742 = vmatmul.bf16.gmra.mxu0 %v2702
        %v2743 = vpop.f32.mrf.mxu0
        %v2744 = vadd.f32 0.0, %v2743
        %v2745 = vpop.f32.mrf.mxu0
        %v2746 = vadd.f32 0.0, %v2745
        %2747 = vmatmul.bf16.gmra.mxu0 %v2705
        %v2748 = vpop.f32.mrf.mxu0
        %v2749 = vadd.f32 0.0, %v2748
        %v2750 = vpop.f32.mrf.mxu0
        %v2751 = vadd.f32 0.0, %v2750
        %2752 = vmatmul.bf16.gmra.mxu0 %v2708
        %v2753 = vpop.f32.mrf.mxu0
        %v2754 = vadd.f32 0.0, %v2753
        %v2755 = vpop.f32.mrf.mxu0
        %v2756 = vadd.f32 0.0, %v2755
        %2757 = vmatmul.bf16.gmra.mxu0 %v2711
        %v2758 = vpop.f32.mrf.mxu0
        %v2759 = vadd.f32 0.0, %v2758
        %v2760 = vpop.f32.mrf.mxu0
        %v2761 = vadd.f32 0.0, %v2760
        %2762 = vmatmul.bf16.gmra.mxu0 %v2714
        %v2763 = vpop.f32.mrf.mxu0
        %v2764 = vadd.f32 0.0, %v2763
        %v2765 = vpop.f32.mrf.mxu0
        %v2766 = vadd.f32 0.0, %v2765
        %2767 = vmatmul.bf16.gmra.mxu0 %v2717
        %v2768 = vpop.f32.mrf.mxu0
        %v2769 = vadd.f32 0.0, %v2768
        %v2770 = vpop.f32.mrf.mxu0
        %v2771 = vadd.f32 0.0, %v2770
        %2772 = vmatmul.bf16.gmra.mxu0 %v2720
        %v2773 = vpop.f32.mrf.mxu0
        %v2774 = vadd.f32 0.0, %v2773
        %v2775 = vpop.f32.mrf.mxu0
        %v2776 = vadd.f32 0.0, %v2775
        %2777 = vmatmul.bf16.gmra.mxu0 %v2723
        %v2778 = vpop.f32.mrf.mxu0
        %v2779 = vadd.f32 0.0, %v2778
        %v2780 = vpop.f32.mrf.mxu0
        %v2781 = vadd.f32 0.0, %v2780
        %2782 = vdwg.mxu0
        %2783 = vmatpush.bf16.msra.mxu0 0
        %2784 = vmatpush.bf16.msra.mxu0 0
        %2785 = vmatpush.bf16.msra.mxu0 0
        %2786 = vmatpush.bf16.msra.mxu0 0
        %2787 = vmatpush.bf16.msra.mxu0 0
        %2788 = vmatpush.bf16.msra.mxu0 0
        %2789 = vmatpush.bf16.msra.mxu0 0
        %2790 = vmatpush.bf16.msra.mxu0 %v2729
        %2791 = vmatmul.bf16.gmra.mxu0 %v2702
        %v2792 = vpop.f32.mrf.mxu0
        %v2793 = vadd.f32 0.0, %v2792
        %v2794 = vpop.f32.mrf.mxu0
        %v2795 = vadd.f32 0.0, %v2794
        %2796 = vmatmul.bf16.gmra.mxu0 %v2705
        %v2797 = vpop.f32.mrf.mxu0
        %v2798 = vadd.f32 0.0, %v2797
        %v2799 = vpop.f32.mrf.mxu0
        %v2800 = vadd.f32 0.0, %v2799
        %2801 = vmatmul.bf16.gmra.mxu0 %v2708
        %v2802 = vpop.f32.mrf.mxu0
        %v2803 = vadd.f32 0.0, %v2802
        %v2804 = vpop.f32.mrf.mxu0
        %v2805 = vadd.f32 0.0, %v2804
        %2806 = vmatmul.bf16.gmra.mxu0 %v2711
        %v2807 = vpop.f32.mrf.mxu0
        %v2808 = vadd.f32 0.0, %v2807
        %v2809 = vpop.f32.mrf.mxu0
        %v2810 = vadd.f32 0.0, %v2809
        %2811 = vmatmul.bf16.gmra.mxu0 %v2714
        %v2812 = vpop.f32.mrf.mxu0
        %v2813 = vadd.f32 0.0, %v2812
        %v2814 = vpop.f32.mrf.mxu0
        %v2815 = vadd.f32 0.0, %v2814
        %2816 = vmatmul.bf16.gmra.mxu0 %v2717
        %v2817 = vpop.f32.mrf.mxu0
        %v2818 = vadd.f32 0.0, %v2817
        %v2819 = vpop.f32.mrf.mxu0
        %v2820 = vadd.f32 0.0, %v2819
        %2821 = vmatmul.bf16.gmra.mxu0 %v2720
        %v2822 = vpop.f32.mrf.mxu0
        %v2823 = vadd.f32 0.0, %v2822
        %v2824 = vpop.f32.mrf.mxu0
        %v2825 = vadd.f32 0.0, %v2824
        %2826 = vmatmul.bf16.gmra.mxu0 %v2723
        %v2827 = vpop.f32.mrf.mxu0
        %v2828 = vadd.f32 0.0, %v2827
        %v2829 = vpop.f32.mrf.mxu0
        %v2830 = vadd.f32 0.0, %v2829
        %2831 = vdwg.mxu0
        %2832 = vmatpush.bf16.msra.mxu0 0
        %2833 = vmatpush.bf16.msra.mxu0 0
        %2834 = vmatpush.bf16.msra.mxu0 0
        %2835 = vmatpush.bf16.msra.mxu0 0
        %2836 = vmatpush.bf16.msra.mxu0 0
        %2837 = vmatpush.bf16.msra.mxu0 0
        %2838 = vmatpush.bf16.msra.mxu0 0
        %2839 = vmatpush.bf16.msra.mxu0 %v2732
        %2840 = vmatmul.bf16.gmra.mxu0 %v2702
        %v2841 = vpop.f32.mrf.mxu0
        %v2842 = vadd.f32 0.0, %v2841
        %v2843 = vpop.f32.mrf.mxu0
        %v2844 = vadd.f32 0.0, %v2843
        %2845 = vmatmul.bf16.gmra.mxu0 %v2705
        %v2846 = vpop.f32.mrf.mxu0
        %v2847 = vadd.f32 0.0, %v2846
        %v2848 = vpop.f32.mrf.mxu0
        %v2849 = vadd.f32 0.0, %v2848
        %2850 = vmatmul.bf16.gmra.mxu0 %v2708
        %v2851 = vpop.f32.mrf.mxu0
        %v2852 = vadd.f32 0.0, %v2851
        %v2853 = vpop.f32.mrf.mxu0
        %v2854 = vadd.f32 0.0, %v2853
        %2855 = vmatmul.bf16.gmra.mxu0 %v2711
        %v2856 = vpop.f32.mrf.mxu0
        %v2857 = vadd.f32 0.0, %v2856
        %v2858 = vpop.f32.mrf.mxu0
        %v2859 = vadd.f32 0.0, %v2858
        %2860 = vmatmul.bf16.gmra.mxu0 %v2714
        %v2861 = vpop.f32.mrf.mxu0
        %v2862 = vadd.f32 0.0, %v2861
        %v2863 = vpop.f32.mrf.mxu0
        %v2864 = vadd.f32 0.0, %v2863
        %2865 = vmatmul.bf16.gmra.mxu0 %v2717
        %v2866 = vpop.f32.mrf.mxu0
        %v2867 = vadd.f32 0.0, %v2866
        %v2868 = vpop.f32.mrf.mxu0
        %v2869 = vadd.f32 0.0, %v2868
        %2870 = vmatmul.bf16.gmra.mxu0 %v2720
        %v2871 = vpop.f32.mrf.mxu0
        %v2872 = vadd.f32 0.0, %v2871
        %v2873 = vpop.f32.mrf.mxu0
        %v2874 = vadd.f32 0.0, %v2873
        %2875 = vmatmul.bf16.gmra.mxu0 %v2723
        %v2876 = vpop.f32.mrf.mxu0
        %v2877 = vadd.f32 0.0, %v2876
        %v2878 = vpop.f32.mrf.mxu0
        %v2879 = vadd.f32 0.0, %v2878
        %2880 = vdwg.mxu0
        %v2881 = vadd.f32 %v2563, %v2744
        %v2882 = vadd.f32 %v2564, %v2793
        %v2883 = vadd.f32 %v2565, %v2842
        %v2884 = vadd.f32 %v2566, %v2746
        %v2885 = vadd.f32 %v2567, %v2795
        %v2886 = vadd.f32 %v2568, %v2844
        %v2887 = vadd.f32 %v2569, %v2749
        %v2888 = vadd.f32 %v2570, %v2798
        %v2889 = vadd.f32 %v2571, %v2847
        %v2890 = vadd.f32 %v2572, %v2751
        %v2891 = vadd.f32 %v2573, %v2800
        %v2892 = vadd.f32 %v2574, %v2849
        %v2893 = vadd.f32 %v2575, %v2754
        %v2894 = vadd.f32 %v2576, %v2803
        %v2895 = vadd.f32 %v2577, %v2852
        %v2896 = vadd.f32 %v2578, %v2756
        %v2897 = vadd.f32 %v2579, %v2805
        %v2898 = vadd.f32 %v2580, %v2854
        %v2899 = vadd.f32 %v2581, %v2759
        %v2900 = vadd.f32 %v2582, %v2808
        %v2901 = vadd.f32 %v2583, %v2857
        %v2902 = vadd.f32 %v2584, %v2761
        %v2903 = vadd.f32 %v2585, %v2810
        %v2904 = vadd.f32 %v2586, %v2859
        %v2905 = vadd.f32 %v2587, %v2764
        %v2906 = vadd.f32 %v2588, %v2813
        %v2907 = vadd.f32 %v2589, %v2862
        %v2908 = vadd.f32 %v2590, %v2766
        %v2909 = vadd.f32 %v2591, %v2815
        %v2910 = vadd.f32 %v2592, %v2864
        %v2911 = vadd.f32 %v2593, %v2769
        %v2912 = vadd.f32 %v2594, %v2818
        %v2913 = vadd.f32 %v2595, %v2867
        %v2914 = vadd.f32 %v2596, %v2771
        %v2915 = vadd.f32 %v2597, %v2820
        %v2916 = vadd.f32 %v2598, %v2869
        %v2917 = vadd.f32 %v2599, %v2774
        %v2918 = vadd.f32 %v2600, %v2823
        %v2919 = vadd.f32 %v2601, %v2872
        %v2920 = vadd.f32 %v2602, %v2776
        %v2921 = vadd.f32 %v2603, %v2825
        %v2922 = vadd.f32 %v2604, %v2874
        %v2923 = vadd.f32 %v2605, %v2779
        %v2924 = vadd.f32 %v2606, %v2828
        %v2925 = vadd.f32 %v2607, %v2877
        %v2926 = vadd.f32 %v2608, %v2781
        %v2927 = vadd.f32 %v2609, %v2830
        %v2928 = vadd.f32 %v2610, %v2879
        %v2929 = vld [vmem:[%s2] sm:$0xff]
        %v2930 = vld [vmem:[%s2 + $0x8] sm:$0xff]
        %v2931 = vld [vmem:[%s2 + $0x10] sm:$0xff]
        %v2932 = vld [vmem:[%s2 + $0x18] sm:$0xff]
        %v2933 = vld [vmem:[%s2 + $0x20] sm:$0xff]
        %v2934 = vld [vmem:[%s2 + $0x28] sm:$0xff]
        %v2935 = vld [vmem:[%s2 + $0x30] sm:$0xff]
        %v2936 = vld [vmem:[%s2 + $0x38] sm:$0xff]
        %v2937 = vld [vmem:[%s2 + $0x40] sm:$0xff]
        %v2938 = vld [vmem:[%s2 + $0x48] sm:$0xff]
        %v2939 = vld [vmem:[%s2 + $0x50] sm:$0xff]
        %v2940 = vld [vmem:[%s2 + $0x58] sm:$0xff]
        %v2941 = vld [vmem:[%s2 + $0x60] sm:$0xff]
        %v2942 = vld [vmem:[%s2 + $0x68] sm:$0xff]
        %v2943 = vld [vmem:[%s2 + $0x70] sm:$0xff]
        %v2944 = vld [vmem:[%s2 + $0x78] sm:$0xff]
        %2946 = vset.pattern.permute.xlu0 0
        %2947 = vperm.xlu0 %2946, %v2929
        %v2948 = vpop.permute.xlu0 %2947
        %2951 = vset.pattern.permute.xlu0 0
        %2952 = vperm.xlu0 %2951, %v2930
        %v2953 = vpop.permute.xlu0 %2952
        %2956 = vset.pattern.permute.xlu0 0
        %2957 = vperm.xlu0 %2956, %v2931
        %v2958 = vpop.permute.xlu0 %2957
        %2961 = vset.pattern.permute.xlu0 0
        %2962 = vperm.xlu0 %2961, %v2932
        %v2963 = vpop.permute.xlu0 %2962
        %2966 = vset.pattern.permute.xlu0 0
        %2967 = vperm.xlu0 %2966, %v2933
        %v2968 = vpop.permute.xlu0 %2967
        %2971 = vset.pattern.permute.xlu0 0
        %2972 = vperm.xlu0 %2971, %v2934
        %v2973 = vpop.permute.xlu0 %2972
        %2976 = vset.pattern.permute.xlu0 0
        %2977 = vperm.xlu0 %2976, %v2935
        %v2978 = vpop.permute.xlu0 %2977
        %2981 = vset.pattern.permute.xlu0 0
        %2982 = vperm.xlu0 %2981, %v2936
        %v2983 = vpop.permute.xlu0 %2982
        %2986 = vset.pattern.permute.xlu0 0
        %2987 = vperm.xlu0 %2986, %v2937
        %v2988 = vpop.permute.xlu0 %2987
        %2991 = vset.pattern.permute.xlu0 0
        %2992 = vperm.xlu0 %2991, %v2938
        %v2993 = vpop.permute.xlu0 %2992
        %2996 = vset.pattern.permute.xlu0 0
        %2997 = vperm.xlu0 %2996, %v2939
        %v2998 = vpop.permute.xlu0 %2997
        %3001 = vset.pattern.permute.xlu0 0
        %3002 = vperm.xlu0 %3001, %v2940
        %v3003 = vpop.permute.xlu0 %3002
        %3006 = vset.pattern.permute.xlu0 0
        %3007 = vperm.xlu0 %3006, %v2941
        %v3008 = vpop.permute.xlu0 %3007
        %3011 = vset.pattern.permute.xlu0 0
        %3012 = vperm.xlu0 %3011, %v2942
        %v3013 = vpop.permute.xlu0 %3012
        %3016 = vset.pattern.permute.xlu0 0
        %3017 = vperm.xlu0 %3016, %v2943
        %v3018 = vpop.permute.xlu0 %3017
        %3021 = vset.pattern.permute.xlu0 0
        %3022 = vperm.xlu0 %3021, %v2944
        %v3023 = vpop.permute.xlu0 %3022
        %v3025 = vadd.f32 %v2881, %v2948
        %v3026 = vadd.f32 %v2882, %v2948
        %v3027 = vadd.f32 %v2883, %v2948
        %v3028 = vadd.f32 %v2884, %v2953
        %v3029 = vadd.f32 %v2885, %v2953
        %v3030 = vadd.f32 %v2886, %v2953
        %v3031 = vadd.f32 %v2887, %v2958
        %v3032 = vadd.f32 %v2888, %v2958
        %v3033 = vadd.f32 %v2889, %v2958
        %v3034 = vadd.f32 %v2890, %v2963
        %v3035 = vadd.f32 %v2891, %v2963
        %v3036 = vadd.f32 %v2892, %v2963
        %v3037 = vadd.f32 %v2893, %v2968
        %v3038 = vadd.f32 %v2894, %v2968
        %v3039 = vadd.f32 %v2895, %v2968
        %v3040 = vadd.f32 %v2896, %v2973
        %v3041 = vadd.f32 %v2897, %v2973
        %v3042 = vadd.f32 %v2898, %v2973
        %v3043 = vadd.f32 %v2899, %v2978
        %v3044 = vadd.f32 %v2900, %v2978
        %v3045 = vadd.f32 %v2901, %v2978
        %v3046 = vadd.f32 %v2902, %v2983
        %v3047 = vadd.f32 %v2903, %v2983
        %v3048 = vadd.f32 %v2904, %v2983
        %v3049 = vadd.f32 %v2905, %v2988
        %v3050 = vadd.f32 %v2906, %v2988
        %v3051 = vadd.f32 %v2907, %v2988
        %v3052 = vadd.f32 %v2908, %v2993
        %v3053 = vadd.f32 %v2909, %v2993
        %v3054 = vadd.f32 %v2910, %v2993
        %v3055 = vadd.f32 %v2911, %v2998
        %v3056 = vadd.f32 %v2912, %v2998
        %v3057 = vadd.f32 %v2913, %v2998
        %v3058 = vadd.f32 %v2914, %v3003
        %v3059 = vadd.f32 %v2915, %v3003
        %v3060 = vadd.f32 %v2916, %v3003
        %v3061 = vadd.f32 %v2917, %v3008
        %v3062 = vadd.f32 %v2918, %v3008
        %v3063 = vadd.f32 %v2919, %v3008
        %v3064 = vadd.f32 %v2920, %v3013
        %v3065 = vadd.f32 %v2921, %v3013
        %v3066 = vadd.f32 %v2922, %v3013
        %v3067 = vadd.f32 %v2923, %v3018
        %v3068 = vadd.f32 %v2924, %v3018
        %v3069 = vadd.f32 %v2925, %v3018
        %v3070 = vadd.f32 %v2926, %v3023
        %v3071 = vadd.f32 %v2927, %v3023
        %v3072 = vadd.f32 %v2928, %v3023
        %v3073 = vmax.f32 %v3025, 0.0
        %v3074 = vmax.f32 %v3026, 0.0
        %v3075 = vmax.f32 %v3027, 0.0
        %v3076 = vmax.f32 %v3028, 0.0
        %v3077 = vmax.f32 %v3029, 0.0
        %v3078 = vmax.f32 %v3030, 0.0
        %v3079 = vmax.f32 %v3031, 0.0
        %v3080 = vmax.f32 %v3032, 0.0
        %v3081 = vmax.f32 %v3033, 0.0
        %v3082 = vmax.f32 %v3034, 0.0
        %v3083 = vmax.f32 %v3035, 0.0
        %v3084 = vmax.f32 %v3036, 0.0
        %v3085 = vmax.f32 %v3037, 0.0
        %v3086 = vmax.f32 %v3038, 0.0
        %v3087 = vmax.f32 %v3039, 0.0
        %v3088 = vmax.f32 %v3040, 0.0
        %v3089 = vmax.f32 %v3041, 0.0
        %v3090 = vmax.f32 %v3042, 0.0
        %v3091 = vmax.f32 %v3043, 0.0
        %v3092 = vmax.f32 %v3044, 0.0
        %v3093 = vmax.f32 %v3045, 0.0
        %v3094 = vmax.f32 %v3046, 0.0
        %v3095 = vmax.f32 %v3047, 0.0
        %v3096 = vmax.f32 %v3048, 0.0
        %v3097 = vmax.f32 %v3049, 0.0
        %v3098 = vmax.f32 %v3050, 0.0
        %v3099 = vmax.f32 %v3051, 0.0
        %v3100 = vmax.f32 %v3052, 0.0
        %v3101 = vmax.f32 %v3053, 0.0
        %v3102 = vmax.f32 %v3054, 0.0
        %v3103 = vmax.f32 %v3055, 0.0
        %v3104 = vmax.f32 %v3056, 0.0
        %v3105 = vmax.f32 %v3057, 0.0
        %v3106 = vmax.f32 %v3058, 0.0
        %v3107 = vmax.f32 %v3059, 0.0
        %v3108 = vmax.f32 %v3060, 0.0
        %v3109 = vmax.f32 %v3061, 0.0
        %v3110 = vmax.f32 %v3062, 0.0
        %v3111 = vmax.f32 %v3063, 0.0
        %v3112 = vmax.f32 %v3064, 0.0
        %v3113 = vmax.f32 %v3065, 0.0
        %v3114 = vmax.f32 %v3066, 0.0
        %v3115 = vmax.f32 %v3067, 0.0
        %v3116 = vmax.f32 %v3068, 0.0
        %v3117 = vmax.f32 %v3069, 0.0
        %v3118 = vmax.f32 %v3070, 0.0
        %v3119 = vmax.f32 %v3071, 0.0
        %v3120 = vmax.f32 %v3072, 0.0
        %v3121 = vld [vmem:[%s5] sm:$0x7]
        %v3123 = vperm.slane %v3121, 0
        %v3124 = vperm.slane %v3121, 1
        %v3125 = vperm.slane %v3121, 2
        %v3129 = vmul.f32 %v3073, %v3123
        %v3130 = vmul.f32 %v3074, %v3124
        %v3131 = vmul.f32 %v3075, %v3125
        %v3132 = vmul.f32 %v3076, %v3123
        %v3133 = vmul.f32 %v3077, %v3124
        %v3134 = vmul.f32 %v3078, %v3125
        %v3135 = vmul.f32 %v3079, %v3123
        %v3136 = vmul.f32 %v3080, %v3124
        %v3137 = vmul.f32 %v3081, %v3125
        %v3138 = vmul.f32 %v3082, %v3123
        %v3139 = vmul.f32 %v3083, %v3124
        %v3140 = vmul.f32 %v3084, %v3125
        %v3141 = vmul.f32 %v3085, %v3123
        %v3142 = vmul.f32 %v3086, %v3124
        %v3143 = vmul.f32 %v3087, %v3125
        %v3144 = vmul.f32 %v3088, %v3123
        %v3145 = vmul.f32 %v3089, %v3124
        %v3146 = vmul.f32 %v3090, %v3125
        %v3147 = vmul.f32 %v3091, %v3123
        %v3148 = vmul.f32 %v3092, %v3124
        %v3149 = vmul.f32 %v3093, %v3125
        %v3150 = vmul.f32 %v3094, %v3123
        %v3151 = vmul.f32 %v3095, %v3124
        %v3152 = vmul.f32 %v3096, %v3125
        %v3153 = vmul.f32 %v3097, %v3123
        %v3154 = vmul.f32 %v3098, %v3124
        %v3155 = vmul.f32 %v3099, %v3125
        %v3156 = vmul.f32 %v3100, %v3123
        %v3157 = vmul.f32 %v3101, %v3124
        %v3158 = vmul.f32 %v3102, %v3125
        %v3159 = vmul.f32 %v3103, %v3123
        %v3160 = vmul.f32 %v3104, %v3124
        %v3161 = vmul.f32 %v3105, %v3125
        %v3162 = vmul.f32 %v3106, %v3123
        %v3163 = vmul.f32 %v3107, %v3124
        %v3164 = vmul.f32 %v3108, %v3125
        %v3165 = vmul.f32 %v3109, %v3123
        %v3166 = vmul.f32 %v3110, %v3124
        %v3167 = vmul.f32 %v3111, %v3125
        %v3168 = vmul.f32 %v3112, %v3123
        %v3169 = vmul.f32 %v3113, %v3124
        %v3170 = vmul.f32 %v3114, %v3125
        %v3171 = vmul.f32 %v3115, %v3123
        %v3172 = vmul.f32 %v3116, %v3124
        %v3173 = vmul.f32 %v3117, %v3125
        %v3174 = vmul.f32 %v3118, %v3123
        %v3175 = vmul.f32 %v3119, %v3124
        %v3176 = vmul.f32 %v3120, %v3125
        %v3177 = vadd.f32 %v3129, %v3130
        %vm3178 = vcmask 261120
        %v3179 = vsel %vm3178, %v3131, 0.0
        %v3180 = vadd.f32 %v3177, %v3179
        %3181 = vadd.xlane.f32.xlu0 %v3180
        %v3182 = vpop.xlane.xlu0 %3181
        %v3183 = vadd.f32 %v3132, %v3133
        %v3184 = vsel %vm3178, %v3134, 0.0
        %v3185 = vadd.f32 %v3183, %v3184
        %3186 = vadd.xlane.f32.xlu0 %v3185
        %v3187 = vpop.xlane.xlu0 %3186
        %v3188 = vadd.f32 %v3135, %v3136
        %v3189 = vsel %vm3178, %v3137, 0.0
        %v3190 = vadd.f32 %v3188, %v3189
        %3191 = vadd.xlane.f32.xlu0 %v3190
        %v3192 = vpop.xlane.xlu0 %3191
        %v3193 = vadd.f32 %v3138, %v3139
        %v3194 = vsel %vm3178, %v3140, 0.0
        %v3195 = vadd.f32 %v3193, %v3194
        %3196 = vadd.xlane.f32.xlu0 %v3195
        %v3197 = vpop.xlane.xlu0 %3196
        %v3198 = vadd.f32 %v3141, %v3142
        %v3199 = vsel %vm3178, %v3143, 0.0
        %v3200 = vadd.f32 %v3198, %v3199
        %3201 = vadd.xlane.f32.xlu0 %v3200
        %v3202 = vpop.xlane.xlu0 %3201
        %v3203 = vadd.f32 %v3144, %v3145
        %v3204 = vsel %vm3178, %v3146, 0.0
        %v3205 = vadd.f32 %v3203, %v3204
        %3206 = vadd.xlane.f32.xlu0 %v3205
        %v3207 = vpop.xlane.xlu0 %3206
        %v3208 = vadd.f32 %v3147, %v3148
        %v3209 = vsel %vm3178, %v3149, 0.0
        %v3210 = vadd.f32 %v3208, %v3209
        %3211 = vadd.xlane.f32.xlu0 %v3210
        %v3212 = vpop.xlane.xlu0 %3211
        %v3213 = vadd.f32 %v3150, %v3151
        %v3214 = vsel %vm3178, %v3152, 0.0
        %v3215 = vadd.f32 %v3213, %v3214
        %3216 = vadd.xlane.f32.xlu0 %v3215
        %v3217 = vpop.xlane.xlu0 %3216
        %v3218 = vadd.f32 %v3153, %v3154
        %v3219 = vsel %vm3178, %v3155, 0.0
        %v3220 = vadd.f32 %v3218, %v3219
        %3221 = vadd.xlane.f32.xlu0 %v3220
        %v3222 = vpop.xlane.xlu0 %3221
        %v3223 = vadd.f32 %v3156, %v3157
        %v3224 = vsel %vm3178, %v3158, 0.0
        %v3225 = vadd.f32 %v3223, %v3224
        %3226 = vadd.xlane.f32.xlu0 %v3225
        %v3227 = vpop.xlane.xlu0 %3226
        %v3228 = vadd.f32 %v3159, %v3160
        %v3229 = vsel %vm3178, %v3161, 0.0
        %v3230 = vadd.f32 %v3228, %v3229
        %3231 = vadd.xlane.f32.xlu0 %v3230
        %v3232 = vpop.xlane.xlu0 %3231
        %v3233 = vadd.f32 %v3162, %v3163
        %v3234 = vsel %vm3178, %v3164, 0.0
        %v3235 = vadd.f32 %v3233, %v3234
        %3236 = vadd.xlane.f32.xlu0 %v3235
        %v3237 = vpop.xlane.xlu0 %3236
        %v3238 = vadd.f32 %v3165, %v3166
        %v3239 = vsel %vm3178, %v3167, 0.0
        %v3240 = vadd.f32 %v3238, %v3239
        %3241 = vadd.xlane.f32.xlu0 %v3240
        %v3242 = vpop.xlane.xlu0 %3241
        %v3243 = vadd.f32 %v3168, %v3169
        %v3244 = vsel %vm3178, %v3170, 0.0
        %v3245 = vadd.f32 %v3243, %v3244
        %3246 = vadd.xlane.f32.xlu0 %v3245
        %v3247 = vpop.xlane.xlu0 %3246
        %v3248 = vadd.f32 %v3171, %v3172
        %v3249 = vsel %vm3178, %v3173, 0.0
        %v3250 = vadd.f32 %v3248, %v3249
        %3251 = vadd.xlane.f32.xlu0 %v3250
        %v3252 = vpop.xlane.xlu0 %3251
        %v3253 = vadd.f32 %v3174, %v3175
        %v3254 = vsel %vm3178, %v3176, 0.0
        %v3255 = vadd.f32 %v3253, %v3254
        %3256 = vadd.xlane.f32.xlu0 %v3255
        %v3257 = vpop.xlane.xlu0 %3256
        %v3258 = vadd.f32 %v3182, 0.0
        %v3259 = vadd.f32 %v3187, 0.0
        %v3260 = vadd.f32 %v3192, 0.0
        %v3261 = vadd.f32 %v3197, 0.0
        %v3262 = vadd.f32 %v3202, 0.0
        %v3263 = vadd.f32 %v3207, 0.0
        %v3264 = vadd.f32 %v3212, 0.0
        %v3265 = vadd.f32 %v3217, 0.0
        %v3266 = vadd.f32 %v3222, 0.0
        %v3267 = vadd.f32 %v3227, 0.0
        %v3268 = vadd.f32 %v3232, 0.0
        %v3269 = vadd.f32 %v3237, 0.0
        %v3270 = vadd.f32 %v3242, 0.0
        %v3271 = vadd.f32 %v3247, 0.0
        %v3272 = vadd.f32 %v3252, 0.0
        %v3273 = vadd.f32 %v3257, 0.0
        %v3274 = vmul.f32 %v3258, 0.00390625
        %v3275 = vmul.f32 %v3259, 0.00390625
        %v3276 = vmul.f32 %v3260, 0.00390625
        %v3277 = vmul.f32 %v3261, 0.00390625
        %v3278 = vmul.f32 %v3262, 0.00390625
        %v3279 = vmul.f32 %v3263, 0.00390625
        %v3280 = vmul.f32 %v3264, 0.00390625
        %v3281 = vmul.f32 %v3265, 0.00390625
        %v3282 = vmul.f32 %v3266, 0.00390625
        %v3283 = vmul.f32 %v3267, 0.00390625
        %v3284 = vmul.f32 %v3268, 0.00390625
        %v3285 = vmul.f32 %v3269, 0.00390625
        %v3286 = vmul.f32 %v3270, 0.00390625
        %v3287 = vmul.f32 %v3271, 0.00390625
        %v3288 = vmul.f32 %v3272, 0.00390625
        %v3289 = vmul.f32 %v3273, 0.00390625
        %v3290 = vld [vmem:[%s3] sm:$0xff]
        %v3291 = vld [vmem:[%s3 + $0x8] sm:$0xff]
        %v3292 = vld [vmem:[%s3 + $0x10] sm:$0xff]
        %v3293 = vld [vmem:[%s3 + $0x18] sm:$0xff]
        %v3294 = vld [vmem:[%s3 + $0x20] sm:$0xff]
        %v3295 = vld [vmem:[%s3 + $0x28] sm:$0xff]
        %v3296 = vld [vmem:[%s3 + $0x30] sm:$0xff]
        %v3297 = vld [vmem:[%s3 + $0x38] sm:$0xff]
        %v3298 = vld [vmem:[%s3 + $0x40] sm:$0xff]
        %v3299 = vld [vmem:[%s3 + $0x48] sm:$0xff]
        %v3300 = vld [vmem:[%s3 + $0x50] sm:$0xff]
        %v3301 = vld [vmem:[%s3 + $0x58] sm:$0xff]
        %v3302 = vld [vmem:[%s3 + $0x60] sm:$0xff]
        %v3303 = vld [vmem:[%s3 + $0x68] sm:$0xff]
        %v3304 = vld [vmem:[%s3 + $0x70] sm:$0xff]
        %v3305 = vld [vmem:[%s3 + $0x78] sm:$0xff]
        %v3306 = vmul.f32 %v3274, %v3290
        %v3307 = vmul.f32 %v3275, %v3291
        %v3308 = vmul.f32 %v3276, %v3292
        %v3309 = vmul.f32 %v3277, %v3293
        %v3310 = vmul.f32 %v3278, %v3294
        %v3311 = vmul.f32 %v3279, %v3295
        %v3312 = vmul.f32 %v3280, %v3296
        %v3313 = vmul.f32 %v3281, %v3297
        %v3314 = vmul.f32 %v3282, %v3298
        %v3315 = vmul.f32 %v3283, %v3299
        %v3316 = vmul.f32 %v3284, %v3300
        %v3317 = vmul.f32 %v3285, %v3301
        %v3318 = vmul.f32 %v3286, %v3302
        %v3319 = vmul.f32 %v3287, %v3303
        %v3320 = vmul.f32 %v3288, %v3304
        %v3321 = vmul.f32 %v3289, %v3305
        %v3322 = vadd.f32 %v3306, %v3307
        %v3323 = vadd.f32 %v3322, %v3308
        %v3324 = vadd.f32 %v3323, %v3309
        %v3325 = vadd.f32 %v3324, %v3310
        %v3326 = vadd.f32 %v3325, %v3311
        %v3327 = vadd.f32 %v3326, %v3312
        %v3328 = vadd.f32 %v3327, %v3313
        %v3329 = vadd.f32 %v3328, %v3314
        %v3330 = vadd.f32 %v3329, %v3315
        %v3331 = vadd.f32 %v3330, %v3316
        %v3332 = vadd.f32 %v3331, %v3317
        %v3333 = vadd.f32 %v3332, %v3318
        %v3334 = vadd.f32 %v3333, %v3319
        %v3335 = vadd.f32 %v3334, %v3320
        %v3336 = vadd.f32 %v3335, %v3321
        %v3337 = vrot.slane %v3336, 4
        %v3338 = vadd.f32 %v3336, %v3337
        %v3339 = vrot.slane %v3338, 2
        %v3340 = vadd.f32 %v3338, %v3339
        %v3341 = vrot.slane %v3340, 1
        %v3342 = vadd.f32 %v3340, %v3341
        %v3343 = vld [vmem:[%s4] sm:$0x1]
        %v3344 = vadd.f32 %v3342, %v3343
        %3345 = vst [vmem:[%s243] sm:$0x1] %v3344
        %s3346 = sand.u32 %s159, 1
        %s3347 = scalar_lea.sflag [#allocation3], %s3346
        %s3348 = sand.u32 %s159, 1
        %s3349 = scalar_lea.vmem [#allocation2], %s3348
        // Predicated region
        $region45: #{tpu_custom_call.1} parent=43 // pred_check
          %p3350 = pneg %p169
        $region46: #{tpu_custom_call.1} parent=43 // pred_check_branch
          %3352 = sbr.rel (%p3350) target = $region48
        $region47: #{tpu_custom_call.1} parent=43 // pred_region
          %3354 = vsyncadd %s3347, 0
          %s3355 = scalar_lea.hbm %s6, %s20
          %s3357 = sshll.u32 %s3349, 4
          %s3358 = int_to_ptr.vmem [resolvable:$true] %s3357
          %s3359 = sshll.u32 %s3355, 4
          %s3360 = int_to_ptr.hbm [resolvable:$true] %s3359
          %3362 = dma.vmem_to_hbm [thread:$0]  %s3358, 16, %s3360, %s3347
        $region48: #{tpu_custom_call.1} parent=43 // pred_fallthru
          _
      $region44: #{tpu_custom_call.1} parent=5 // pred_fallthru
        _
      %p3363 = scmp.le.s32.totalorder 2, %s15
      // Predicated region
      $region49: #{tpu_custom_call.1} parent=5 // pred_check
        %p3364 = pneg %p3363
      $region50: #{tpu_custom_call.1} parent=5 // pred_check_branch
        %3366 = sbr.rel (%p3364) target = $region52
      $region51: #{tpu_custom_call.1} parent=5 // pred_region
        %s3367 = ssub.s32 %s15, 2
        // Predicated region
        $region53: #{tpu_custom_call.1} parent=51 // pred_check
          %p3368 = pneg %p175
        $region54: #{tpu_custom_call.1} parent=51 // pred_check_branch
          %3370 = sbr.rel (%p3368) target = $region56
        $region55: #{tpu_custom_call.1} parent=51 // pred_region
          %s3371 = sand.u32 %s160, 1
          %s3372 = scalar_lea.sflag [#allocation3], %s3371
          %s3373 = sand.u32 %s160, 1
          %s3374 = scalar_lea.vmem [#allocation2], %s3373
          %3376 = dma.done %s3372, 16
        $region56: #{tpu_custom_call.1} parent=51 // pred_fallthru
          _
      $region52: #{tpu_custom_call.1} parent=5 // pred_fallthru
        _
    $region6: #{tpu_custom_call.1} parent=1 // loop_footer
      %s19 = sadd.s32 1, %s15
    $region7: #{tpu_custom_call.1} parent=1 // loop_footer_branch
      %14 = sbr.rel target = $region3
    $region8: #{tpu_custom_call.1} parent=1 // loop_exit
      _
    %3377 = vsyncpa [#allocation3], 1
    %s3378 = scalar_lea.sflag [#allocation3], 1
    %3379 = vsyncpa %s3378, 1

</llo_original>
